<compile_context>
chip_gen: v5e
topology: v5e:2x2
jax: 0.10.0
libtpu: 0.0.40
codegen_flags: <defaults>
</compile_context>

<pallas_src>
import functools

import jax
import jax.numpy as jnp
from jax.experimental import pallas as pl
from jax.experimental.pallas import tpu as pltpu

_LPAD = 8  # interior column offset inside the padded VMEM scratch (sublane-aligned)


def _round_up(x, m):
    return ((x + m - 1) // m) * m


def _rot_block_kernel(x_ref, w_ref, scale_ref, bias_ref, o_ref, xpad_ref,
                      *, Nb, H, W, C, Wp):
    """One grid step processes Nb images.

    x_ref     : (Nb, H, W, C)     bf16  NHWC input block (no conv padding)
    w_ref     : (9, C, C)         bf16  per-tap (Cin, Cout) conv weights
    scale_ref : (1, C)            f32   BN scale  gamma / sqrt(var + eps)
    bias_ref  : (1, C)            f32   folded conv-bias + BN shift
    o_ref     : (Nb*H*W, C)       f32   lane-dense flattened NHWC output block
    xpad_ref  : (Nb, H+2, Wp, C)  bf16  scratch holding the zero-padded image
    """
    M = Nb * H * W
    f32 = jnp.float32

    # ---- build the zero-padded image in VMEM --------------------------------
    # Interior sits at rows [1, H+1), cols [_LPAD, _LPAD+W) (sublane-aligned
    # store).  Only the halo that the taps read is zeroed, every step: the grid
    # axis is "parallel", so a one-shot program_id(0)==0 init would leave the
    # second TensorCore's scratch uninitialised on megacore parts.
    zrow = jnp.zeros((Nb, 1, Wp, C), dtype=xpad_ref.dtype)
    xpad_ref[:, 0:1, :, :] = zrow                       # top halo row
    xpad_ref[:, H + 1:H + 2, :, :] = zrow               # bottom halo row
    zleft = jnp.zeros((Nb, H, _LPAD, C), dtype=xpad_ref.dtype)
    xpad_ref[:, 1:H + 1, 0:_LPAD, :] = zleft            # left halo (aligned, 8 wide)
    zright = jnp.zeros((Nb, H, Wp - _LPAD - W, C), dtype=xpad_ref.dtype)
    xpad_ref[:, 1:H + 1, _LPAD + W:Wp, :] = zright      # right halo
    xpad_ref[:, 1:H + 1, _LPAD:_LPAD + W, :] = x_ref[...]

    # ---- 3x3 conv as 9 accumulating tap matmuls -----------------------------
    # Each tap is a (M, C) x (C, C) bf16 MXU matmul accumulated in f32; no
    # im2col scratch and no extra VMEM store/reload pass ahead of the MXU.
    acc = jnp.zeros((M, C), f32)
    for dh in range(3):
        for dw in range(3):
            t = dh * 3 + dw
            patch = xpad_ref[:, dh:dh + H, _LPAD - 1 + dw:_LPAD - 1 + dw + W, :]
            acc = acc + jnp.dot(patch.reshape(M, C), w_ref[t],
                                preferred_element_type=f32)

    # ---- BN (eval, running stats) + LeakyReLU(0.1) epilogue in f32 ----------
    y = acc * scale_ref[...] + bias_ref[...]
    y = jnp.where(y >= 0, y, f32(0.1) * y)
    o_ref[...] = y.astype(o_ref.dtype)


def _step_vmem_bytes(Nb, H, W, Wp, C):
    """Approximate per-step VMEM footprint (pipeline double buffers included)."""
    M = Nb * H * W
    return (2 * M * C * 2                 # input block (bf16)  x 2 buffers
            + 2 * M * C * 4               # output block (f32)  x 2 buffers
            + Nb * (H + 2) * Wp * C * 2   # padded-image scratch (bf16)
            + 2 * 9 * C * C * 2           # tap weights (bf16)  x 2 buffers
            + 2 * 2 * C * 4               # scale + bias (f32)  x 2 buffers
            + M * C * 4)                  # f32 accumulator temporaries


_VMEM_BUDGET = 36 * 1024 * 1024  # conservative: fits v7x's 64 MiB/TC with headroom


def _pick_batch_tile(N, H, W, Wp, C):
    """Pick the per-step batch tile Nb such that:
       (a) the per-step VMEM footprint fits every TPU generation (v7x: 64 MiB/TC),
       (b) M = Nb*H*W lands in the 256..4096 sweet spot (MXU row occupancy,
           per-step overhead amortisation),
       (c) when (b) is reachable, >= 2 grid steps remain so both v7x
           TensorCores get work (harmless on 1-TC v5e/v6e)."""
    hw = H * W
    divisors = [d for d in range(1, N + 1) if N % d == 0]
    fits = [d for d in divisors
            if _step_vmem_bytes(d, H, W, Wp, C) <= _VMEM_BUDGET and d * hw <= 4096]
    if not fits:
        return 1
    big = [d for d in fits if d * hw >= 256]
    if big:
        splittable = [d for d in big if N // d >= 2]
        return min(splittable) if splittable else min(big)
    return max(fits)


def rot_block_pallas_nhwc(x_nhwc, w_oihw, b_conv, gamma, beta, run_mean, run_var,
                          eps=1e-5, out_dtype=jnp.float32):
    """Forward pass of Rot_Block on NHWC input, NHWC output (out_dtype)."""
    N, H, W, C = x_nhwc.shape
    assert C % 128 == 0, "Rot_Block kernel requires C % 128 == 0 (lane-dense MXU/stores)"
    Wp = _LPAD + _round_up(W + 1, 8)   # scratch width: halo + image + zero pad, tile-rounded
    Nb = _pick_batch_tile(N, H, W, Wp, C)
    M = Nb * H * W
    assert N % Nb == 0
    assert M % 8 == 0, "Rot_Block kernel requires Nb*H*W % 8 == 0 (sublane tiling)"

    # Eval-mode BN: keep the per-channel scale as an f32 epilogue multiply
    # (NOT folded into the bf16 weights, to avoid amplifying quantisation
    # error); only the shift folds into the bias.
    inv_std = 1.0 / jnp.sqrt(run_var.astype(jnp.float32) + eps)
    scale = gamma.astype(jnp.float32) * inv_std                               # (C,)
    bias = (beta.astype(jnp.float32)
            + scale * (b_conv.astype(jnp.float32) - run_mean.astype(jnp.float32)))
    scale2 = scale.reshape(1, C)
    bias2 = bias.reshape(1, C)

    # (O, I, 3, 3) -> (3, 3, I, O) -> (9, Cin, Cout); bf16 MXU operand.
    w_taps = jnp.transpose(w_oihw, (2, 3, 1, 0)).reshape(9, C, C).astype(jnp.bfloat16)

    x_bf16 = x_nhwc.astype(jnp.bfloat16)

    kernel = functools.partial(_rot_block_kernel, Nb=Nb, H=H, W=W, C=C, Wp=Wp)

    needed = _step_vmem_bytes(Nb, H, W, Wp, C)
    vmem_limit = int(min(max(2 * needed + (8 << 20), 32 << 20), 60 << 20))

    out_itemsize = jnp.dtype(out_dtype).itemsize
    flops = 2 * N * H * W * 9 * C * C
    bytes_accessed = (N * H * W * C * 2        # bf16 activations in
                      + 9 * C * C * 2          # bf16 weights
                      + 2 * C * 4              # scale + bias
                      + N * H * W * C * out_itemsize)

    out_flat = pl.pallas_call(
        kernel,
        out_shape=jax.ShapeDtypeStruct((N * H * W, C), out_dtype),
        grid_spec=pltpu.PrefetchScalarGridSpec(
            num_scalar_prefetch=0,
            grid=(N // Nb,),
            in_specs=[
                pl.BlockSpec((Nb, H, W, C), lambda n: (n, 0, 0, 0)),   # activations
                pl.BlockSpec((9, C, C), lambda n: (0, 0, 0)),          # tap weights
                pl.BlockSpec((1, C), lambda n: (0, 0)),                # BN scale
                pl.BlockSpec((1, C), lambda n: (0, 0)),                # folded bias
            ],
            out_specs=pl.BlockSpec((M, C), lambda n: (n, 0)),          # lane-dense output
            scratch_shapes=[
                pltpu.VMEM((Nb, H + 2, Wp, C), jnp.bfloat16),          # padded image
            ],
        ),
        compiler_params=pltpu.CompilerParams(
            dimension_semantics=("parallel",),
            vmem_limit_bytes=vmem_limit),
        cost_estimate=pl.CostEstimate(flops=flops, transcendentals=0,
                                      bytes_accessed=bytes_accessed),
    )(x_bf16, w_taps, scale2, bias2)

    return out_flat.reshape(N, H, W, C)


def rot_block_pallas(x_nchw, w_oihw, b_conv, gamma, beta, run_mean, run_var,
                     eps=1e-5):
    """PyTorch-compatible entry point: NCHW float32 in / NCHW float32 out.

    Prefer rot_block_pallas_nhwc in a channels-last graph: the two transposes
    here are extra HBM passes around an otherwise compute-bound kernel."""
    x_nhwc = jnp.transpose(x_nchw, (0, 2, 3, 1))
    out_nhwc = rot_block_pallas_nhwc(x_nhwc, w_oihw, b_conv, gamma, beta,
                                     run_mean, run_var, eps)
    return jnp.transpose(out_nhwc, (0, 3, 1, 2))


def _reference(x_nchw, w_oihw, b_conv, gamma, beta, run_mean, run_var, eps=1e-5):
    """Pure-JAX f32 reference for correctness checking."""
    z = jax.lax.conv_general_dilated(
        x_nchw, w_oihw, window_strides=(1, 1), padding=((1, 1), (1, 1)),
        dimension_numbers=("NCHW", "OIHW", "NCHW"))
    z = z + b_conv[None, :, None, None]
    inv_std = 1.0 / jnp.sqrt(run_var + eps)
    z = (z - run_mean[None, :, None, None]) * (gamma * inv_std)[None, :, None, None] \
        + beta[None, :, None, None]
    return jnp.where(z >= 0, z, 0.1 * z)


if __name__ == "__main__":
    # Small shapes consistent with the module: channels a multiple of 128
    # (like the real dim=640) so stores/MXU lanes stay dense.
    N, C, H, W = 4, 128, 8, 8

    key = jax.random.PRNGKey(0)
    kx, kw, kb, kg, kbeta, km, kv = jax.random.split(key, 7)

    x = jax.random.normal(kx, (N, C, H, W), dtype=jnp.float32)

    # Deterministic parameter init (shapes from Rot_Block.__init__ with dim=C).
    w_conv = 0.05 * jax.random.normal(kw, (C, C, 3, 3), dtype=jnp.float32)   # Conv2d weight
    b_conv = 0.05 * jax.random.normal(kb, (C,), dtype=jnp.float32)           # Conv2d bias
    gamma = 1.0 + 0.1 * jax.random.normal(kg, (C,), dtype=jnp.float32)       # BN weight
    beta = 0.1 * jax.random.normal(kbeta, (C,), dtype=jnp.float32)           # BN bias
    run_mean = 0.1 * jax.random.normal(km, (C,), dtype=jnp.float32)          # BN running_mean
    run_var = jnp.abs(jax.random.normal(kv, (C,), dtype=jnp.float32)) + 0.5  # BN running_var

    out = rot_block_pallas(x, w_conv, b_conv, gamma, beta, run_mean, run_var)
    out = jax.block_until_ready(out)

    ref = _reference(x, w_conv, b_conv, gamma, beta, run_mean, run_var)
    assert out.shape == (N, C, H, W)
    # bf16 matmul operands (f32 accumulation / f32 BN+LeakyReLU epilogue)
    # -> relaxed tolerance vs. the f32 reference.
    assert jnp.allclose(out, ref, atol=3e-2, rtol=3e-2), "mismatch vs reference"

    print("KERNEL_OK")
</pallas_src>

<mosaic_0001>
module attributes {stable_mosaic.version = 11 : i64} {
  func.func @_rot_block_kernel(%arg0: i32, %arg1: memref<4x8x8x128xbf16, #tpu.memory_space<vmem>>, %arg2: memref<9x128x128xbf16, #tpu.memory_space<vmem>>, %arg3: memref<1x128xf32, #tpu.memory_space<vmem>>, %arg4: memref<1x128xf32, #tpu.memory_space<vmem>>, %arg5: memref<256x128xf32, #tpu.memory_space<vmem>>, %arg6: memref<4x10x24x128xbf16, #tpu.memory_space<vmem>>) attributes {dimension_semantics = [#tpu.dimension_semantics<parallel>], iteration_bounds = array<i64: 1>, scalar_prefetch = 0 : i64, scratch_operands = 1 : i64, tpu.core_type = #tpu.core_type<tc>, window_params = [{transform_indices = @transform_0, window_bounds = array<i64: 4, 8, 8, 128>}, {pipeline_mode = #tpu.pipeline_mode<synchronous>, transform_indices = @transform_1, window_bounds = array<i64: 9, 128, 128>}, {pipeline_mode = #tpu.pipeline_mode<synchronous>, transform_indices = @transform_2, window_bounds = array<i64: 1, 128>}, {pipeline_mode = #tpu.pipeline_mode<synchronous>, transform_indices = @transform_3, window_bounds = array<i64: 1, 128>}, {transform_indices = @transform_4, window_bounds = array<i64: 256, 128>}]} {
    %cst = arith.constant 0.000000e+00 : bf16
    %0 = vector.broadcast %cst : bf16 to vector<4x1x24x128xbf16>
    %c0 = arith.constant 0 : index
    %c0_0 = arith.constant 0 : index
    %c0_1 = arith.constant 0 : index
    %c0_2 = arith.constant 0 : index
    %1 = vector.load %arg6[%c0, %c0_0, %c0_1, %c0_2] : memref<4x10x24x128xbf16, #tpu.memory_space<vmem>>, vector<4x1x24x128xbf16>
    tpu.vector_store %arg6[%c0, %c0_0, %c0_1, %c0_2], %0 {strides = array<i32>} : memref<4x10x24x128xbf16, #tpu.memory_space<vmem>>, vector<4x1x24x128xbf16>,
    %c0_3 = arith.constant 0 : index
    %c9 = arith.constant 9 : index
    %c0_4 = arith.constant 0 : index
    %c0_5 = arith.constant 0 : index
    %2 = vector.load %arg6[%c0_3, %c9, %c0_4, %c0_5] : memref<4x10x24x128xbf16, #tpu.memory_space<vmem>>, vector<4x1x24x128xbf16>
    tpu.vector_store %arg6[%c0_3, %c9, %c0_4, %c0_5], %0 {strides = array<i32>} : memref<4x10x24x128xbf16, #tpu.memory_space<vmem>>, vector<4x1x24x128xbf16>,
    %cst_6 = arith.constant 0.000000e+00 : bf16
    %3 = vector.broadcast %cst_6 : bf16 to vector<4x8x8x128xbf16>
    %c0_7 = arith.constant 0 : index
    %c1 = arith.constant 1 : index
    %c0_8 = arith.constant 0 : index
    %c0_9 = arith.constant 0 : index
    %4 = vector.load %arg6[%c0_7, %c1, %c0_8, %c0_9] : memref<4x10x24x128xbf16, #tpu.memory_space<vmem>>, vector<4x8x8x128xbf16>
    tpu.vector_store %arg6[%c0_7, %c1, %c0_8, %c0_9], %3 {strides = array<i32>} : memref<4x10x24x128xbf16, #tpu.memory_space<vmem>>, vector<4x8x8x128xbf16>,
    %cst_10 = arith.constant 0.000000e+00 : bf16
    %5 = vector.broadcast %cst_10 : bf16 to vector<4x8x8x128xbf16>
    %c0_11 = arith.constant 0 : index
    %c1_12 = arith.constant 1 : index
    %c16 = arith.constant 16 : index
    %c0_13 = arith.constant 0 : index
    %6 = vector.load %arg6[%c0_11, %c1_12, %c16, %c0_13] : memref<4x10x24x128xbf16, #tpu.memory_space<vmem>>, vector<4x8x8x128xbf16>
    tpu.vector_store %arg6[%c0_11, %c1_12, %c16, %c0_13], %5 {strides = array<i32>} : memref<4x10x24x128xbf16, #tpu.memory_space<vmem>>, vector<4x8x8x128xbf16>,
    %c0_14 = arith.constant 0 : index
    %c0_15 = arith.constant 0 : index
    %c0_16 = arith.constant 0 : index
    %c0_17 = arith.constant 0 : index
    %7 = vector.load %arg1[%c0_14, %c0_15, %c0_16, %c0_17] : memref<4x8x8x128xbf16, #tpu.memory_space<vmem>>, vector<4x8x8x128xbf16>
    %c0_18 = arith.constant 0 : index
    %c1_19 = arith.constant 1 : index
    %c8 = arith.constant 8 : index
    %c0_20 = arith.constant 0 : index
    %8 = vector.load %arg6[%c0_18, %c1_19, %c8, %c0_20] : memref<4x10x24x128xbf16, #tpu.memory_space<vmem>>, vector<4x8x8x128xbf16>
    tpu.vector_store %arg6[%c0_18, %c1_19, %c8, %c0_20], %7 {strides = array<i32>} : memref<4x10x24x128xbf16, #tpu.memory_space<vmem>>, vector<4x8x8x128xbf16>,
    %cst_21 = arith.constant 0.000000e+00 : f32
    %9 = vector.broadcast %cst_21 : f32 to vector<256x128xf32>
    %c0_22 = arith.constant 0 : index
    %c0_23 = arith.constant 0 : index
    %c7 = arith.constant 7 : index
    %c0_24 = arith.constant 0 : index
    %10 = vector.load %arg6[%c0_22, %c0_23, %c7, %c0_24] : memref<4x10x24x128xbf16, #tpu.memory_space<vmem>>, vector<4x8x8x128xbf16>
    %11 = vector.shape_cast %10 : vector<4x8x8x128xbf16> to vector<256x128xbf16>
    %c0_25 = arith.constant 0 : index
    %c0_26 = arith.constant 0 : index
    %c0_27 = arith.constant 0 : index
    %12 = vector.load %arg2[%c0_25, %c0_26, %c0_27] : memref<9x128x128xbf16, #tpu.memory_space<vmem>>, vector<1x128x128xbf16>
    %13 = vector.shape_cast %12 : vector<1x128x128xbf16> to vector<128x128xbf16>
    %cst_28 = arith.constant dense<0.000000e+00> : vector<256x128xf32>
    %14 = tpu.matmul %11, %13, %cst_28 {dimension_numbers = #tpu.dot_dimension_numbers<[1], [0], [0], [1], [0, 0, 1, 1], [], []>} : vector<256x128xbf16>, vector<128x128xbf16>, vector<256x128xf32> -> vector<256x128xf32>
    %15 = arith.addf %9, %14 : vector<256x128xf32>
    %c0_29 = arith.constant 0 : index
    %c0_30 = arith.constant 0 : index
    %c8_31 = arith.constant 8 : index
    %c0_32 = arith.constant 0 : index
    %16 = vector.load %arg6[%c0_29, %c0_30, %c8_31, %c0_32] : memref<4x10x24x128xbf16, #tpu.memory_space<vmem>>, vector<4x8x8x128xbf16>
    %17 = vector.shape_cast %16 : vector<4x8x8x128xbf16> to vector<256x128xbf16>
    %c1_33 = arith.constant 1 : index
    %c0_34 = arith.constant 0 : index
    %c0_35 = arith.constant 0 : index
    %18 = vector.load %arg2[%c1_33, %c0_34, %c0_35] : memref<9x128x128xbf16, #tpu.memory_space<vmem>>, vector<1x128x128xbf16>
    %19 = vector.shape_cast %18 : vector<1x128x128xbf16> to vector<128x128xbf16>
    %cst_36 = arith.constant dense<0.000000e+00> : vector<256x128xf32>
    %20 = tpu.matmul %17, %19, %cst_36 {dimension_numbers = #tpu.dot_dimension_numbers<[1], [0], [0], [1], [0, 0, 1, 1], [], []>} : vector<256x128xbf16>, vector<128x128xbf16>, vector<256x128xf32> -> vector<256x128xf32>
    %21 = arith.addf %15, %20 : vector<256x128xf32>
    %c0_37 = arith.constant 0 : index
    %c0_38 = arith.constant 0 : index
    %c9_39 = arith.constant 9 : index
    %c0_40 = arith.constant 0 : index
    %22 = vector.load %arg6[%c0_37, %c0_38, %c9_39, %c0_40] : memref<4x10x24x128xbf16, #tpu.memory_space<vmem>>, vector<4x8x8x128xbf16>
    %23 = vector.shape_cast %22 : vector<4x8x8x128xbf16> to vector<256x128xbf16>
    %c2 = arith.constant 2 : index
    %c0_41 = arith.constant 0 : index
    %c0_42 = arith.constant 0 : index
    %24 = vector.load %arg2[%c2, %c0_41, %c0_42] : memref<9x128x128xbf16, #tpu.memory_space<vmem>>, vector<1x128x128xbf16>
    %25 = vector.shape_cast %24 : vector<1x128x128xbf16> to vector<128x128xbf16>
    %cst_43 = arith.constant dense<0.000000e+00> : vector<256x128xf32>
    %26 = tpu.matmul %23, %25, %cst_43 {dimension_numbers = #tpu.dot_dimension_numbers<[1], [0], [0], [1], [0, 0, 1, 1], [], []>} : vector<256x128xbf16>, vector<128x128xbf16>, vector<256x128xf32> -> vector<256x128xf32>
    %27 = arith.addf %21, %26 : vector<256x128xf32>
    %c0_44 = arith.constant 0 : index
    %c1_45 = arith.constant 1 : index
    %c7_46 = arith.constant 7 : index
    %c0_47 = arith.constant 0 : index
    %28 = vector.load %arg6[%c0_44, %c1_45, %c7_46, %c0_47] : memref<4x10x24x128xbf16, #tpu.memory_space<vmem>>, vector<4x8x8x128xbf16>
    %29 = vector.shape_cast %28 : vector<4x8x8x128xbf16> to vector<256x128xbf16>
    %c3 = arith.constant 3 : index
    %c0_48 = arith.constant 0 : index
    %c0_49 = arith.constant 0 : index
    %30 = vector.load %arg2[%c3, %c0_48, %c0_49] : memref<9x128x128xbf16, #tpu.memory_space<vmem>>, vector<1x128x128xbf16>
    %31 = vector.shape_cast %30 : vector<1x128x128xbf16> to vector<128x128xbf16>
    %cst_50 = arith.constant dense<0.000000e+00> : vector<256x128xf32>
    %32 = tpu.matmul %29, %31, %cst_50 {dimension_numbers = #tpu.dot_dimension_numbers<[1], [0], [0], [1], [0, 0, 1, 1], [], []>} : vector<256x128xbf16>, vector<128x128xbf16>, vector<256x128xf32> -> vector<256x128xf32>
    %33 = arith.addf %27, %32 : vector<256x128xf32>
    %c0_51 = arith.constant 0 : index
    %c1_52 = arith.constant 1 : index
    %c8_53 = arith.constant 8 : index
    %c0_54 = arith.constant 0 : index
    %34 = vector.load %arg6[%c0_51, %c1_52, %c8_53, %c0_54] : memref<4x10x24x128xbf16, #tpu.memory_space<vmem>>, vector<4x8x8x128xbf16>
    %35 = vector.shape_cast %34 : vector<4x8x8x128xbf16> to vector<256x128xbf16>
    %c4 = arith.constant 4 : index
    %c0_55 = arith.constant 0 : index
    %c0_56 = arith.constant 0 : index
    %36 = vector.load %arg2[%c4, %c0_55, %c0_56] : memref<9x128x128xbf16, #tpu.memory_space<vmem>>, vector<1x128x128xbf16>
    %37 = vector.shape_cast %36 : vector<1x128x128xbf16> to vector<128x128xbf16>
    %cst_57 = arith.constant dense<0.000000e+00> : vector<256x128xf32>
    %38 = tpu.matmul %35, %37, %cst_57 {dimension_numbers = #tpu.dot_dimension_numbers<[1], [0], [0], [1], [0, 0, 1, 1], [], []>} : vector<256x128xbf16>, vector<128x128xbf16>, vector<256x128xf32> -> vector<256x128xf32>
    %39 = arith.addf %33, %38 : vector<256x128xf32>
    %c0_58 = arith.constant 0 : index
    %c1_59 = arith.constant 1 : index
    %c9_60 = arith.constant 9 : index
    %c0_61 = arith.constant 0 : index
    %40 = vector.load %arg6[%c0_58, %c1_59, %c9_60, %c0_61] : memref<4x10x24x128xbf16, #tpu.memory_space<vmem>>, vector<4x8x8x128xbf16>
    %41 = vector.shape_cast %40 : vector<4x8x8x128xbf16> to vector<256x128xbf16>
    %c5 = arith.constant 5 : index
    %c0_62 = arith.constant 0 : index
    %c0_63 = arith.constant 0 : index
    %42 = vector.load %arg2[%c5, %c0_62, %c0_63] : memref<9x128x128xbf16, #tpu.memory_space<vmem>>, vector<1x128x128xbf16>
    %43 = vector.shape_cast %42 : vector<1x128x128xbf16> to vector<128x128xbf16>
    %cst_64 = arith.constant dense<0.000000e+00> : vector<256x128xf32>
    %44 = tpu.matmul %41, %43, %cst_64 {dimension_numbers = #tpu.dot_dimension_numbers<[1], [0], [0], [1], [0, 0, 1, 1], [], []>} : vector<256x128xbf16>, vector<128x128xbf16>, vector<256x128xf32> -> vector<256x128xf32>
    %45 = arith.addf %39, %44 : vector<256x128xf32>
    %c0_65 = arith.constant 0 : index
    %c2_66 = arith.constant 2 : index
    %c7_67 = arith.constant 7 : index
    %c0_68 = arith.constant 0 : index
    %46 = vector.load %arg6[%c0_65, %c2_66, %c7_67, %c0_68] : memref<4x10x24x128xbf16, #tpu.memory_space<vmem>>, vector<4x8x8x128xbf16>
    %47 = vector.shape_cast %46 : vector<4x8x8x128xbf16> to vector<256x128xbf16>
    %c6 = arith.constant 6 : index
    %c0_69 = arith.constant 0 : index
    %c0_70 = arith.constant 0 : index
    %48 = vector.load %arg2[%c6, %c0_69, %c0_70] : memref<9x128x128xbf16, #tpu.memory_space<vmem>>, vector<1x128x128xbf16>
    %49 = vector.shape_cast %48 : vector<1x128x128xbf16> to vector<128x128xbf16>
    %cst_71 = arith.constant dense<0.000000e+00> : vector<256x128xf32>
    %50 = tpu.matmul %47, %49, %cst_71 {dimension_numbers = #tpu.dot_dimension_numbers<[1], [0], [0], [1], [0, 0, 1, 1], [], []>} : vector<256x128xbf16>, vector<128x128xbf16>, vector<256x128xf32> -> vector<256x128xf32>
    %51 = arith.addf %45, %50 : vector<256x128xf32>
    %c0_72 = arith.constant 0 : index
    %c2_73 = arith.constant 2 : index
    %c8_74 = arith.constant 8 : index
    %c0_75 = arith.constant 0 : index
    %52 = vector.load %arg6[%c0_72, %c2_73, %c8_74, %c0_75] : memref<4x10x24x128xbf16, #tpu.memory_space<vmem>>, vector<4x8x8x128xbf16>
    %53 = vector.shape_cast %52 : vector<4x8x8x128xbf16> to vector<256x128xbf16>
    %c7_76 = arith.constant 7 : index
    %c0_77 = arith.constant 0 : index
    %c0_78 = arith.constant 0 : index
    %54 = vector.load %arg2[%c7_76, %c0_77, %c0_78] : memref<9x128x128xbf16, #tpu.memory_space<vmem>>, vector<1x128x128xbf16>
    %55 = vector.shape_cast %54 : vector<1x128x128xbf16> to vector<128x128xbf16>
    %cst_79 = arith.constant dense<0.000000e+00> : vector<256x128xf32>
    %56 = tpu.matmul %53, %55, %cst_79 {dimension_numbers = #tpu.dot_dimension_numbers<[1], [0], [0], [1], [0, 0, 1, 1], [], []>} : vector<256x128xbf16>, vector<128x128xbf16>, vector<256x128xf32> -> vector<256x128xf32>
    %57 = arith.addf %51, %56 : vector<256x128xf32>
    %c0_80 = arith.constant 0 : index
    %c2_81 = arith.constant 2 : index
    %c9_82 = arith.constant 9 : index
    %c0_83 = arith.constant 0 : index
    %58 = vector.load %arg6[%c0_80, %c2_81, %c9_82, %c0_83] : memref<4x10x24x128xbf16, #tpu.memory_space<vmem>>, vector<4x8x8x128xbf16>
    %59 = vector.shape_cast %58 : vector<4x8x8x128xbf16> to vector<256x128xbf16>
    %c8_84 = arith.constant 8 : index
    %c0_85 = arith.constant 0 : index
    %c0_86 = arith.constant 0 : index
    %60 = vector.load %arg2[%c8_84, %c0_85, %c0_86] : memref<9x128x128xbf16, #tpu.memory_space<vmem>>, vector<1x128x128xbf16>
    %61 = vector.shape_cast %60 : vector<1x128x128xbf16> to vector<128x128xbf16>
    %cst_87 = arith.constant dense<0.000000e+00> : vector<256x128xf32>
    %62 = tpu.matmul %59, %61, %cst_87 {dimension_numbers = #tpu.dot_dimension_numbers<[1], [0], [0], [1], [0, 0, 1, 1], [], []>} : vector<256x128xbf16>, vector<128x128xbf16>, vector<256x128xf32> -> vector<256x128xf32>
    %63 = arith.addf %57, %62 : vector<256x128xf32>
    %c0_88 = arith.constant 0 : index
    %c0_89 = arith.constant 0 : index
    %64 = vector.load %arg3[%c0_88, %c0_89] : memref<1x128xf32, #tpu.memory_space<vmem>>, vector<1x128xf32>
    %65 = vector.broadcast %64 : vector<1x128xf32> to vector<256x128xf32>
    %66 = arith.mulf %63, %65 : vector<256x128xf32>
    %c0_90 = arith.constant 0 : index
    %c0_91 = arith.constant 0 : index
    %67 = vector.load %arg4[%c0_90, %c0_91] : memref<1x128xf32, #tpu.memory_space<vmem>>, vector<1x128xf32>
    %68 = vector.broadcast %67 : vector<1x128xf32> to vector<256x128xf32>
    %69 = arith.addf %66, %68 : vector<256x128xf32>
    %cst_92 = arith.constant 0.000000e+00 : f32
    %70 = vector.broadcast %cst_92 : f32 to vector<256x128xf32>
    %71 = arith.cmpf oge, %69, %70 : vector<256x128xf32>
    %cst_93 = arith.constant 1.000000e-01 : f32
    %72 = vector.broadcast %cst_93 : f32 to vector<256x128xf32>
    %73 = arith.mulf %72, %69 : vector<256x128xf32>
    %74 = arith.select %71, %69, %73 : vector<256x128xi1>, vector<256x128xf32>
    %c0_94 = arith.constant 0 : index
    %c0_95 = arith.constant 0 : index
    %75 = vector.load %arg5[%c0_94, %c0_95] : memref<256x128xf32, #tpu.memory_space<vmem>>, vector<256x128xf32>
    tpu.vector_store %arg5[%c0_94, %c0_95], %74 {strides = array<i32>} : memref<256x128xf32, #tpu.memory_space<vmem>>, vector<256x128xf32>,
    return
  }
  func.func @transform_0(%arg0: i32) -> (i32, i32, i32, i32) {
    %c0_i32 = arith.constant 0 : i32
    %c0_i32_0 = arith.constant 0 : i32
    %c0_i32_1 = arith.constant 0 : i32
    %c0_i32_2 = arith.constant 0 : i32
    return %arg0, %c0_i32, %c0_i32_0, %c0_i32_1 : i32, i32, i32, i32
  }
  func.func @transform_1(%arg0: i32) -> (i32, i32, i32) {
    %c0_i32 = arith.constant 0 : i32
    %c0_i32_0 = arith.constant 0 : i32
    %c0_i32_1 = arith.constant 0 : i32
    %c0_i32_2 = arith.constant 0 : i32
    return %c0_i32, %c0_i32_0, %c0_i32_1 : i32, i32, i32
  }
  func.func @transform_2(%arg0: i32) -> (i32, i32) {
    %c0_i32 = arith.constant 0 : i32
    %c0_i32_0 = arith.constant 0 : i32
    %c0_i32_1 = arith.constant 0 : i32
    return %c0_i32, %c0_i32_0 : i32, i32
  }
  func.func @transform_3(%arg0: i32) -> (i32, i32) {
    %c0_i32 = arith.constant 0 : i32
    %c0_i32_0 = arith.constant 0 : i32
    %c0_i32_1 = arith.constant 0 : i32
    return %c0_i32, %c0_i32_0 : i32, i32
  }
  func.func @transform_4(%arg0: i32) -> (i32, i32) {
    %c0_i32 = arith.constant 0 : i32
    %c0_i32_0 = arith.constant 0 : i32
    return %arg0, %c0_i32 : i32, i32
  }
}

</mosaic_0001>

<llo_original>
// kernel: tpu_custom_call.1
$region0: #{tpu_custom_call.1}
  #allocation0 [shape = 'u32[]', space=smem, size = 0x4, offset = 0x4, fixed_abs, tag = 'smem constant byte address 0x4 - core index']
  #allocation1 [shape = 'u32[72,128]{1,0:T(1,128)}', space=vmem, size = 0x9000, scoped, tag = 'internal scratch']
  #allocation2 [shape = 'bf16[4,10,24,128]{3,2,1,0:T(8,128)(2,1)}', space=vmem, size = 0x3c000, scoped, tag = 'scratch operand']
  %s0 = inlined_call_operand.hbm [shape: bf16[4,8,8,128], index: 0, kind: input, shape index: {}]
  %s1 = inlined_call_operand.hbm [shape: bf16[9,128,128], index: 1, kind: input, shape index: {}]
  %s2 = inlined_call_operand.vmem [shape: f32[1,128], index: 2, kind: input, shape index: {}]
  %s3 = inlined_call_operand.vmem [shape: f32[1,128], index: 3, kind: input, shape index: {}]
  %s4 = inlined_call_operand.hbm [shape: f32[256,128], index: 4, kind: output, shape index: {}]
  %s5 = sld [smem:[#allocation0]]
  $region34: #{tpu_custom_call.1} parent=0
    _
  %s7 = ssub.s32 1, %s5
  %s8 = scalar_select 0, %s7, %s5
  $region1: #{tpu_custom_call.1} parent=0
    #allocation3 [shape = 'u8[65536]{0}', space=vmem, size = 0x10000, scoped, tag = 'input window, operand 0, single buffered']
    #allocation4 [shape = 's32[1]{0}', space=sflag, size = 0x4, scoped, tag = 'scoped memory for tpu_custom_call.1']
    #allocation5 [shape = 's32[1]{0}', space=sflag, size = 0x4, scoped, tag = 'scoped memory for tpu_custom_call.1']
    #allocation6 [shape = 'u8[294912]{0}', space=vmem, size = 0x48000, scoped, tag = 'input window, operand 1, single buffered']
    #allocation7 [shape = 's32[1]{0}', space=sflag, size = 0x4, scoped, tag = 'scoped memory for tpu_custom_call.1']
    #allocation8 [shape = 'u8[131072]{0}', space=vmem, size = 0x20000, scoped, tag = 'output window, operand 0, single buffered']
    %9 = vsyncpa [#allocation4], 0
    %10 = vsyncpa [#allocation7], 0
    %11 = vsyncpa [#allocation5], 0
    // Predicated region
    $region2: #{tpu_custom_call.1} parent=1 // pred_check
      _
    $region3: #{tpu_custom_call.1} parent=1 // pred_check_branch
      %13 = sbr.rel (0) target = $region5
    $region4: #{tpu_custom_call.1} parent=1 // pred_region
      %15 = vsyncadd [#allocation4], 0
      %s16 = sshll.u32 %s0, 4
      %s17 = int_to_ptr.hbm [resolvable:$true] %s16
      %s18 = sshll.u32 [#allocation3], 4
      %s19 = int_to_ptr.vmem [resolvable:$true] %s18
      %24 = dma.hbm_to_vmem [thread:$0]  %s17, 2048, %s19, [#allocation4], 64, 64, 4
    $region5: #{tpu_custom_call.1} parent=1 // pred_fallthru
      _
    // Predicated region
    $region6: #{tpu_custom_call.1} parent=1 // pred_check
      _
    $region7: #{tpu_custom_call.1} parent=1 // pred_check_branch
      %26 = sbr.rel (0) target = $region9
    $region8: #{tpu_custom_call.1} parent=1 // pred_region
      %28 = vsyncadd [#allocation7], 0
      %s29 = sshll.u32 %s1, 4
      %s30 = int_to_ptr.hbm [resolvable:$true] %s29
      %s31 = sshll.u32 [#allocation6], 4
      %s32 = int_to_ptr.vmem [resolvable:$true] %s31
      %37 = dma.hbm_to_vmem [thread:$0]  %s30, 9216, %s32, [#allocation7], 64, 64, 4
    $region9: #{tpu_custom_call.1} parent=1 // pred_fallthru
      _
    // Predicated region
    $region10: #{tpu_custom_call.1} parent=1 // pred_check
      _
    $region11: #{tpu_custom_call.1} parent=1 // pred_check_branch
      %39 = sbr.rel (0) target = $region13
    $region12: #{tpu_custom_call.1} parent=1 // pred_region
      _
    $region13: #{tpu_custom_call.1} parent=1 // pred_fallthru
      _
    // Predicated region
    $region14: #{tpu_custom_call.1} parent=1 // pred_check
      _
    $region15: #{tpu_custom_call.1} parent=1 // pred_check_branch
      %41 = sbr.rel (0) target = $region17
    $region16: #{tpu_custom_call.1} parent=1 // pred_region
      _
    $region17: #{tpu_custom_call.1} parent=1 // pred_fallthru
      _
    // Predicated region
    $region18: #{tpu_custom_call.1} parent=1 // pred_check
      _
    $region19: #{tpu_custom_call.1} parent=1 // pred_check_branch
      %43 = sbr.rel (0) target = $region21
    $region20: #{tpu_custom_call.1} parent=1 // pred_region
      %45 = dma.done [#allocation4], 2048
    $region21: #{tpu_custom_call.1} parent=1 // pred_fallthru
      _
    // Predicated region
    $region22: #{tpu_custom_call.1} parent=1 // pred_check
      _
    $region23: #{tpu_custom_call.1} parent=1 // pred_check_branch
      %47 = sbr.rel (0) target = $region25
    $region24: #{tpu_custom_call.1} parent=1 // pred_region
      %49 = dma.done [#allocation7], 9216
    $region25: #{tpu_custom_call.1} parent=1 // pred_fallthru
      _
    %51 = vst [vmem:[#allocation2] sm:$0xf] 0
    %52 = vst [vmem:[#allocation2 + $0x4] sm:$0xf] 0
    %53 = vst [vmem:[#allocation2 + $0x8] sm:$0xf] 0
    %54 = vst [vmem:[#allocation2 + $0x78] sm:$0xf] 0
    %55 = vst [vmem:[#allocation2 + $0x7c] sm:$0xf] 0
    %56 = vst [vmem:[#allocation2 + $0x80] sm:$0xf] 0
    %57 = vst [vmem:[#allocation2 + $0xf0] sm:$0xf] 0
    %58 = vst [vmem:[#allocation2 + $0xf4] sm:$0xf] 0
    %59 = vst [vmem:[#allocation2 + $0xf8] sm:$0xf] 0
    %60 = vst [vmem:[#allocation2 + $0x168] sm:$0xf] 0
    %61 = vst [vmem:[#allocation2 + $0x16c] sm:$0xf] 0
    %62 = vst [vmem:[#allocation2 + $0x170] sm:$0xf] 0
    %s63 = scalar_lea.vmem [#allocation2], 108
    %64 = vst [vmem:[%s63] sm:$0xf] 0
    %65 = vst [vmem:[%s63 + $0x4] sm:$0xf] 0
    %66 = vst [vmem:[%s63 + $0x8] sm:$0xf] 0
    %67 = vst [vmem:[%s63 + $0x78] sm:$0xf] 0
    %68 = vst [vmem:[%s63 + $0x7c] sm:$0xf] 0
    %69 = vst [vmem:[%s63 + $0x80] sm:$0xf] 0
    %70 = vst [vmem:[%s63 + $0xf0] sm:$0xf] 0
    %71 = vst [vmem:[%s63 + $0xf4] sm:$0xf] 0
    %72 = vst [vmem:[%s63 + $0xf8] sm:$0xf] 0
    %73 = vst [vmem:[%s63 + $0x168] sm:$0xf] 0
    %74 = vst [vmem:[%s63 + $0x16c] sm:$0xf] 0
    %75 = vst [vmem:[%s63 + $0x170] sm:$0xf] 0
    %s76 = scalar_lea.vmem [#allocation2], 12
    %77 = vst [vmem:[%s76] sm:$0xf] 0
    %78 = vst [vmem:[%s76 + $0xc] sm:$0xf] 0
    %79 = vst [vmem:[%s76 + $0x18] sm:$0xf] 0
    %80 = vst [vmem:[%s76 + $0x24] sm:$0xf] 0
    %81 = vst [vmem:[%s76 + $0x30] sm:$0xf] 0
    %82 = vst [vmem:[%s76 + $0x3c] sm:$0xf] 0
    %83 = vst [vmem:[%s76 + $0x48] sm:$0xf] 0
    %84 = vst [vmem:[%s76 + $0x54] sm:$0xf] 0
    %85 = vst [vmem:[%s76 + $0x78] sm:$0xf] 0
    %86 = vst [vmem:[%s76 + $0x84] sm:$0xf] 0
    %87 = vst [vmem:[%s76 + $0x90] sm:$0xf] 0
    %88 = vst [vmem:[%s76 + $0x9c] sm:$0xf] 0
    %89 = vst [vmem:[%s76 + $0xa8] sm:$0xf] 0
    %90 = vst [vmem:[%s76 + $0xb4] sm:$0xf] 0
    %91 = vst [vmem:[%s76 + $0xc0] sm:$0xf] 0
    %92 = vst [vmem:[%s76 + $0xcc] sm:$0xf] 0
    %93 = vst [vmem:[%s76 + $0xf0] sm:$0xf] 0
    %94 = vst [vmem:[%s76 + $0xfc] sm:$0xf] 0
    %95 = vst [vmem:[%s76 + $0x108] sm:$0xf] 0
    %96 = vst [vmem:[%s76 + $0x114] sm:$0xf] 0
    %97 = vst [vmem:[%s76 + $0x120] sm:$0xf] 0
    %98 = vst [vmem:[%s76 + $0x12c] sm:$0xf] 0
    %99 = vst [vmem:[%s76 + $0x138] sm:$0xf] 0
    %100 = vst [vmem:[%s76 + $0x144] sm:$0xf] 0
    %101 = vst [vmem:[%s76 + $0x168] sm:$0xf] 0
    %102 = vst [vmem:[%s76 + $0x174] sm:$0xf] 0
    %103 = vst [vmem:[%s76 + $0x180] sm:$0xf] 0
    %104 = vst [vmem:[%s76 + $0x18c] sm:$0xf] 0
    %105 = vst [vmem:[%s76 + $0x198] sm:$0xf] 0
    %106 = vst [vmem:[%s76 + $0x1a4] sm:$0xf] 0
    %107 = vst [vmem:[%s76 + $0x1b0] sm:$0xf] 0
    %108 = vst [vmem:[%s76 + $0x1bc] sm:$0xf] 0
    %109 = vst [vmem:[%s76 + $0x8] sm:$0xf] 0
    %110 = vst [vmem:[%s76 + $0x14] sm:$0xf] 0
    %111 = vst [vmem:[%s76 + $0x20] sm:$0xf] 0
    %112 = vst [vmem:[%s76 + $0x2c] sm:$0xf] 0
    %113 = vst [vmem:[%s76 + $0x38] sm:$0xf] 0
    %114 = vst [vmem:[%s76 + $0x44] sm:$0xf] 0
    %115 = vst [vmem:[%s76 + $0x50] sm:$0xf] 0
    %116 = vst [vmem:[%s76 + $0x5c] sm:$0xf] 0
    %117 = vst [vmem:[%s76 + $0x80] sm:$0xf] 0
    %118 = vst [vmem:[%s76 + $0x8c] sm:$0xf] 0
    %119 = vst [vmem:[%s76 + $0x98] sm:$0xf] 0
    %120 = vst [vmem:[%s76 + $0xa4] sm:$0xf] 0
    %121 = vst [vmem:[%s76 + $0xb0] sm:$0xf] 0
    %122 = vst [vmem:[%s76 + $0xbc] sm:$0xf] 0
    %123 = vst [vmem:[%s76 + $0xc8] sm:$0xf] 0
    %124 = vst [vmem:[%s76 + $0xd4] sm:$0xf] 0
    %125 = vst [vmem:[%s76 + $0xf8] sm:$0xf] 0
    %126 = vst [vmem:[%s76 + $0x104] sm:$0xf] 0
    %127 = vst [vmem:[%s76 + $0x110] sm:$0xf] 0
    %128 = vst [vmem:[%s76 + $0x11c] sm:$0xf] 0
    %129 = vst [vmem:[%s76 + $0x128] sm:$0xf] 0
    %130 = vst [vmem:[%s76 + $0x134] sm:$0xf] 0
    %131 = vst [vmem:[%s76 + $0x140] sm:$0xf] 0
    %132 = vst [vmem:[%s76 + $0x14c] sm:$0xf] 0
    %133 = vst [vmem:[%s76 + $0x170] sm:$0xf] 0
    %134 = vst [vmem:[%s76 + $0x17c] sm:$0xf] 0
    %135 = vst [vmem:[%s76 + $0x188] sm:$0xf] 0
    %136 = vst [vmem:[%s76 + $0x194] sm:$0xf] 0
    %137 = vst [vmem:[%s76 + $0x1a0] sm:$0xf] 0
    %138 = vst [vmem:[%s76 + $0x1ac] sm:$0xf] 0
    %139 = vst [vmem:[%s76 + $0x1b8] sm:$0xf] 0
    %140 = vst [vmem:[%s76 + $0x1c4] sm:$0xf] 0
    %v141 = vld [vmem:[#allocation3] sm:$0xf]
    %v142 = vld [vmem:[#allocation3 + $0x4] sm:$0xf]
    %v143 = vld [vmem:[#allocation3 + $0x8] sm:$0xf]
    %v144 = vld [vmem:[#allocation3 + $0xc] sm:$0xf]
    %v145 = vld [vmem:[#allocation3 + $0x10] sm:$0xf]
    %v146 = vld [vmem:[#allocation3 + $0x14] sm:$0xf]
    %v147 = vld [vmem:[#allocation3 + $0x18] sm:$0xf]
    %v148 = vld [vmem:[#allocation3 + $0x1c] sm:$0xf]
    %v149 = vld [vmem:[#allocation3 + $0x20] sm:$0xf]
    %v150 = vld [vmem:[#allocation3 + $0x24] sm:$0xf]
    %v151 = vld [vmem:[#allocation3 + $0x28] sm:$0xf]
    %v152 = vld [vmem:[#allocation3 + $0x2c] sm:$0xf]
    %v153 = vld [vmem:[#allocation3 + $0x30] sm:$0xf]
    %v154 = vld [vmem:[#allocation3 + $0x34] sm:$0xf]
    %v155 = vld [vmem:[#allocation3 + $0x38] sm:$0xf]
    %v156 = vld [vmem:[#allocation3 + $0x3c] sm:$0xf]
    %v157 = vld [vmem:[#allocation3 + $0x40] sm:$0xf]
    %v158 = vld [vmem:[#allocation3 + $0x44] sm:$0xf]
    %v159 = vld [vmem:[#allocation3 + $0x48] sm:$0xf]
    %v160 = vld [vmem:[#allocation3 + $0x4c] sm:$0xf]
    %v161 = vld [vmem:[#allocation3 + $0x50] sm:$0xf]
    %v162 = vld [vmem:[#allocation3 + $0x54] sm:$0xf]
    %v163 = vld [vmem:[#allocation3 + $0x58] sm:$0xf]
    %v164 = vld [vmem:[#allocation3 + $0x5c] sm:$0xf]
    %v165 = vld [vmem:[#allocation3 + $0x60] sm:$0xf]
    %v166 = vld [vmem:[#allocation3 + $0x64] sm:$0xf]
    %v167 = vld [vmem:[#allocation3 + $0x68] sm:$0xf]
    %v168 = vld [vmem:[#allocation3 + $0x6c] sm:$0xf]
    %v169 = vld [vmem:[#allocation3 + $0x70] sm:$0xf]
    %v170 = vld [vmem:[#allocation3 + $0x74] sm:$0xf]
    %v171 = vld [vmem:[#allocation3 + $0x78] sm:$0xf]
    %v172 = vld [vmem:[#allocation3 + $0x7c] sm:$0xf]
    %173 = vst [vmem:[%s76 + $0x4] sm:$0xf] %v141
    %174 = vst [vmem:[%s76 + $0x10] sm:$0xf] %v142
    %175 = vst [vmem:[%s76 + $0x1c] sm:$0xf] %v143
    %176 = vst [vmem:[%s76 + $0x28] sm:$0xf] %v144
    %177 = vst [vmem:[%s76 + $0x34] sm:$0xf] %v145
    %178 = vst [vmem:[%s76 + $0x40] sm:$0xf] %v146
    %179 = vst [vmem:[%s76 + $0x4c] sm:$0xf] %v147
    %180 = vst [vmem:[%s76 + $0x58] sm:$0xf] %v148
    %181 = vst [vmem:[%s76 + $0x7c] sm:$0xf] %v149
    %182 = vst [vmem:[%s76 + $0x88] sm:$0xf] %v150
    %183 = vst [vmem:[%s76 + $0x94] sm:$0xf] %v151
    %184 = vst [vmem:[%s76 + $0xa0] sm:$0xf] %v152
    %185 = vst [vmem:[%s76 + $0xac] sm:$0xf] %v153
    %186 = vst [vmem:[%s76 + $0xb8] sm:$0xf] %v154
    %187 = vst [vmem:[%s76 + $0xc4] sm:$0xf] %v155
    %188 = vst [vmem:[%s76 + $0xd0] sm:$0xf] %v156
    %189 = vst [vmem:[%s76 + $0xf4] sm:$0xf] %v157
    %190 = vst [vmem:[%s76 + $0x100] sm:$0xf] %v158
    %191 = vst [vmem:[%s76 + $0x10c] sm:$0xf] %v159
    %192 = vst [vmem:[%s76 + $0x118] sm:$0xf] %v160
    %193 = vst [vmem:[%s76 + $0x124] sm:$0xf] %v161
    %194 = vst [vmem:[%s76 + $0x130] sm:$0xf] %v162
    %195 = vst [vmem:[%s76 + $0x13c] sm:$0xf] %v163
    %196 = vst [vmem:[%s76 + $0x148] sm:$0xf] %v164
    %197 = vst [vmem:[%s76 + $0x16c] sm:$0xf] %v165
    %198 = vst [vmem:[%s76 + $0x178] sm:$0xf] %v166
    %199 = vst [vmem:[%s76 + $0x184] sm:$0xf] %v167
    %200 = vst [vmem:[%s76 + $0x190] sm:$0xf] %v168
    %201 = vst [vmem:[%s76 + $0x19c] sm:$0xf] %v169
    %202 = vst [vmem:[%s76 + $0x1a8] sm:$0xf] %v170
    %203 = vst [vmem:[%s76 + $0x1b4] sm:$0xf] %v171
    %204 = vst [vmem:[%s76 + $0x1c0] sm:$0xf] %v172
    %v205 = vld [vmem:[#allocation2] sm:$0x8]
    %v206 = vld [vmem:[#allocation2 + $0x4] sm:$0xf]
    %v207 = vld [vmem:[#allocation2 + $0xc] sm:$0x8]
    %v208 = vld [vmem:[#allocation2 + $0x10] sm:$0xf]
    %v209 = vld [vmem:[#allocation2 + $0x18] sm:$0x8]
    %v210 = vld [vmem:[#allocation2 + $0x1c] sm:$0xf]
    %v211 = vld [vmem:[#allocation2 + $0x24] sm:$0x8]
    %v212 = vld [vmem:[#allocation2 + $0x28] sm:$0xf]
    %v213 = vld [vmem:[#allocation2 + $0x30] sm:$0x8]
    %v214 = vld [vmem:[#allocation2 + $0x34] sm:$0xf]
    %v215 = vld [vmem:[#allocation2 + $0x3c] sm:$0x8]
    %v216 = vld [vmem:[#allocation2 + $0x40] sm:$0xf]
    %v217 = vld [vmem:[#allocation2 + $0x48] sm:$0x8]
    %v218 = vld [vmem:[#allocation2 + $0x4c] sm:$0xf]
    %v219 = vld [vmem:[#allocation2 + $0x54] sm:$0x8]
    %v220 = vld [vmem:[#allocation2 + $0x58] sm:$0xf]
    %v221 = vld [vmem:[#allocation2 + $0x78] sm:$0x8]
    %v222 = vld [vmem:[#allocation2 + $0x7c] sm:$0xf]
    %v223 = vld [vmem:[#allocation2 + $0x84] sm:$0x8]
    %v224 = vld [vmem:[#allocation2 + $0x88] sm:$0xf]
    %v225 = vld [vmem:[#allocation2 + $0x90] sm:$0x8]
    %v226 = vld [vmem:[#allocation2 + $0x94] sm:$0xf]
    %v227 = vld [vmem:[#allocation2 + $0x9c] sm:$0x8]
    %v228 = vld [vmem:[#allocation2 + $0xa0] sm:$0xf]
    %v229 = vld [vmem:[#allocation2 + $0xa8] sm:$0x8]
    %v230 = vld [vmem:[#allocation2 + $0xac] sm:$0xf]
    %v231 = vld [vmem:[#allocation2 + $0xb4] sm:$0x8]
    %v232 = vld [vmem:[#allocation2 + $0xb8] sm:$0xf]
    %v233 = vld [vmem:[#allocation2 + $0xc0] sm:$0x8]
    %v234 = vld [vmem:[#allocation2 + $0xc4] sm:$0xf]
    %v235 = vld [vmem:[#allocation2 + $0xcc] sm:$0x8]
    %v236 = vld [vmem:[#allocation2 + $0xd0] sm:$0xf]
    %v237 = vld [vmem:[#allocation2 + $0xf0] sm:$0x8]
    %v238 = vld [vmem:[#allocation2 + $0xf4] sm:$0xf]
    %v239 = vld [vmem:[#allocation2 + $0xfc] sm:$0x8]
    %v240 = vld [vmem:[#allocation2 + $0x100] sm:$0xf]
    %v241 = vld [vmem:[#allocation2 + $0x108] sm:$0x8]
    %v242 = vld [vmem:[#allocation2 + $0x10c] sm:$0xf]
    %v243 = vld [vmem:[#allocation2 + $0x114] sm:$0x8]
    %v244 = vld [vmem:[#allocation2 + $0x118] sm:$0xf]
    %v245 = vld [vmem:[#allocation2 + $0x120] sm:$0x8]
    %v246 = vld [vmem:[#allocation2 + $0x124] sm:$0xf]
    %v247 = vld [vmem:[#allocation2 + $0x12c] sm:$0x8]
    %v248 = vld [vmem:[#allocation2 + $0x130] sm:$0xf]
    %v249 = vld [vmem:[#allocation2 + $0x138] sm:$0x8]
    %v250 = vld [vmem:[#allocation2 + $0x13c] sm:$0xf]
    %v251 = vld [vmem:[#allocation2 + $0x144] sm:$0x8]
    %v252 = vld [vmem:[#allocation2 + $0x148] sm:$0xf]
    %v253 = vld [vmem:[#allocation2 + $0x168] sm:$0x8]
    %v254 = vld [vmem:[#allocation2 + $0x16c] sm:$0xf]
    %v255 = vld [vmem:[#allocation2 + $0x174] sm:$0x8]
    %v256 = vld [vmem:[#allocation2 + $0x178] sm:$0xf]
    %v257 = vld [vmem:[#allocation2 + $0x180] sm:$0x8]
    %v258 = vld [vmem:[#allocation2 + $0x184] sm:$0xf]
    %v259 = vld [vmem:[#allocation2 + $0x18c] sm:$0x8]
    %v260 = vld [vmem:[#allocation2 + $0x190] sm:$0xf]
    %v261 = vld [vmem:[#allocation2 + $0x198] sm:$0x8]
    %v262 = vld [vmem:[#allocation2 + $0x19c] sm:$0xf]
    %v263 = vld [vmem:[#allocation2 + $0x1a4] sm:$0x8]
    %v264 = vld [vmem:[#allocation2 + $0x1a8] sm:$0xf]
    %v265 = vld [vmem:[#allocation2 + $0x1b0] sm:$0x8]
    %v266 = vld [vmem:[#allocation2 + $0x1b4] sm:$0xf]
    %v267 = vld [vmem:[#allocation2 + $0x1bc] sm:$0x8]
    %v268 = vld [vmem:[#allocation2 + $0x1c0] sm:$0xf]
    %vm269 = vsmask.f32 256
    %vm270 = vsmask.f32 4368
    %vm271 = vmor %vm269, %vm270
    %v273 = vshrl.u32 %v205, 16
    %v275 = vrot.slane %v273, 7
    %v276 = vrot.slane %v275, 4
    %v278 = vshrl.u32 %v206, 16
    %v280 = vrot.slane %v278, 7
    %v281 = vshll.u32 %v206, 16
    %v283 = vor.u32 %v280, %v281
    %v284 = vsel %vm271, %v276, %v283
    %v286 = vshrl.u32 %v207, 16
    %v288 = vrot.slane %v286, 7
    %v289 = vrot.slane %v288, 4
    %v291 = vshrl.u32 %v208, 16
    %v293 = vrot.slane %v291, 7
    %v294 = vshll.u32 %v208, 16
    %v296 = vor.u32 %v293, %v294
    %v297 = vsel %vm271, %v289, %v296
    %v299 = vshrl.u32 %v209, 16
    %v301 = vrot.slane %v299, 7
    %v302 = vrot.slane %v301, 4
    %v304 = vshrl.u32 %v210, 16
    %v306 = vrot.slane %v304, 7
    %v307 = vshll.u32 %v210, 16
    %v309 = vor.u32 %v306, %v307
    %v310 = vsel %vm271, %v302, %v309
    %v312 = vshrl.u32 %v211, 16
    %v314 = vrot.slane %v312, 7
    %v315 = vrot.slane %v314, 4
    %v317 = vshrl.u32 %v212, 16
    %v319 = vrot.slane %v317, 7
    %v320 = vshll.u32 %v212, 16
    %v322 = vor.u32 %v319, %v320
    %v323 = vsel %vm271, %v315, %v322
    %v325 = vshrl.u32 %v213, 16
    %v327 = vrot.slane %v325, 7
    %v328 = vrot.slane %v327, 4
    %v330 = vshrl.u32 %v214, 16
    %v332 = vrot.slane %v330, 7
    %v333 = vshll.u32 %v214, 16
    %v335 = vor.u32 %v332, %v333
    %v336 = vsel %vm271, %v328, %v335
    %v338 = vshrl.u32 %v215, 16
    %v340 = vrot.slane %v338, 7
    %v341 = vrot.slane %v340, 4
    %v343 = vshrl.u32 %v216, 16
    %v345 = vrot.slane %v343, 7
    %v346 = vshll.u32 %v216, 16
    %v348 = vor.u32 %v345, %v346
    %v349 = vsel %vm271, %v341, %v348
    %v351 = vshrl.u32 %v217, 16
    %v353 = vrot.slane %v351, 7
    %v354 = vrot.slane %v353, 4
    %v356 = vshrl.u32 %v218, 16
    %v358 = vrot.slane %v356, 7
    %v359 = vshll.u32 %v218, 16
    %v361 = vor.u32 %v358, %v359
    %v362 = vsel %vm271, %v354, %v361
    %v364 = vshrl.u32 %v219, 16
    %v366 = vrot.slane %v364, 7
    %v367 = vrot.slane %v366, 4
    %v369 = vshrl.u32 %v220, 16
    %v371 = vrot.slane %v369, 7
    %v372 = vshll.u32 %v220, 16
    %v374 = vor.u32 %v371, %v372
    %v375 = vsel %vm271, %v367, %v374
    %v377 = vshrl.u32 %v221, 16
    %v379 = vrot.slane %v377, 7
    %v380 = vrot.slane %v379, 4
    %v382 = vshrl.u32 %v222, 16
    %v384 = vrot.slane %v382, 7
    %v385 = vshll.u32 %v222, 16
    %v387 = vor.u32 %v384, %v385
    %v388 = vsel %vm271, %v380, %v387
    %v390 = vshrl.u32 %v223, 16
    %v392 = vrot.slane %v390, 7
    %v393 = vrot.slane %v392, 4
    %v395 = vshrl.u32 %v224, 16
    %v397 = vrot.slane %v395, 7
    %v398 = vshll.u32 %v224, 16
    %v400 = vor.u32 %v397, %v398
    %v401 = vsel %vm271, %v393, %v400
    %v403 = vshrl.u32 %v225, 16
    %v405 = vrot.slane %v403, 7
    %v406 = vrot.slane %v405, 4
    %v408 = vshrl.u32 %v226, 16
    %v410 = vrot.slane %v408, 7
    %v411 = vshll.u32 %v226, 16
    %v413 = vor.u32 %v410, %v411
    %v414 = vsel %vm271, %v406, %v413
    %v416 = vshrl.u32 %v227, 16
    %v418 = vrot.slane %v416, 7
    %v419 = vrot.slane %v418, 4
    %v421 = vshrl.u32 %v228, 16
    %v423 = vrot.slane %v421, 7
    %v424 = vshll.u32 %v228, 16
    %v426 = vor.u32 %v423, %v424
    %v427 = vsel %vm271, %v419, %v426
    %v429 = vshrl.u32 %v229, 16
    %v431 = vrot.slane %v429, 7
    %v432 = vrot.slane %v431, 4
    %v434 = vshrl.u32 %v230, 16
    %v436 = vrot.slane %v434, 7
    %v437 = vshll.u32 %v230, 16
    %v439 = vor.u32 %v436, %v437
    %v440 = vsel %vm271, %v432, %v439
    %v442 = vshrl.u32 %v231, 16
    %v444 = vrot.slane %v442, 7
    %v445 = vrot.slane %v444, 4
    %v447 = vshrl.u32 %v232, 16
    %v449 = vrot.slane %v447, 7
    %v450 = vshll.u32 %v232, 16
    %v452 = vor.u32 %v449, %v450
    %v453 = vsel %vm271, %v445, %v452
    %v455 = vshrl.u32 %v233, 16
    %v457 = vrot.slane %v455, 7
    %v458 = vrot.slane %v457, 4
    %v460 = vshrl.u32 %v234, 16
    %v462 = vrot.slane %v460, 7
    %v463 = vshll.u32 %v234, 16
    %v465 = vor.u32 %v462, %v463
    %v466 = vsel %vm271, %v458, %v465
    %v468 = vshrl.u32 %v235, 16
    %v470 = vrot.slane %v468, 7
    %v471 = vrot.slane %v470, 4
    %v473 = vshrl.u32 %v236, 16
    %v475 = vrot.slane %v473, 7
    %v476 = vshll.u32 %v236, 16
    %v478 = vor.u32 %v475, %v476
    %v479 = vsel %vm271, %v471, %v478
    %v481 = vshrl.u32 %v237, 16
    %v483 = vrot.slane %v481, 7
    %v484 = vrot.slane %v483, 4
    %v486 = vshrl.u32 %v238, 16
    %v488 = vrot.slane %v486, 7
    %v489 = vshll.u32 %v238, 16
    %v491 = vor.u32 %v488, %v489
    %v492 = vsel %vm271, %v484, %v491
    %v494 = vshrl.u32 %v239, 16
    %v496 = vrot.slane %v494, 7
    %v497 = vrot.slane %v496, 4
    %v499 = vshrl.u32 %v240, 16
    %v501 = vrot.slane %v499, 7
    %v502 = vshll.u32 %v240, 16
    %v504 = vor.u32 %v501, %v502
    %v505 = vsel %vm271, %v497, %v504
    %v507 = vshrl.u32 %v241, 16
    %v509 = vrot.slane %v507, 7
    %v510 = vrot.slane %v509, 4
    %v512 = vshrl.u32 %v242, 16
    %v514 = vrot.slane %v512, 7
    %v515 = vshll.u32 %v242, 16
    %v517 = vor.u32 %v514, %v515
    %v518 = vsel %vm271, %v510, %v517
    %v520 = vshrl.u32 %v243, 16
    %v522 = vrot.slane %v520, 7
    %v523 = vrot.slane %v522, 4
    %v525 = vshrl.u32 %v244, 16
    %v527 = vrot.slane %v525, 7
    %v528 = vshll.u32 %v244, 16
    %v530 = vor.u32 %v527, %v528
    %v531 = vsel %vm271, %v523, %v530
    %v533 = vshrl.u32 %v245, 16
    %v535 = vrot.slane %v533, 7
    %v536 = vrot.slane %v535, 4
    %v538 = vshrl.u32 %v246, 16
    %v540 = vrot.slane %v538, 7
    %v541 = vshll.u32 %v246, 16
    %v543 = vor.u32 %v540, %v541
    %v544 = vsel %vm271, %v536, %v543
    %v546 = vshrl.u32 %v247, 16
    %v548 = vrot.slane %v546, 7
    %v549 = vrot.slane %v548, 4
    %v551 = vshrl.u32 %v248, 16
    %v553 = vrot.slane %v551, 7
    %v554 = vshll.u32 %v248, 16
    %v556 = vor.u32 %v553, %v554
    %v557 = vsel %vm271, %v549, %v556
    %v559 = vshrl.u32 %v249, 16
    %v561 = vrot.slane %v559, 7
    %v562 = vrot.slane %v561, 4
    %v564 = vshrl.u32 %v250, 16
    %v566 = vrot.slane %v564, 7
    %v567 = vshll.u32 %v250, 16
    %v569 = vor.u32 %v566, %v567
    %v570 = vsel %vm271, %v562, %v569
    %v572 = vshrl.u32 %v251, 16
    %v574 = vrot.slane %v572, 7
    %v575 = vrot.slane %v574, 4
    %v577 = vshrl.u32 %v252, 16
    %v579 = vrot.slane %v577, 7
    %v580 = vshll.u32 %v252, 16
    %v582 = vor.u32 %v579, %v580
    %v583 = vsel %vm271, %v575, %v582
    %v585 = vshrl.u32 %v253, 16
    %v587 = vrot.slane %v585, 7
    %v588 = vrot.slane %v587, 4
    %v590 = vshrl.u32 %v254, 16
    %v592 = vrot.slane %v590, 7
    %v593 = vshll.u32 %v254, 16
    %v595 = vor.u32 %v592, %v593
    %v596 = vsel %vm271, %v588, %v595
    %v598 = vshrl.u32 %v255, 16
    %v600 = vrot.slane %v598, 7
    %v601 = vrot.slane %v600, 4
    %v603 = vshrl.u32 %v256, 16
    %v605 = vrot.slane %v603, 7
    %v606 = vshll.u32 %v256, 16
    %v608 = vor.u32 %v605, %v606
    %v609 = vsel %vm271, %v601, %v608
    %v611 = vshrl.u32 %v257, 16
    %v613 = vrot.slane %v611, 7
    %v614 = vrot.slane %v613, 4
    %v616 = vshrl.u32 %v258, 16
    %v618 = vrot.slane %v616, 7
    %v619 = vshll.u32 %v258, 16
    %v621 = vor.u32 %v618, %v619
    %v622 = vsel %vm271, %v614, %v621
    %v624 = vshrl.u32 %v259, 16
    %v626 = vrot.slane %v624, 7
    %v627 = vrot.slane %v626, 4
    %v629 = vshrl.u32 %v260, 16
    %v631 = vrot.slane %v629, 7
    %v632 = vshll.u32 %v260, 16
    %v634 = vor.u32 %v631, %v632
    %v635 = vsel %vm271, %v627, %v634
    %v637 = vshrl.u32 %v261, 16
    %v639 = vrot.slane %v637, 7
    %v640 = vrot.slane %v639, 4
    %v642 = vshrl.u32 %v262, 16
    %v644 = vrot.slane %v642, 7
    %v645 = vshll.u32 %v262, 16
    %v647 = vor.u32 %v644, %v645
    %v648 = vsel %vm271, %v640, %v647
    %v650 = vshrl.u32 %v263, 16
    %v652 = vrot.slane %v650, 7
    %v653 = vrot.slane %v652, 4
    %v655 = vshrl.u32 %v264, 16
    %v657 = vrot.slane %v655, 7
    %v658 = vshll.u32 %v264, 16
    %v660 = vor.u32 %v657, %v658
    %v661 = vsel %vm271, %v653, %v660
    %v663 = vshrl.u32 %v265, 16
    %v665 = vrot.slane %v663, 7
    %v666 = vrot.slane %v665, 4
    %v668 = vshrl.u32 %v266, 16
    %v670 = vrot.slane %v668, 7
    %v671 = vshll.u32 %v266, 16
    %v673 = vor.u32 %v670, %v671
    %v674 = vsel %vm271, %v666, %v673
    %v676 = vshrl.u32 %v267, 16
    %v678 = vrot.slane %v676, 7
    %v679 = vrot.slane %v678, 4
    %v681 = vshrl.u32 %v268, 16
    %v683 = vrot.slane %v681, 7
    %v684 = vshll.u32 %v268, 16
    %v686 = vor.u32 %v683, %v684
    %v687 = vsel %vm271, %v679, %v686
    %v688 = vld [vmem:[#allocation6] sm:$0xf]
    %v689 = vld [vmem:[#allocation6 + $0x4] sm:$0xf]
    %v690 = vld [vmem:[#allocation6 + $0x8] sm:$0xf]
    %v691 = vld [vmem:[#allocation6 + $0xc] sm:$0xf]
    %v692 = vld [vmem:[#allocation6 + $0x10] sm:$0xf]
    %v693 = vld [vmem:[#allocation6 + $0x14] sm:$0xf]
    %v694 = vld [vmem:[#allocation6 + $0x18] sm:$0xf]
    %v695 = vld [vmem:[#allocation6 + $0x1c] sm:$0xf]
    %v696 = vld [vmem:[#allocation6 + $0x20] sm:$0xf]
    %v697 = vld [vmem:[#allocation6 + $0x24] sm:$0xf]
    %v698 = vld [vmem:[#allocation6 + $0x28] sm:$0xf]
    %v699 = vld [vmem:[#allocation6 + $0x2c] sm:$0xf]
    %v700 = vld [vmem:[#allocation6 + $0x30] sm:$0xf]
    %v701 = vld [vmem:[#allocation6 + $0x34] sm:$0xf]
    %v702 = vld [vmem:[#allocation6 + $0x38] sm:$0xf]
    %v703 = vld [vmem:[#allocation6 + $0x3c] sm:$0xf]
    %s704 = scalar_lea.vmem [#allocation6], 64
    %v705 = vld [vmem:[%s704] sm:$0xf]
    %v706 = vld [vmem:[%s704 + $0x4] sm:$0xf]
    %v707 = vld [vmem:[%s704 + $0x8] sm:$0xf]
    %v708 = vld [vmem:[%s704 + $0xc] sm:$0xf]
    %v709 = vld [vmem:[%s704 + $0x10] sm:$0xf]
    %v710 = vld [vmem:[%s704 + $0x14] sm:$0xf]
    %v711 = vld [vmem:[%s704 + $0x18] sm:$0xf]
    %v712 = vld [vmem:[%s704 + $0x1c] sm:$0xf]
    %v713 = vld [vmem:[%s704 + $0x20] sm:$0xf]
    %v714 = vld [vmem:[%s704 + $0x24] sm:$0xf]
    %v715 = vld [vmem:[%s704 + $0x28] sm:$0xf]
    %v716 = vld [vmem:[%s704 + $0x2c] sm:$0xf]
    %v717 = vld [vmem:[%s704 + $0x30] sm:$0xf]
    %v718 = vld [vmem:[%s704 + $0x34] sm:$0xf]
    %v719 = vld [vmem:[%s704 + $0x38] sm:$0xf]
    %v720 = vld [vmem:[%s704 + $0x3c] sm:$0xf]
    %v753 = vunpack.c.l.b16 %v206
    %v754 = vunpack.c.l.b16 %v208
    %v755 = vunpack.c.l.b16 %v210
    %v756 = vunpack.c.l.b16 %v212
    %v757 = vunpack.c.l.b16 %v214
    %v758 = vunpack.c.l.b16 %v216
    %v759 = vunpack.c.l.b16 %v218
    %v760 = vunpack.c.l.b16 %v220
    %v761 = vunpack.c.l.b16 %v222
    %v762 = vunpack.c.l.b16 %v224
    %v763 = vunpack.c.l.b16 %v226
    %v764 = vunpack.c.l.b16 %v228
    %v765 = vunpack.c.l.b16 %v230
    %v766 = vunpack.c.l.b16 %v232
    %v767 = vunpack.c.l.b16 %v234
    %v768 = vunpack.c.l.b16 %v236
    %v769 = vunpack.c.l.b16 %v238
    %v770 = vunpack.c.l.b16 %v240
    %v771 = vunpack.c.l.b16 %v242
    %v772 = vunpack.c.l.b16 %v244
    %v773 = vunpack.c.l.b16 %v246
    %v774 = vunpack.c.l.b16 %v248
    %v775 = vunpack.c.l.b16 %v250
    %v776 = vunpack.c.l.b16 %v252
    %v777 = vunpack.c.l.b16 %v254
    %v778 = vunpack.c.l.b16 %v256
    %v779 = vunpack.c.l.b16 %v258
    %v780 = vunpack.c.l.b16 %v260
    %v781 = vunpack.c.l.b16 %v262
    %v782 = vunpack.c.l.b16 %v264
    %v783 = vunpack.c.l.b16 %v266
    %v784 = vunpack.c.l.b16 %v268
    %v785 = vpack.c.b16 %v754, %v753
    %v786 = vpack.c.b16 %v756, %v755
    %v787 = vpack.c.b16 %v758, %v757
    %v788 = vpack.c.b16 %v760, %v759
    %v789 = vpack.c.b16 %v762, %v761
    %v790 = vpack.c.b16 %v764, %v763
    %v791 = vpack.c.b16 %v766, %v765
    %v792 = vpack.c.b16 %v768, %v767
    %v793 = vpack.c.b16 %v770, %v769
    %v794 = vpack.c.b16 %v772, %v771
    %v795 = vpack.c.b16 %v774, %v773
    %v796 = vpack.c.b16 %v776, %v775
    %v797 = vpack.c.b16 %v778, %v777
    %v798 = vpack.c.b16 %v780, %v779
    %v799 = vpack.c.b16 %v782, %v781
    %v800 = vpack.c.b16 %v784, %v783
    %v833 = vunpack.c.l.b16 %v705
    %v834 = vunpack.c.l.b16 %v706
    %v835 = vunpack.c.l.b16 %v707
    %v836 = vunpack.c.l.b16 %v708
    %v837 = vunpack.c.l.b16 %v709
    %v838 = vunpack.c.l.b16 %v710
    %v839 = vunpack.c.l.b16 %v711
    %v840 = vunpack.c.l.b16 %v712
    %v841 = vunpack.c.l.b16 %v713
    %v842 = vunpack.c.l.b16 %v714
    %v843 = vunpack.c.l.b16 %v715
    %v844 = vunpack.c.l.b16 %v716
    %v845 = vunpack.c.l.b16 %v717
    %v846 = vunpack.c.l.b16 %v718
    %v847 = vunpack.c.l.b16 %v719
    %v848 = vunpack.c.l.b16 %v720
    %v849 = vpack.c.b16 %v834, %v833
    %v850 = vpack.c.b16 %v836, %v835
    %v851 = vpack.c.b16 %v838, %v837
    %v852 = vpack.c.b16 %v840, %v839
    %v853 = vpack.c.b16 %v842, %v841
    %v854 = vpack.c.b16 %v844, %v843
    %v855 = vpack.c.b16 %v846, %v845
    %v856 = vpack.c.b16 %v848, %v847
    %865 = vmatpush.bf16.msra.mxu0 %v856
    %866 = vmatpush.bf16.msra.mxu0 %v855
    %867 = vmatpush.bf16.msra.mxu0 %v854
    %868 = vmatpush.bf16.msra.mxu0 %v853
    %869 = vmatpush.bf16.msra.mxu0 %v852
    %870 = vmatpush.bf16.msra.mxu0 %v851
    %871 = vmatpush.bf16.msra.mxu0 %v850
    %872 = vmatpush.bf16.msra.mxu0 %v849
    %873 = vmatmul.bf16.gmra.mxu0 %v785
    %v874 = vpop.f32.mrf.mxu0
    %v875 = vadd.f32 0.0, %v874
    %v876 = vpop.f32.mrf.mxu0
    %v877 = vadd.f32 0.0, %v876
    %878 = vmatmul.bf16.gmra.mxu0 %v786
    %v879 = vpop.f32.mrf.mxu0
    %v880 = vadd.f32 0.0, %v879
    %v881 = vpop.f32.mrf.mxu0
    %v882 = vadd.f32 0.0, %v881
    %883 = vmatmul.bf16.gmra.mxu0 %v787
    %v884 = vpop.f32.mrf.mxu0
    %v885 = vadd.f32 0.0, %v884
    %v886 = vpop.f32.mrf.mxu0
    %v887 = vadd.f32 0.0, %v886
    %888 = vmatmul.bf16.gmra.mxu0 %v788
    %v889 = vpop.f32.mrf.mxu0
    %v890 = vadd.f32 0.0, %v889
    %v891 = vpop.f32.mrf.mxu0
    %v892 = vadd.f32 0.0, %v891
    %893 = vmatmul.bf16.gmra.mxu0 %v789
    %v894 = vpop.f32.mrf.mxu0
    %v895 = vadd.f32 0.0, %v894
    %v896 = vpop.f32.mrf.mxu0
    %v897 = vadd.f32 0.0, %v896
    %898 = vmatmul.bf16.gmra.mxu0 %v790
    %v899 = vpop.f32.mrf.mxu0
    %v900 = vadd.f32 0.0, %v899
    %v901 = vpop.f32.mrf.mxu0
    %v902 = vadd.f32 0.0, %v901
    %903 = vmatmul.bf16.gmra.mxu0 %v791
    %v904 = vpop.f32.mrf.mxu0
    %v905 = vadd.f32 0.0, %v904
    %v906 = vpop.f32.mrf.mxu0
    %v907 = vadd.f32 0.0, %v906
    %908 = vmatmul.bf16.gmra.mxu0 %v792
    %v909 = vpop.f32.mrf.mxu0
    %v910 = vadd.f32 0.0, %v909
    %v911 = vpop.f32.mrf.mxu0
    %v912 = vadd.f32 0.0, %v911
    %913 = vmatmul.bf16.gmra.mxu0 %v793
    %v914 = vpop.f32.mrf.mxu0
    %v915 = vadd.f32 0.0, %v914
    %v916 = vpop.f32.mrf.mxu0
    %v917 = vadd.f32 0.0, %v916
    %918 = vmatmul.bf16.gmra.mxu0 %v794
    %v919 = vpop.f32.mrf.mxu0
    %v920 = vadd.f32 0.0, %v919
    %v921 = vpop.f32.mrf.mxu0
    %v922 = vadd.f32 0.0, %v921
    %923 = vmatmul.bf16.gmra.mxu0 %v795
    %v924 = vpop.f32.mrf.mxu0
    %v925 = vadd.f32 0.0, %v924
    %v926 = vpop.f32.mrf.mxu0
    %v927 = vadd.f32 0.0, %v926
    %928 = vmatmul.bf16.gmra.mxu0 %v796
    %v929 = vpop.f32.mrf.mxu0
    %v930 = vadd.f32 0.0, %v929
    %v931 = vpop.f32.mrf.mxu0
    %v932 = vadd.f32 0.0, %v931
    %933 = vmatmul.bf16.gmra.mxu0 %v797
    %v934 = vpop.f32.mrf.mxu0
    %v935 = vadd.f32 0.0, %v934
    %v936 = vpop.f32.mrf.mxu0
    %v937 = vadd.f32 0.0, %v936
    %938 = vmatmul.bf16.gmra.mxu0 %v798
    %v939 = vpop.f32.mrf.mxu0
    %v940 = vadd.f32 0.0, %v939
    %v941 = vpop.f32.mrf.mxu0
    %v942 = vadd.f32 0.0, %v941
    %943 = vmatmul.bf16.gmra.mxu0 %v799
    %v944 = vpop.f32.mrf.mxu0
    %v945 = vadd.f32 0.0, %v944
    %v946 = vpop.f32.mrf.mxu0
    %v947 = vadd.f32 0.0, %v946
    %948 = vmatmul.bf16.gmra.mxu0 %v800
    %v949 = vpop.f32.mrf.mxu0
    %v950 = vadd.f32 0.0, %v949
    %v951 = vpop.f32.mrf.mxu0
    %v952 = vadd.f32 0.0, %v951
    %953 = vdwg.mxu0
    %v954 = vunpack.c.l.b16 %v284
    %v955 = vunpack.c.l.b16 %v297
    %v956 = vunpack.c.l.b16 %v310
    %v957 = vunpack.c.l.b16 %v323
    %v958 = vunpack.c.l.b16 %v336
    %v959 = vunpack.c.l.b16 %v349
    %v960 = vunpack.c.l.b16 %v362
    %v961 = vunpack.c.l.b16 %v375
    %v962 = vunpack.c.l.b16 %v388
    %v963 = vunpack.c.l.b16 %v401
    %v964 = vunpack.c.l.b16 %v414
    %v965 = vunpack.c.l.b16 %v427
    %v966 = vunpack.c.l.b16 %v440
    %v967 = vunpack.c.l.b16 %v453
    %v968 = vunpack.c.l.b16 %v466
    %v969 = vunpack.c.l.b16 %v479
    %v970 = vunpack.c.l.b16 %v492
    %v971 = vunpack.c.l.b16 %v505
    %v972 = vunpack.c.l.b16 %v518
    %v973 = vunpack.c.l.b16 %v531
    %v974 = vunpack.c.l.b16 %v544
    %v975 = vunpack.c.l.b16 %v557
    %v976 = vunpack.c.l.b16 %v570
    %v977 = vunpack.c.l.b16 %v583
    %v978 = vunpack.c.l.b16 %v596
    %v979 = vunpack.c.l.b16 %v609
    %v980 = vunpack.c.l.b16 %v622
    %v981 = vunpack.c.l.b16 %v635
    %v982 = vunpack.c.l.b16 %v648
    %v983 = vunpack.c.l.b16 %v661
    %v984 = vunpack.c.l.b16 %v674
    %v985 = vunpack.c.l.b16 %v687
    %v986 = vpack.c.b16 %v955, %v954
    %v987 = vpack.c.b16 %v957, %v956
    %v988 = vpack.c.b16 %v959, %v958
    %v989 = vpack.c.b16 %v961, %v960
    %v990 = vpack.c.b16 %v963, %v962
    %v991 = vpack.c.b16 %v965, %v964
    %v992 = vpack.c.b16 %v967, %v966
    %v993 = vpack.c.b16 %v969, %v968
    %v994 = vpack.c.b16 %v971, %v970
    %v995 = vpack.c.b16 %v973, %v972
    %v996 = vpack.c.b16 %v975, %v974
    %v997 = vpack.c.b16 %v977, %v976
    %v998 = vpack.c.b16 %v979, %v978
    %v999 = vpack.c.b16 %v981, %v980
    %v1000 = vpack.c.b16 %v983, %v982
    %v1001 = vpack.c.b16 %v985, %v984
    %v1034 = vunpack.c.l.b16 %v688
    %v1035 = vunpack.c.l.b16 %v689
    %v1036 = vunpack.c.l.b16 %v690
    %v1037 = vunpack.c.l.b16 %v691
    %v1038 = vunpack.c.l.b16 %v692
    %v1039 = vunpack.c.l.b16 %v693
    %v1040 = vunpack.c.l.b16 %v694
    %v1041 = vunpack.c.l.b16 %v695
    %v1042 = vunpack.c.l.b16 %v696
    %v1043 = vunpack.c.l.b16 %v697
    %v1044 = vunpack.c.l.b16 %v698
    %v1045 = vunpack.c.l.b16 %v699
    %v1046 = vunpack.c.l.b16 %v700
    %v1047 = vunpack.c.l.b16 %v701
    %v1048 = vunpack.c.l.b16 %v702
    %v1049 = vunpack.c.l.b16 %v703
    %v1050 = vpack.c.b16 %v1035, %v1034
    %v1051 = vpack.c.b16 %v1037, %v1036
    %v1052 = vpack.c.b16 %v1039, %v1038
    %v1053 = vpack.c.b16 %v1041, %v1040
    %v1054 = vpack.c.b16 %v1043, %v1042
    %v1055 = vpack.c.b16 %v1045, %v1044
    %v1056 = vpack.c.b16 %v1047, %v1046
    %v1057 = vpack.c.b16 %v1049, %v1048
    %1066 = vmatpush.bf16.msra.mxu0 %v1057
    %1067 = vmatpush.bf16.msra.mxu0 %v1056
    %1068 = vmatpush.bf16.msra.mxu0 %v1055
    %1069 = vmatpush.bf16.msra.mxu0 %v1054
    %1070 = vmatpush.bf16.msra.mxu0 %v1053
    %1071 = vmatpush.bf16.msra.mxu0 %v1052
    %1072 = vmatpush.bf16.msra.mxu0 %v1051
    %1073 = vmatpush.bf16.msra.mxu0 %v1050
    %1074 = vmatmul.bf16.gmra.mxu0 %v986
    %v1075 = vpop.f32.mrf.mxu0
    %v1076 = vadd.f32 %v875, %v1075
    %v1077 = vpop.f32.mrf.mxu0
    %v1078 = vadd.f32 %v877, %v1077
    %1079 = vmatmul.bf16.gmra.mxu0 %v987
    %v1080 = vpop.f32.mrf.mxu0
    %v1081 = vadd.f32 %v880, %v1080
    %v1082 = vpop.f32.mrf.mxu0
    %v1083 = vadd.f32 %v882, %v1082
    %1084 = vmatmul.bf16.gmra.mxu0 %v988
    %v1085 = vpop.f32.mrf.mxu0
    %v1086 = vadd.f32 %v885, %v1085
    %v1087 = vpop.f32.mrf.mxu0
    %v1088 = vadd.f32 %v887, %v1087
    %1089 = vmatmul.bf16.gmra.mxu0 %v989
    %v1090 = vpop.f32.mrf.mxu0
    %v1091 = vadd.f32 %v890, %v1090
    %v1092 = vpop.f32.mrf.mxu0
    %v1093 = vadd.f32 %v892, %v1092
    %1094 = vmatmul.bf16.gmra.mxu0 %v990
    %v1095 = vpop.f32.mrf.mxu0
    %v1096 = vadd.f32 %v895, %v1095
    %v1097 = vpop.f32.mrf.mxu0
    %v1098 = vadd.f32 %v897, %v1097
    %1099 = vmatmul.bf16.gmra.mxu0 %v991
    %v1100 = vpop.f32.mrf.mxu0
    %v1101 = vadd.f32 %v900, %v1100
    %v1102 = vpop.f32.mrf.mxu0
    %v1103 = vadd.f32 %v902, %v1102
    %1104 = vmatmul.bf16.gmra.mxu0 %v992
    %v1105 = vpop.f32.mrf.mxu0
    %v1106 = vadd.f32 %v905, %v1105
    %v1107 = vpop.f32.mrf.mxu0
    %v1108 = vadd.f32 %v907, %v1107
    %1109 = vmatmul.bf16.gmra.mxu0 %v993
    %v1110 = vpop.f32.mrf.mxu0
    %v1111 = vadd.f32 %v910, %v1110
    %v1112 = vpop.f32.mrf.mxu0
    %v1113 = vadd.f32 %v912, %v1112
    %1114 = vmatmul.bf16.gmra.mxu0 %v994
    %v1115 = vpop.f32.mrf.mxu0
    %v1116 = vadd.f32 %v915, %v1115
    %v1117 = vpop.f32.mrf.mxu0
    %v1118 = vadd.f32 %v917, %v1117
    %1119 = vmatmul.bf16.gmra.mxu0 %v995
    %v1120 = vpop.f32.mrf.mxu0
    %v1121 = vadd.f32 %v920, %v1120
    %v1122 = vpop.f32.mrf.mxu0
    %v1123 = vadd.f32 %v922, %v1122
    %1124 = vmatmul.bf16.gmra.mxu0 %v996
    %v1125 = vpop.f32.mrf.mxu0
    %v1126 = vadd.f32 %v925, %v1125
    %v1127 = vpop.f32.mrf.mxu0
    %v1128 = vadd.f32 %v927, %v1127
    %1129 = vmatmul.bf16.gmra.mxu0 %v997
    %v1130 = vpop.f32.mrf.mxu0
    %v1131 = vadd.f32 %v930, %v1130
    %v1132 = vpop.f32.mrf.mxu0
    %v1133 = vadd.f32 %v932, %v1132
    %1134 = vmatmul.bf16.gmra.mxu0 %v998
    %v1135 = vpop.f32.mrf.mxu0
    %v1136 = vadd.f32 %v935, %v1135
    %v1137 = vpop.f32.mrf.mxu0
    %v1138 = vadd.f32 %v937, %v1137
    %1139 = vmatmul.bf16.gmra.mxu0 %v999
    %v1140 = vpop.f32.mrf.mxu0
    %v1141 = vadd.f32 %v940, %v1140
    %v1142 = vpop.f32.mrf.mxu0
    %v1143 = vadd.f32 %v942, %v1142
    %1144 = vmatmul.bf16.gmra.mxu0 %v1000
    %v1145 = vpop.f32.mrf.mxu0
    %v1146 = vadd.f32 %v945, %v1145
    %v1147 = vpop.f32.mrf.mxu0
    %v1148 = vadd.f32 %v947, %v1147
    %1149 = vmatmul.bf16.gmra.mxu0 %v1001
    %v1150 = vpop.f32.mrf.mxu0
    %v1151 = vadd.f32 %v950, %v1150
    %v1152 = vpop.f32.mrf.mxu0
    %v1153 = vadd.f32 %v952, %v1152
    %1154 = vdwg.mxu0
    %v1155 = vld [vmem:[#allocation2 + $0x4] sm:$0xf]
    %v1156 = vld [vmem:[#allocation2 + $0x8] sm:$0x1]
    %v1157 = vld [vmem:[#allocation2 + $0x10] sm:$0xf]
    %v1158 = vld [vmem:[#allocation2 + $0x14] sm:$0x1]
    %v1159 = vld [vmem:[#allocation2 + $0x1c] sm:$0xf]
    %v1160 = vld [vmem:[#allocation2 + $0x20] sm:$0x1]
    %v1161 = vld [vmem:[#allocation2 + $0x28] sm:$0xf]
    %v1162 = vld [vmem:[#allocation2 + $0x2c] sm:$0x1]
    %v1163 = vld [vmem:[#allocation2 + $0x34] sm:$0xf]
    %v1164 = vld [vmem:[#allocation2 + $0x38] sm:$0x1]
    %v1165 = vld [vmem:[#allocation2 + $0x40] sm:$0xf]
    %v1166 = vld [vmem:[#allocation2 + $0x44] sm:$0x1]
    %v1167 = vld [vmem:[#allocation2 + $0x4c] sm:$0xf]
    %v1168 = vld [vmem:[#allocation2 + $0x50] sm:$0x1]
    %v1169 = vld [vmem:[#allocation2 + $0x58] sm:$0xf]
    %v1170 = vld [vmem:[#allocation2 + $0x5c] sm:$0x1]
    %v1171 = vld [vmem:[#allocation2 + $0x7c] sm:$0xf]
    %v1172 = vld [vmem:[#allocation2 + $0x80] sm:$0x1]
    %v1173 = vld [vmem:[#allocation2 + $0x88] sm:$0xf]
    %v1174 = vld [vmem:[#allocation2 + $0x8c] sm:$0x1]
    %v1175 = vld [vmem:[#allocation2 + $0x94] sm:$0xf]
    %v1176 = vld [vmem:[#allocation2 + $0x98] sm:$0x1]
    %v1177 = vld [vmem:[#allocation2 + $0xa0] sm:$0xf]
    %v1178 = vld [vmem:[#allocation2 + $0xa4] sm:$0x1]
    %v1179 = vld [vmem:[#allocation2 + $0xac] sm:$0xf]
    %v1180 = vld [vmem:[#allocation2 + $0xb0] sm:$0x1]
    %v1181 = vld [vmem:[#allocation2 + $0xb8] sm:$0xf]
    %v1182 = vld [vmem:[#allocation2 + $0xbc] sm:$0x1]
    %v1183 = vld [vmem:[#allocation2 + $0xc4] sm:$0xf]
    %v1184 = vld [vmem:[#allocation2 + $0xc8] sm:$0x1]
    %v1185 = vld [vmem:[#allocation2 + $0xd0] sm:$0xf]
    %v1186 = vld [vmem:[#allocation2 + $0xd4] sm:$0x1]
    %v1187 = vld [vmem:[#allocation2 + $0xf4] sm:$0xf]
    %v1188 = vld [vmem:[#allocation2 + $0xf8] sm:$0x1]
    %v1189 = vld [vmem:[#allocation2 + $0x100] sm:$0xf]
    %v1190 = vld [vmem:[#allocation2 + $0x104] sm:$0x1]
    %v1191 = vld [vmem:[#allocation2 + $0x10c] sm:$0xf]
    %v1192 = vld [vmem:[#allocation2 + $0x110] sm:$0x1]
    %v1193 = vld [vmem:[#allocation2 + $0x118] sm:$0xf]
    %v1194 = vld [vmem:[#allocation2 + $0x11c] sm:$0x1]
    %v1195 = vld [vmem:[#allocation2 + $0x124] sm:$0xf]
    %v1196 = vld [vmem:[#allocation2 + $0x128] sm:$0x1]
    %v1197 = vld [vmem:[#allocation2 + $0x130] sm:$0xf]
    %v1198 = vld [vmem:[#allocation2 + $0x134] sm:$0x1]
    %v1199 = vld [vmem:[#allocation2 + $0x13c] sm:$0xf]
    %v1200 = vld [vmem:[#allocation2 + $0x140] sm:$0x1]
    %v1201 = vld [vmem:[#allocation2 + $0x148] sm:$0xf]
    %v1202 = vld [vmem:[#allocation2 + $0x14c] sm:$0x1]
    %v1203 = vld [vmem:[#allocation2 + $0x16c] sm:$0xf]
    %v1204 = vld [vmem:[#allocation2 + $0x170] sm:$0x1]
    %v1205 = vld [vmem:[#allocation2 + $0x178] sm:$0xf]
    %v1206 = vld [vmem:[#allocation2 + $0x17c] sm:$0x1]
    %v1207 = vld [vmem:[#allocation2 + $0x184] sm:$0xf]
    %v1208 = vld [vmem:[#allocation2 + $0x188] sm:$0x1]
    %v1209 = vld [vmem:[#allocation2 + $0x190] sm:$0xf]
    %v1210 = vld [vmem:[#allocation2 + $0x194] sm:$0x1]
    %v1211 = vld [vmem:[#allocation2 + $0x19c] sm:$0xf]
    %v1212 = vld [vmem:[#allocation2 + $0x1a0] sm:$0x1]
    %v1213 = vld [vmem:[#allocation2 + $0x1a8] sm:$0xf]
    %v1214 = vld [vmem:[#allocation2 + $0x1ac] sm:$0x1]
    %v1215 = vld [vmem:[#allocation2 + $0x1b4] sm:$0xf]
    %v1216 = vld [vmem:[#allocation2 + $0x1b8] sm:$0x1]
    %v1217 = vld [vmem:[#allocation2 + $0x1c0] sm:$0xf]
    %v1218 = vld [vmem:[#allocation2 + $0x1c4] sm:$0x1]
    %vm1219 = vsmask.f32 3328
    %vm1220 = vsmask.f32 7440
    %vm1221 = vmor %vm1219, %vm1220
    %v1223 = vshrl.u32 %v1155, 16
    %v1225 = vrot.slane %v1223, 4
    %v1226 = vshll.u32 %v1155, 16
    %v1228 = vrot.slane %v1226, 5
    %v1229 = vor.u32 %v1225, %v1228
    %v1230 = vrot.slane %v1229, 4
    %v1232 = vshll.u32 %v1156, 16
    %v1234 = vrot.slane %v1232, 5
    %v1235 = vsel %vm1221, %v1230, %v1234
    %v1237 = vshrl.u32 %v1157, 16
    %v1239 = vrot.slane %v1237, 4
    %v1240 = vshll.u32 %v1157, 16
    %v1242 = vrot.slane %v1240, 5
    %v1243 = vor.u32 %v1239, %v1242
    %v1244 = vrot.slane %v1243, 4
    %v1246 = vshll.u32 %v1158, 16
    %v1248 = vrot.slane %v1246, 5
    %v1249 = vsel %vm1221, %v1244, %v1248
    %v1251 = vshrl.u32 %v1159, 16
    %v1253 = vrot.slane %v1251, 4
    %v1254 = vshll.u32 %v1159, 16
    %v1256 = vrot.slane %v1254, 5
    %v1257 = vor.u32 %v1253, %v1256
    %v1258 = vrot.slane %v1257, 4
    %v1260 = vshll.u32 %v1160, 16
    %v1262 = vrot.slane %v1260, 5
    %v1263 = vsel %vm1221, %v1258, %v1262
    %v1265 = vshrl.u32 %v1161, 16
    %v1267 = vrot.slane %v1265, 4
    %v1268 = vshll.u32 %v1161, 16
    %v1270 = vrot.slane %v1268, 5
    %v1271 = vor.u32 %v1267, %v1270
    %v1272 = vrot.slane %v1271, 4
    %v1274 = vshll.u32 %v1162, 16
    %v1276 = vrot.slane %v1274, 5
    %v1277 = vsel %vm1221, %v1272, %v1276
    %v1279 = vshrl.u32 %v1163, 16
    %v1281 = vrot.slane %v1279, 4
    %v1282 = vshll.u32 %v1163, 16
    %v1284 = vrot.slane %v1282, 5
    %v1285 = vor.u32 %v1281, %v1284
    %v1286 = vrot.slane %v1285, 4
    %v1288 = vshll.u32 %v1164, 16
    %v1290 = vrot.slane %v1288, 5
    %v1291 = vsel %vm1221, %v1286, %v1290
    %v1293 = vshrl.u32 %v1165, 16
    %v1295 = vrot.slane %v1293, 4
    %v1296 = vshll.u32 %v1165, 16
    %v1298 = vrot.slane %v1296, 5
    %v1299 = vor.u32 %v1295, %v1298
    %v1300 = vrot.slane %v1299, 4
    %v1302 = vshll.u32 %v1166, 16
    %v1304 = vrot.slane %v1302, 5
    %v1305 = vsel %vm1221, %v1300, %v1304
    %v1307 = vshrl.u32 %v1167, 16
    %v1309 = vrot.slane %v1307, 4
    %v1310 = vshll.u32 %v1167, 16
    %v1312 = vrot.slane %v1310, 5
    %v1313 = vor.u32 %v1309, %v1312
    %v1314 = vrot.slane %v1313, 4
    %v1316 = vshll.u32 %v1168, 16
    %v1318 = vrot.slane %v1316, 5
    %v1319 = vsel %vm1221, %v1314, %v1318
    %v1321 = vshrl.u32 %v1169, 16
    %v1323 = vrot.slane %v1321, 4
    %v1324 = vshll.u32 %v1169, 16
    %v1326 = vrot.slane %v1324, 5
    %v1327 = vor.u32 %v1323, %v1326
    %v1328 = vrot.slane %v1327, 4
    %v1330 = vshll.u32 %v1170, 16
    %v1332 = vrot.slane %v1330, 5
    %v1333 = vsel %vm1221, %v1328, %v1332
    %v1335 = vshrl.u32 %v1171, 16
    %v1337 = vrot.slane %v1335, 4
    %v1338 = vshll.u32 %v1171, 16
    %v1340 = vrot.slane %v1338, 5
    %v1341 = vor.u32 %v1337, %v1340
    %v1342 = vrot.slane %v1341, 4
    %v1344 = vshll.u32 %v1172, 16
    %v1346 = vrot.slane %v1344, 5
    %v1347 = vsel %vm1221, %v1342, %v1346
    %v1349 = vshrl.u32 %v1173, 16
    %v1351 = vrot.slane %v1349, 4
    %v1352 = vshll.u32 %v1173, 16
    %v1354 = vrot.slane %v1352, 5
    %v1355 = vor.u32 %v1351, %v1354
    %v1356 = vrot.slane %v1355, 4
    %v1358 = vshll.u32 %v1174, 16
    %v1360 = vrot.slane %v1358, 5
    %v1361 = vsel %vm1221, %v1356, %v1360
    %v1363 = vshrl.u32 %v1175, 16
    %v1365 = vrot.slane %v1363, 4
    %v1366 = vshll.u32 %v1175, 16
    %v1368 = vrot.slane %v1366, 5
    %v1369 = vor.u32 %v1365, %v1368
    %v1370 = vrot.slane %v1369, 4
    %v1372 = vshll.u32 %v1176, 16
    %v1374 = vrot.slane %v1372, 5
    %v1375 = vsel %vm1221, %v1370, %v1374
    %v1377 = vshrl.u32 %v1177, 16
    %v1379 = vrot.slane %v1377, 4
    %v1380 = vshll.u32 %v1177, 16
    %v1382 = vrot.slane %v1380, 5
    %v1383 = vor.u32 %v1379, %v1382
    %v1384 = vrot.slane %v1383, 4
    %v1386 = vshll.u32 %v1178, 16
    %v1388 = vrot.slane %v1386, 5
    %v1389 = vsel %vm1221, %v1384, %v1388
    %v1391 = vshrl.u32 %v1179, 16
    %v1393 = vrot.slane %v1391, 4
    %v1394 = vshll.u32 %v1179, 16
    %v1396 = vrot.slane %v1394, 5
    %v1397 = vor.u32 %v1393, %v1396
    %v1398 = vrot.slane %v1397, 4
    %v1400 = vshll.u32 %v1180, 16
    %v1402 = vrot.slane %v1400, 5
    %v1403 = vsel %vm1221, %v1398, %v1402
    %v1405 = vshrl.u32 %v1181, 16
    %v1407 = vrot.slane %v1405, 4
    %v1408 = vshll.u32 %v1181, 16
    %v1410 = vrot.slane %v1408, 5
    %v1411 = vor.u32 %v1407, %v1410
    %v1412 = vrot.slane %v1411, 4
    %v1414 = vshll.u32 %v1182, 16
    %v1416 = vrot.slane %v1414, 5
    %v1417 = vsel %vm1221, %v1412, %v1416
    %v1419 = vshrl.u32 %v1183, 16
    %v1421 = vrot.slane %v1419, 4
    %v1422 = vshll.u32 %v1183, 16
    %v1424 = vrot.slane %v1422, 5
    %v1425 = vor.u32 %v1421, %v1424
    %v1426 = vrot.slane %v1425, 4
    %v1428 = vshll.u32 %v1184, 16
    %v1430 = vrot.slane %v1428, 5
    %v1431 = vsel %vm1221, %v1426, %v1430
    %v1433 = vshrl.u32 %v1185, 16
    %v1435 = vrot.slane %v1433, 4
    %v1436 = vshll.u32 %v1185, 16
    %v1438 = vrot.slane %v1436, 5
    %v1439 = vor.u32 %v1435, %v1438
    %v1440 = vrot.slane %v1439, 4
    %v1442 = vshll.u32 %v1186, 16
    %v1444 = vrot.slane %v1442, 5
    %v1445 = vsel %vm1221, %v1440, %v1444
    %v1447 = vshrl.u32 %v1187, 16
    %v1449 = vrot.slane %v1447, 4
    %v1450 = vshll.u32 %v1187, 16
    %v1452 = vrot.slane %v1450, 5
    %v1453 = vor.u32 %v1449, %v1452
    %v1454 = vrot.slane %v1453, 4
    %v1456 = vshll.u32 %v1188, 16
    %v1458 = vrot.slane %v1456, 5
    %v1459 = vsel %vm1221, %v1454, %v1458
    %v1461 = vshrl.u32 %v1189, 16
    %v1463 = vrot.slane %v1461, 4
    %v1464 = vshll.u32 %v1189, 16
    %v1466 = vrot.slane %v1464, 5
    %v1467 = vor.u32 %v1463, %v1466
    %v1468 = vrot.slane %v1467, 4
    %v1470 = vshll.u32 %v1190, 16
    %v1472 = vrot.slane %v1470, 5
    %v1473 = vsel %vm1221, %v1468, %v1472
    %v1475 = vshrl.u32 %v1191, 16
    %v1477 = vrot.slane %v1475, 4
    %v1478 = vshll.u32 %v1191, 16
    %v1480 = vrot.slane %v1478, 5
    %v1481 = vor.u32 %v1477, %v1480
    %v1482 = vrot.slane %v1481, 4
    %v1484 = vshll.u32 %v1192, 16
    %v1486 = vrot.slane %v1484, 5
    %v1487 = vsel %vm1221, %v1482, %v1486
    %v1489 = vshrl.u32 %v1193, 16
    %v1491 = vrot.slane %v1489, 4
    %v1492 = vshll.u32 %v1193, 16
    %v1494 = vrot.slane %v1492, 5
    %v1495 = vor.u32 %v1491, %v1494
    %v1496 = vrot.slane %v1495, 4
    %v1498 = vshll.u32 %v1194, 16
    %v1500 = vrot.slane %v1498, 5
    %v1501 = vsel %vm1221, %v1496, %v1500
    %v1503 = vshrl.u32 %v1195, 16
    %v1505 = vrot.slane %v1503, 4
    %v1506 = vshll.u32 %v1195, 16
    %v1508 = vrot.slane %v1506, 5
    %v1509 = vor.u32 %v1505, %v1508
    %v1510 = vrot.slane %v1509, 4
    %v1512 = vshll.u32 %v1196, 16
    %v1514 = vrot.slane %v1512, 5
    %v1515 = vsel %vm1221, %v1510, %v1514
    %v1517 = vshrl.u32 %v1197, 16
    %v1519 = vrot.slane %v1517, 4
    %v1520 = vshll.u32 %v1197, 16
    %v1522 = vrot.slane %v1520, 5
    %v1523 = vor.u32 %v1519, %v1522
    %v1524 = vrot.slane %v1523, 4
    %v1526 = vshll.u32 %v1198, 16
    %v1528 = vrot.slane %v1526, 5
    %v1529 = vsel %vm1221, %v1524, %v1528
    %v1531 = vshrl.u32 %v1199, 16
    %v1533 = vrot.slane %v1531, 4
    %v1534 = vshll.u32 %v1199, 16
    %v1536 = vrot.slane %v1534, 5
    %v1537 = vor.u32 %v1533, %v1536
    %v1538 = vrot.slane %v1537, 4
    %v1540 = vshll.u32 %v1200, 16
    %v1542 = vrot.slane %v1540, 5
    %v1543 = vsel %vm1221, %v1538, %v1542
    %v1545 = vshrl.u32 %v1201, 16
    %v1547 = vrot.slane %v1545, 4
    %v1548 = vshll.u32 %v1201, 16
    %v1550 = vrot.slane %v1548, 5
    %v1551 = vor.u32 %v1547, %v1550
    %v1552 = vrot.slane %v1551, 4
    %v1554 = vshll.u32 %v1202, 16
    %v1556 = vrot.slane %v1554, 5
    %v1557 = vsel %vm1221, %v1552, %v1556
    %v1559 = vshrl.u32 %v1203, 16
    %v1561 = vrot.slane %v1559, 4
    %v1562 = vshll.u32 %v1203, 16
    %v1564 = vrot.slane %v1562, 5
    %v1565 = vor.u32 %v1561, %v1564
    %v1566 = vrot.slane %v1565, 4
    %v1568 = vshll.u32 %v1204, 16
    %v1570 = vrot.slane %v1568, 5
    %v1571 = vsel %vm1221, %v1566, %v1570
    %v1573 = vshrl.u32 %v1205, 16
    %v1575 = vrot.slane %v1573, 4
    %v1576 = vshll.u32 %v1205, 16
    %v1578 = vrot.slane %v1576, 5
    %v1579 = vor.u32 %v1575, %v1578
    %v1580 = vrot.slane %v1579, 4
    %v1582 = vshll.u32 %v1206, 16
    %v1584 = vrot.slane %v1582, 5
    %v1585 = vsel %vm1221, %v1580, %v1584
    %v1587 = vshrl.u32 %v1207, 16
    %v1589 = vrot.slane %v1587, 4
    %v1590 = vshll.u32 %v1207, 16
    %v1592 = vrot.slane %v1590, 5
    %v1593 = vor.u32 %v1589, %v1592
    %v1594 = vrot.slane %v1593, 4
    %v1596 = vshll.u32 %v1208, 16
    %v1598 = vrot.slane %v1596, 5
    %v1599 = vsel %vm1221, %v1594, %v1598
    %v1601 = vshrl.u32 %v1209, 16
    %v1603 = vrot.slane %v1601, 4
    %v1604 = vshll.u32 %v1209, 16
    %v1606 = vrot.slane %v1604, 5
    %v1607 = vor.u32 %v1603, %v1606
    %v1608 = vrot.slane %v1607, 4
    %v1610 = vshll.u32 %v1210, 16
    %v1612 = vrot.slane %v1610, 5
    %v1613 = vsel %vm1221, %v1608, %v1612
    %v1615 = vshrl.u32 %v1211, 16
    %v1617 = vrot.slane %v1615, 4
    %v1618 = vshll.u32 %v1211, 16
    %v1620 = vrot.slane %v1618, 5
    %v1621 = vor.u32 %v1617, %v1620
    %v1622 = vrot.slane %v1621, 4
    %v1624 = vshll.u32 %v1212, 16
    %v1626 = vrot.slane %v1624, 5
    %v1627 = vsel %vm1221, %v1622, %v1626
    %v1629 = vshrl.u32 %v1213, 16
    %v1631 = vrot.slane %v1629, 4
    %v1632 = vshll.u32 %v1213, 16
    %v1634 = vrot.slane %v1632, 5
    %v1635 = vor.u32 %v1631, %v1634
    %v1636 = vrot.slane %v1635, 4
    %v1638 = vshll.u32 %v1214, 16
    %v1640 = vrot.slane %v1638, 5
    %v1641 = vsel %vm1221, %v1636, %v1640
    %v1643 = vshrl.u32 %v1215, 16
    %v1645 = vrot.slane %v1643, 4
    %v1646 = vshll.u32 %v1215, 16
    %v1648 = vrot.slane %v1646, 5
    %v1649 = vor.u32 %v1645, %v1648
    %v1650 = vrot.slane %v1649, 4
    %v1652 = vshll.u32 %v1216, 16
    %v1654 = vrot.slane %v1652, 5
    %v1655 = vsel %vm1221, %v1650, %v1654
    %v1657 = vshrl.u32 %v1217, 16
    %v1659 = vrot.slane %v1657, 4
    %v1660 = vshll.u32 %v1217, 16
    %v1662 = vrot.slane %v1660, 5
    %v1663 = vor.u32 %v1659, %v1662
    %v1664 = vrot.slane %v1663, 4
    %v1666 = vshll.u32 %v1218, 16
    %v1668 = vrot.slane %v1666, 5
    %v1669 = vsel %vm1221, %v1664, %v1668
    %s1670 = scalar_lea.vmem [#allocation6], 128
    %v1671 = vld [vmem:[%s1670] sm:$0xf]
    %v1672 = vld [vmem:[%s1670 + $0x4] sm:$0xf]
    %v1673 = vld [vmem:[%s1670 + $0x8] sm:$0xf]
    %v1674 = vld [vmem:[%s1670 + $0xc] sm:$0xf]
    %v1675 = vld [vmem:[%s1670 + $0x10] sm:$0xf]
    %v1676 = vld [vmem:[%s1670 + $0x14] sm:$0xf]
    %v1677 = vld [vmem:[%s1670 + $0x18] sm:$0xf]
    %v1678 = vld [vmem:[%s1670 + $0x1c] sm:$0xf]
    %v1679 = vld [vmem:[%s1670 + $0x20] sm:$0xf]
    %v1680 = vld [vmem:[%s1670 + $0x24] sm:$0xf]
    %v1681 = vld [vmem:[%s1670 + $0x28] sm:$0xf]
    %v1682 = vld [vmem:[%s1670 + $0x2c] sm:$0xf]
    %v1683 = vld [vmem:[%s1670 + $0x30] sm:$0xf]
    %v1684 = vld [vmem:[%s1670 + $0x34] sm:$0xf]
    %v1685 = vld [vmem:[%s1670 + $0x38] sm:$0xf]
    %v1686 = vld [vmem:[%s1670 + $0x3c] sm:$0xf]
    %v1687 = vunpack.c.l.b16 %v1235
    %v1688 = vunpack.c.l.b16 %v1249
    %v1689 = vunpack.c.l.b16 %v1263
    %v1690 = vunpack.c.l.b16 %v1277
    %v1691 = vunpack.c.l.b16 %v1291
    %v1692 = vunpack.c.l.b16 %v1305
    %v1693 = vunpack.c.l.b16 %v1319
    %v1694 = vunpack.c.l.b16 %v1333
    %v1695 = vunpack.c.l.b16 %v1347
    %v1696 = vunpack.c.l.b16 %v1361
    %v1697 = vunpack.c.l.b16 %v1375
    %v1698 = vunpack.c.l.b16 %v1389
    %v1699 = vunpack.c.l.b16 %v1403
    %v1700 = vunpack.c.l.b16 %v1417
    %v1701 = vunpack.c.l.b16 %v1431
    %v1702 = vunpack.c.l.b16 %v1445
    %v1703 = vunpack.c.l.b16 %v1459
    %v1704 = vunpack.c.l.b16 %v1473
    %v1705 = vunpack.c.l.b16 %v1487
    %v1706 = vunpack.c.l.b16 %v1501
    %v1707 = vunpack.c.l.b16 %v1515
    %v1708 = vunpack.c.l.b16 %v1529
    %v1709 = vunpack.c.l.b16 %v1543
    %v1710 = vunpack.c.l.b16 %v1557
    %v1711 = vunpack.c.l.b16 %v1571
    %v1712 = vunpack.c.l.b16 %v1585
    %v1713 = vunpack.c.l.b16 %v1599
    %v1714 = vunpack.c.l.b16 %v1613
    %v1715 = vunpack.c.l.b16 %v1627
    %v1716 = vunpack.c.l.b16 %v1641
    %v1717 = vunpack.c.l.b16 %v1655
    %v1718 = vunpack.c.l.b16 %v1669
    %v1719 = vpack.c.b16 %v1688, %v1687
    %v1720 = vpack.c.b16 %v1690, %v1689
    %v1721 = vpack.c.b16 %v1692, %v1691
    %v1722 = vpack.c.b16 %v1694, %v1693
    %v1723 = vpack.c.b16 %v1696, %v1695
    %v1724 = vpack.c.b16 %v1698, %v1697
    %v1725 = vpack.c.b16 %v1700, %v1699
    %v1726 = vpack.c.b16 %v1702, %v1701
    %v1727 = vpack.c.b16 %v1704, %v1703
    %v1728 = vpack.c.b16 %v1706, %v1705
    %v1729 = vpack.c.b16 %v1708, %v1707
    %v1730 = vpack.c.b16 %v1710, %v1709
    %v1731 = vpack.c.b16 %v1712, %v1711
    %v1732 = vpack.c.b16 %v1714, %v1713
    %v1733 = vpack.c.b16 %v1716, %v1715
    %v1734 = vpack.c.b16 %v1718, %v1717
    %v1767 = vunpack.c.l.b16 %v1671
    %v1768 = vunpack.c.l.b16 %v1672
    %v1769 = vunpack.c.l.b16 %v1673
    %v1770 = vunpack.c.l.b16 %v1674
    %v1771 = vunpack.c.l.b16 %v1675
    %v1772 = vunpack.c.l.b16 %v1676
    %v1773 = vunpack.c.l.b16 %v1677
    %v1774 = vunpack.c.l.b16 %v1678
    %v1775 = vunpack.c.l.b16 %v1679
    %v1776 = vunpack.c.l.b16 %v1680
    %v1777 = vunpack.c.l.b16 %v1681
    %v1778 = vunpack.c.l.b16 %v1682
    %v1779 = vunpack.c.l.b16 %v1683
    %v1780 = vunpack.c.l.b16 %v1684
    %v1781 = vunpack.c.l.b16 %v1685
    %v1782 = vunpack.c.l.b16 %v1686
    %v1783 = vpack.c.b16 %v1768, %v1767
    %v1784 = vpack.c.b16 %v1770, %v1769
    %v1785 = vpack.c.b16 %v1772, %v1771
    %v1786 = vpack.c.b16 %v1774, %v1773
    %v1787 = vpack.c.b16 %v1776, %v1775
    %v1788 = vpack.c.b16 %v1778, %v1777
    %v1789 = vpack.c.b16 %v1780, %v1779
    %v1790 = vpack.c.b16 %v1782, %v1781
    %1799 = vmatpush.bf16.msra.mxu0 %v1790
    %1800 = vmatpush.bf16.msra.mxu0 %v1789
    %1801 = vmatpush.bf16.msra.mxu0 %v1788
    %1802 = vmatpush.bf16.msra.mxu0 %v1787
    %1803 = vmatpush.bf16.msra.mxu0 %v1786
    %1804 = vmatpush.bf16.msra.mxu0 %v1785
    %1805 = vmatpush.bf16.msra.mxu0 %v1784
    %1806 = vmatpush.bf16.msra.mxu0 %v1783
    %1807 = vmatmul.bf16.gmra.mxu0 %v1719
    %v1808 = vpop.f32.mrf.mxu0
    %v1809 = vadd.f32 0.0, %v1808
    %v1810 = vpop.f32.mrf.mxu0
    %v1811 = vadd.f32 0.0, %v1810
    %1812 = vmatmul.bf16.gmra.mxu0 %v1720
    %v1813 = vpop.f32.mrf.mxu0
    %v1814 = vadd.f32 0.0, %v1813
    %v1815 = vpop.f32.mrf.mxu0
    %v1816 = vadd.f32 0.0, %v1815
    %1817 = vmatmul.bf16.gmra.mxu0 %v1721
    %v1818 = vpop.f32.mrf.mxu0
    %v1819 = vadd.f32 0.0, %v1818
    %v1820 = vpop.f32.mrf.mxu0
    %v1821 = vadd.f32 0.0, %v1820
    %1822 = vmatmul.bf16.gmra.mxu0 %v1722
    %v1823 = vpop.f32.mrf.mxu0
    %v1824 = vadd.f32 0.0, %v1823
    %v1825 = vpop.f32.mrf.mxu0
    %v1826 = vadd.f32 0.0, %v1825
    %1827 = vmatmul.bf16.gmra.mxu0 %v1723
    %v1828 = vpop.f32.mrf.mxu0
    %v1829 = vadd.f32 0.0, %v1828
    %v1830 = vpop.f32.mrf.mxu0
    %v1831 = vadd.f32 0.0, %v1830
    %1832 = vmatmul.bf16.gmra.mxu0 %v1724
    %v1833 = vpop.f32.mrf.mxu0
    %v1834 = vadd.f32 0.0, %v1833
    %v1835 = vpop.f32.mrf.mxu0
    %v1836 = vadd.f32 0.0, %v1835
    %1837 = vmatmul.bf16.gmra.mxu0 %v1725
    %v1838 = vpop.f32.mrf.mxu0
    %v1839 = vadd.f32 0.0, %v1838
    %v1840 = vpop.f32.mrf.mxu0
    %v1841 = vadd.f32 0.0, %v1840
    %1842 = vmatmul.bf16.gmra.mxu0 %v1726
    %v1843 = vpop.f32.mrf.mxu0
    %v1844 = vadd.f32 0.0, %v1843
    %v1845 = vpop.f32.mrf.mxu0
    %v1846 = vadd.f32 0.0, %v1845
    %1847 = vmatmul.bf16.gmra.mxu0 %v1727
    %v1848 = vpop.f32.mrf.mxu0
    %v1849 = vadd.f32 0.0, %v1848
    %v1850 = vpop.f32.mrf.mxu0
    %v1851 = vadd.f32 0.0, %v1850
    %1852 = vmatmul.bf16.gmra.mxu0 %v1728
    %v1853 = vpop.f32.mrf.mxu0
    %v1854 = vadd.f32 0.0, %v1853
    %v1855 = vpop.f32.mrf.mxu0
    %v1856 = vadd.f32 0.0, %v1855
    %1857 = vmatmul.bf16.gmra.mxu0 %v1729
    %v1858 = vpop.f32.mrf.mxu0
    %v1859 = vadd.f32 0.0, %v1858
    %v1860 = vpop.f32.mrf.mxu0
    %v1861 = vadd.f32 0.0, %v1860
    %1862 = vmatmul.bf16.gmra.mxu0 %v1730
    %v1863 = vpop.f32.mrf.mxu0
    %v1864 = vadd.f32 0.0, %v1863
    %v1865 = vpop.f32.mrf.mxu0
    %v1866 = vadd.f32 0.0, %v1865
    %1867 = vmatmul.bf16.gmra.mxu0 %v1731
    %v1868 = vpop.f32.mrf.mxu0
    %v1869 = vadd.f32 0.0, %v1868
    %v1870 = vpop.f32.mrf.mxu0
    %v1871 = vadd.f32 0.0, %v1870
    %1872 = vmatmul.bf16.gmra.mxu0 %v1732
    %v1873 = vpop.f32.mrf.mxu0
    %v1874 = vadd.f32 0.0, %v1873
    %v1875 = vpop.f32.mrf.mxu0
    %v1876 = vadd.f32 0.0, %v1875
    %1877 = vmatmul.bf16.gmra.mxu0 %v1733
    %v1878 = vpop.f32.mrf.mxu0
    %v1879 = vadd.f32 0.0, %v1878
    %v1880 = vpop.f32.mrf.mxu0
    %v1881 = vadd.f32 0.0, %v1880
    %1882 = vmatmul.bf16.gmra.mxu0 %v1734
    %v1883 = vpop.f32.mrf.mxu0
    %v1884 = vadd.f32 0.0, %v1883
    %v1885 = vpop.f32.mrf.mxu0
    %v1886 = vadd.f32 0.0, %v1885
    %1887 = vdwg.mxu0
    %v1888 = vadd.f32 %v1076, %v1809
    %v1889 = vadd.f32 %v1078, %v1811
    %v1890 = vadd.f32 %v1081, %v1814
    %v1891 = vadd.f32 %v1083, %v1816
    %v1892 = vadd.f32 %v1086, %v1819
    %v1893 = vadd.f32 %v1088, %v1821
    %v1894 = vadd.f32 %v1091, %v1824
    %v1895 = vadd.f32 %v1093, %v1826
    %v1896 = vadd.f32 %v1096, %v1829
    %v1897 = vadd.f32 %v1098, %v1831
    %v1898 = vadd.f32 %v1101, %v1834
    %v1899 = vadd.f32 %v1103, %v1836
    %v1900 = vadd.f32 %v1106, %v1839
    %v1901 = vadd.f32 %v1108, %v1841
    %v1902 = vadd.f32 %v1111, %v1844
    %v1903 = vadd.f32 %v1113, %v1846
    %v1904 = vadd.f32 %v1116, %v1849
    %v1905 = vadd.f32 %v1118, %v1851
    %v1906 = vadd.f32 %v1121, %v1854
    %v1907 = vadd.f32 %v1123, %v1856
    %v1908 = vadd.f32 %v1126, %v1859
    %v1909 = vadd.f32 %v1128, %v1861
    %v1910 = vadd.f32 %v1131, %v1864
    %v1911 = vadd.f32 %v1133, %v1866
    %v1912 = vadd.f32 %v1136, %v1869
    %v1913 = vadd.f32 %v1138, %v1871
    %v1914 = vadd.f32 %v1141, %v1874
    %v1915 = vadd.f32 %v1143, %v1876
    %v1916 = vadd.f32 %v1146, %v1879
    %v1917 = vadd.f32 %v1148, %v1881
    %v1918 = vadd.f32 %v1151, %v1884
    %v1919 = vadd.f32 %v1153, %v1886
    %v1920 = vld [vmem:[%s76] sm:$0x8]
    %v1921 = vld [vmem:[%s76 + $0x4] sm:$0xf]
    %v1922 = vld [vmem:[%s76 + $0xc] sm:$0x8]
    %v1923 = vld [vmem:[%s76 + $0x10] sm:$0xf]
    %v1924 = vld [vmem:[%s76 + $0x18] sm:$0x8]
    %v1925 = vld [vmem:[%s76 + $0x1c] sm:$0xf]
    %v1926 = vld [vmem:[%s76 + $0x24] sm:$0x8]
    %v1927 = vld [vmem:[%s76 + $0x28] sm:$0xf]
    %v1928 = vld [vmem:[%s76 + $0x30] sm:$0x8]
    %v1929 = vld [vmem:[%s76 + $0x34] sm:$0xf]
    %v1930 = vld [vmem:[%s76 + $0x3c] sm:$0x8]
    %v1931 = vld [vmem:[%s76 + $0x40] sm:$0xf]
    %v1932 = vld [vmem:[%s76 + $0x48] sm:$0x8]
    %v1933 = vld [vmem:[%s76 + $0x4c] sm:$0xf]
    %v1934 = vld [vmem:[%s76 + $0x54] sm:$0x8]
    %v1935 = vld [vmem:[%s76 + $0x58] sm:$0xf]
    %v1936 = vld [vmem:[%s76 + $0x78] sm:$0x8]
    %v1937 = vld [vmem:[%s76 + $0x7c] sm:$0xf]
    %v1938 = vld [vmem:[%s76 + $0x84] sm:$0x8]
    %v1939 = vld [vmem:[%s76 + $0x88] sm:$0xf]
    %v1940 = vld [vmem:[%s76 + $0x90] sm:$0x8]
    %v1941 = vld [vmem:[%s76 + $0x94] sm:$0xf]
    %v1942 = vld [vmem:[%s76 + $0x9c] sm:$0x8]
    %v1943 = vld [vmem:[%s76 + $0xa0] sm:$0xf]
    %v1944 = vld [vmem:[%s76 + $0xa8] sm:$0x8]
    %v1945 = vld [vmem:[%s76 + $0xac] sm:$0xf]
    %v1946 = vld [vmem:[%s76 + $0xb4] sm:$0x8]
    %v1947 = vld [vmem:[%s76 + $0xb8] sm:$0xf]
    %v1948 = vld [vmem:[%s76 + $0xc0] sm:$0x8]
    %v1949 = vld [vmem:[%s76 + $0xc4] sm:$0xf]
    %v1950 = vld [vmem:[%s76 + $0xcc] sm:$0x8]
    %v1951 = vld [vmem:[%s76 + $0xd0] sm:$0xf]
    %v1952 = vld [vmem:[%s76 + $0xf0] sm:$0x8]
    %v1953 = vld [vmem:[%s76 + $0xf4] sm:$0xf]
    %v1954 = vld [vmem:[%s76 + $0xfc] sm:$0x8]
    %v1955 = vld [vmem:[%s76 + $0x100] sm:$0xf]
    %v1956 = vld [vmem:[%s76 + $0x108] sm:$0x8]
    %v1957 = vld [vmem:[%s76 + $0x10c] sm:$0xf]
    %v1958 = vld [vmem:[%s76 + $0x114] sm:$0x8]
    %v1959 = vld [vmem:[%s76 + $0x118] sm:$0xf]
    %v1960 = vld [vmem:[%s76 + $0x120] sm:$0x8]
    %v1961 = vld [vmem:[%s76 + $0x124] sm:$0xf]
    %v1962 = vld [vmem:[%s76 + $0x12c] sm:$0x8]
    %v1963 = vld [vmem:[%s76 + $0x130] sm:$0xf]
    %v1964 = vld [vmem:[%s76 + $0x138] sm:$0x8]
    %v1965 = vld [vmem:[%s76 + $0x13c] sm:$0xf]
    %v1966 = vld [vmem:[%s76 + $0x144] sm:$0x8]
    %v1967 = vld [vmem:[%s76 + $0x148] sm:$0xf]
    %v1968 = vld [vmem:[%s76 + $0x168] sm:$0x8]
    %v1969 = vld [vmem:[%s76 + $0x16c] sm:$0xf]
    %v1970 = vld [vmem:[%s76 + $0x174] sm:$0x8]
    %v1971 = vld [vmem:[%s76 + $0x178] sm:$0xf]
    %v1972 = vld [vmem:[%s76 + $0x180] sm:$0x8]
    %v1973 = vld [vmem:[%s76 + $0x184] sm:$0xf]
    %v1974 = vld [vmem:[%s76 + $0x18c] sm:$0x8]
    %v1975 = vld [vmem:[%s76 + $0x190] sm:$0xf]
    %v1976 = vld [vmem:[%s76 + $0x198] sm:$0x8]
    %v1977 = vld [vmem:[%s76 + $0x19c] sm:$0xf]
    %v1978 = vld [vmem:[%s76 + $0x1a4] sm:$0x8]
    %v1979 = vld [vmem:[%s76 + $0x1a8] sm:$0xf]
    %v1980 = vld [vmem:[%s76 + $0x1b0] sm:$0x8]
    %v1981 = vld [vmem:[%s76 + $0x1b4] sm:$0xf]
    %v1982 = vld [vmem:[%s76 + $0x1bc] sm:$0x8]
    %v1983 = vld [vmem:[%s76 + $0x1c0] sm:$0xf]
    %v1985 = vshrl.u32 %v1920, 16
    %v1987 = vrot.slane %v1985, 7
    %v1988 = vrot.slane %v1987, 4
    %v1990 = vshrl.u32 %v1921, 16
    %v1992 = vrot.slane %v1990, 7
    %v1993 = vshll.u32 %v1921, 16
    %v1995 = vor.u32 %v1992, %v1993
    %v1996 = vsel %vm271, %v1988, %v1995
    %v1998 = vshrl.u32 %v1922, 16
    %v2000 = vrot.slane %v1998, 7
    %v2001 = vrot.slane %v2000, 4
    %v2003 = vshrl.u32 %v1923, 16
    %v2005 = vrot.slane %v2003, 7
    %v2006 = vshll.u32 %v1923, 16
    %v2008 = vor.u32 %v2005, %v2006
    %v2009 = vsel %vm271, %v2001, %v2008
    %v2011 = vshrl.u32 %v1924, 16
    %v2013 = vrot.slane %v2011, 7
    %v2014 = vrot.slane %v2013, 4
    %v2016 = vshrl.u32 %v1925, 16
    %v2018 = vrot.slane %v2016, 7
    %v2019 = vshll.u32 %v1925, 16
    %v2021 = vor.u32 %v2018, %v2019
    %v2022 = vsel %vm271, %v2014, %v2021
    %v2024 = vshrl.u32 %v1926, 16
    %v2026 = vrot.slane %v2024, 7
    %v2027 = vrot.slane %v2026, 4
    %v2029 = vshrl.u32 %v1927, 16
    %v2031 = vrot.slane %v2029, 7
    %v2032 = vshll.u32 %v1927, 16
    %v2034 = vor.u32 %v2031, %v2032
    %v2035 = vsel %vm271, %v2027, %v2034
    %v2037 = vshrl.u32 %v1928, 16
    %v2039 = vrot.slane %v2037, 7
    %v2040 = vrot.slane %v2039, 4
    %v2042 = vshrl.u32 %v1929, 16
    %v2044 = vrot.slane %v2042, 7
    %v2045 = vshll.u32 %v1929, 16
    %v2047 = vor.u32 %v2044, %v2045
    %v2048 = vsel %vm271, %v2040, %v2047
    %v2050 = vshrl.u32 %v1930, 16
    %v2052 = vrot.slane %v2050, 7
    %v2053 = vrot.slane %v2052, 4
    %v2055 = vshrl.u32 %v1931, 16
    %v2057 = vrot.slane %v2055, 7
    %v2058 = vshll.u32 %v1931, 16
    %v2060 = vor.u32 %v2057, %v2058
    %v2061 = vsel %vm271, %v2053, %v2060
    %v2063 = vshrl.u32 %v1932, 16
    %v2065 = vrot.slane %v2063, 7
    %v2066 = vrot.slane %v2065, 4
    %v2068 = vshrl.u32 %v1933, 16
    %v2070 = vrot.slane %v2068, 7
    %v2071 = vshll.u32 %v1933, 16
    %v2073 = vor.u32 %v2070, %v2071
    %v2074 = vsel %vm271, %v2066, %v2073
    %v2076 = vshrl.u32 %v1934, 16
    %v2078 = vrot.slane %v2076, 7
    %v2079 = vrot.slane %v2078, 4
    %v2081 = vshrl.u32 %v1935, 16
    %v2083 = vrot.slane %v2081, 7
    %v2084 = vshll.u32 %v1935, 16
    %v2086 = vor.u32 %v2083, %v2084
    %v2087 = vsel %vm271, %v2079, %v2086
    %v2089 = vshrl.u32 %v1936, 16
    %v2091 = vrot.slane %v2089, 7
    %v2092 = vrot.slane %v2091, 4
    %v2094 = vshrl.u32 %v1937, 16
    %v2096 = vrot.slane %v2094, 7
    %v2097 = vshll.u32 %v1937, 16
    %v2099 = vor.u32 %v2096, %v2097
    %v2100 = vsel %vm271, %v2092, %v2099
    %v2102 = vshrl.u32 %v1938, 16
    %v2104 = vrot.slane %v2102, 7
    %v2105 = vrot.slane %v2104, 4
    %v2107 = vshrl.u32 %v1939, 16
    %v2109 = vrot.slane %v2107, 7
    %v2110 = vshll.u32 %v1939, 16
    %v2112 = vor.u32 %v2109, %v2110
    %v2113 = vsel %vm271, %v2105, %v2112
    %v2115 = vshrl.u32 %v1940, 16
    %v2117 = vrot.slane %v2115, 7
    %v2118 = vrot.slane %v2117, 4
    %v2120 = vshrl.u32 %v1941, 16
    %v2122 = vrot.slane %v2120, 7
    %v2123 = vshll.u32 %v1941, 16
    %v2125 = vor.u32 %v2122, %v2123
    %v2126 = vsel %vm271, %v2118, %v2125
    %v2128 = vshrl.u32 %v1942, 16
    %v2130 = vrot.slane %v2128, 7
    %v2131 = vrot.slane %v2130, 4
    %v2133 = vshrl.u32 %v1943, 16
    %v2135 = vrot.slane %v2133, 7
    %v2136 = vshll.u32 %v1943, 16
    %v2138 = vor.u32 %v2135, %v2136
    %v2139 = vsel %vm271, %v2131, %v2138
    %v2141 = vshrl.u32 %v1944, 16
    %v2143 = vrot.slane %v2141, 7
    %v2144 = vrot.slane %v2143, 4
    %v2146 = vshrl.u32 %v1945, 16
    %v2148 = vrot.slane %v2146, 7
    %v2149 = vshll.u32 %v1945, 16
    %v2151 = vor.u32 %v2148, %v2149
    %v2152 = vsel %vm271, %v2144, %v2151
    %v2154 = vshrl.u32 %v1946, 16
    %v2156 = vrot.slane %v2154, 7
    %v2157 = vrot.slane %v2156, 4
    %v2159 = vshrl.u32 %v1947, 16
    %v2161 = vrot.slane %v2159, 7
    %v2162 = vshll.u32 %v1947, 16
    %v2164 = vor.u32 %v2161, %v2162
    %v2165 = vsel %vm271, %v2157, %v2164
    %v2167 = vshrl.u32 %v1948, 16
    %v2169 = vrot.slane %v2167, 7
    %v2170 = vrot.slane %v2169, 4
    %v2172 = vshrl.u32 %v1949, 16
    %v2174 = vrot.slane %v2172, 7
    %v2175 = vshll.u32 %v1949, 16
    %v2177 = vor.u32 %v2174, %v2175
    %v2178 = vsel %vm271, %v2170, %v2177
    %v2180 = vshrl.u32 %v1950, 16
    %v2182 = vrot.slane %v2180, 7
    %v2183 = vrot.slane %v2182, 4
    %v2185 = vshrl.u32 %v1951, 16
    %v2187 = vrot.slane %v2185, 7
    %v2188 = vshll.u32 %v1951, 16
    %v2190 = vor.u32 %v2187, %v2188
    %v2191 = vsel %vm271, %v2183, %v2190
    %v2193 = vshrl.u32 %v1952, 16
    %v2195 = vrot.slane %v2193, 7
    %v2196 = vrot.slane %v2195, 4
    %v2198 = vshrl.u32 %v1953, 16
    %v2200 = vrot.slane %v2198, 7
    %v2201 = vshll.u32 %v1953, 16
    %v2203 = vor.u32 %v2200, %v2201
    %v2204 = vsel %vm271, %v2196, %v2203
    %v2206 = vshrl.u32 %v1954, 16
    %v2208 = vrot.slane %v2206, 7
    %v2209 = vrot.slane %v2208, 4
    %v2211 = vshrl.u32 %v1955, 16
    %v2213 = vrot.slane %v2211, 7
    %v2214 = vshll.u32 %v1955, 16
    %v2216 = vor.u32 %v2213, %v2214
    %v2217 = vsel %vm271, %v2209, %v2216
    %v2219 = vshrl.u32 %v1956, 16
    %v2221 = vrot.slane %v2219, 7
    %v2222 = vrot.slane %v2221, 4
    %v2224 = vshrl.u32 %v1957, 16
    %v2226 = vrot.slane %v2224, 7
    %v2227 = vshll.u32 %v1957, 16
    %v2229 = vor.u32 %v2226, %v2227
    %v2230 = vsel %vm271, %v2222, %v2229
    %v2232 = vshrl.u32 %v1958, 16
    %v2234 = vrot.slane %v2232, 7
    %v2235 = vrot.slane %v2234, 4
    %v2237 = vshrl.u32 %v1959, 16
    %v2239 = vrot.slane %v2237, 7
    %v2240 = vshll.u32 %v1959, 16
    %v2242 = vor.u32 %v2239, %v2240
    %v2243 = vsel %vm271, %v2235, %v2242
    %v2245 = vshrl.u32 %v1960, 16
    %v2247 = vrot.slane %v2245, 7
    %v2248 = vrot.slane %v2247, 4
    %v2250 = vshrl.u32 %v1961, 16
    %v2252 = vrot.slane %v2250, 7
    %v2253 = vshll.u32 %v1961, 16
    %v2255 = vor.u32 %v2252, %v2253
    %v2256 = vsel %vm271, %v2248, %v2255
    %v2258 = vshrl.u32 %v1962, 16
    %v2260 = vrot.slane %v2258, 7
    %v2261 = vrot.slane %v2260, 4
    %v2263 = vshrl.u32 %v1963, 16
    %v2265 = vrot.slane %v2263, 7
    %v2266 = vshll.u32 %v1963, 16
    %v2268 = vor.u32 %v2265, %v2266
    %v2269 = vsel %vm271, %v2261, %v2268
    %v2271 = vshrl.u32 %v1964, 16
    %v2273 = vrot.slane %v2271, 7
    %v2274 = vrot.slane %v2273, 4
    %v2276 = vshrl.u32 %v1965, 16
    %v2278 = vrot.slane %v2276, 7
    %v2279 = vshll.u32 %v1965, 16
    %v2281 = vor.u32 %v2278, %v2279
    %v2282 = vsel %vm271, %v2274, %v2281
    %v2284 = vshrl.u32 %v1966, 16
    %v2286 = vrot.slane %v2284, 7
    %v2287 = vrot.slane %v2286, 4
    %v2289 = vshrl.u32 %v1967, 16
    %v2291 = vrot.slane %v2289, 7
    %v2292 = vshll.u32 %v1967, 16
    %v2294 = vor.u32 %v2291, %v2292
    %v2295 = vsel %vm271, %v2287, %v2294
    %v2297 = vshrl.u32 %v1968, 16
    %v2299 = vrot.slane %v2297, 7
    %v2300 = vrot.slane %v2299, 4
    %v2302 = vshrl.u32 %v1969, 16
    %v2304 = vrot.slane %v2302, 7
    %v2305 = vshll.u32 %v1969, 16
    %v2307 = vor.u32 %v2304, %v2305
    %v2308 = vsel %vm271, %v2300, %v2307
    %v2310 = vshrl.u32 %v1970, 16
    %v2312 = vrot.slane %v2310, 7
    %v2313 = vrot.slane %v2312, 4
    %v2315 = vshrl.u32 %v1971, 16
    %v2317 = vrot.slane %v2315, 7
    %v2318 = vshll.u32 %v1971, 16
    %v2320 = vor.u32 %v2317, %v2318
    %v2321 = vsel %vm271, %v2313, %v2320
    %v2323 = vshrl.u32 %v1972, 16
    %v2325 = vrot.slane %v2323, 7
    %v2326 = vrot.slane %v2325, 4
    %v2328 = vshrl.u32 %v1973, 16
    %v2330 = vrot.slane %v2328, 7
    %v2331 = vshll.u32 %v1973, 16
    %v2333 = vor.u32 %v2330, %v2331
    %v2334 = vsel %vm271, %v2326, %v2333
    %v2336 = vshrl.u32 %v1974, 16
    %v2338 = vrot.slane %v2336, 7
    %v2339 = vrot.slane %v2338, 4
    %v2341 = vshrl.u32 %v1975, 16
    %v2343 = vrot.slane %v2341, 7
    %v2344 = vshll.u32 %v1975, 16
    %v2346 = vor.u32 %v2343, %v2344
    %v2347 = vsel %vm271, %v2339, %v2346
    %v2349 = vshrl.u32 %v1976, 16
    %v2351 = vrot.slane %v2349, 7
    %v2352 = vrot.slane %v2351, 4
    %v2354 = vshrl.u32 %v1977, 16
    %v2356 = vrot.slane %v2354, 7
    %v2357 = vshll.u32 %v1977, 16
    %v2359 = vor.u32 %v2356, %v2357
    %v2360 = vsel %vm271, %v2352, %v2359
    %v2362 = vshrl.u32 %v1978, 16
    %v2364 = vrot.slane %v2362, 7
    %v2365 = vrot.slane %v2364, 4
    %v2367 = vshrl.u32 %v1979, 16
    %v2369 = vrot.slane %v2367, 7
    %v2370 = vshll.u32 %v1979, 16
    %v2372 = vor.u32 %v2369, %v2370
    %v2373 = vsel %vm271, %v2365, %v2372
    %v2375 = vshrl.u32 %v1980, 16
    %v2377 = vrot.slane %v2375, 7
    %v2378 = vrot.slane %v2377, 4
    %v2380 = vshrl.u32 %v1981, 16
    %v2382 = vrot.slane %v2380, 7
    %v2383 = vshll.u32 %v1981, 16
    %v2385 = vor.u32 %v2382, %v2383
    %v2386 = vsel %vm271, %v2378, %v2385
    %v2388 = vshrl.u32 %v1982, 16
    %v2390 = vrot.slane %v2388, 7
    %v2391 = vrot.slane %v2390, 4
    %v2393 = vshrl.u32 %v1983, 16
    %v2395 = vrot.slane %v2393, 7
    %v2396 = vshll.u32 %v1983, 16
    %v2398 = vor.u32 %v2395, %v2396
    %v2399 = vsel %vm271, %v2391, %v2398
    %s2400 = scalar_lea.vmem [#allocation6], 192
    %v2401 = vld [vmem:[%s2400] sm:$0xf]
    %v2402 = vld [vmem:[%s2400 + $0x4] sm:$0xf]
    %v2403 = vld [vmem:[%s2400 + $0x8] sm:$0xf]
    %v2404 = vld [vmem:[%s2400 + $0xc] sm:$0xf]
    %v2405 = vld [vmem:[%s2400 + $0x10] sm:$0xf]
    %v2406 = vld [vmem:[%s2400 + $0x14] sm:$0xf]
    %v2407 = vld [vmem:[%s2400 + $0x18] sm:$0xf]
    %v2408 = vld [vmem:[%s2400 + $0x1c] sm:$0xf]
    %v2409 = vld [vmem:[%s2400 + $0x20] sm:$0xf]
    %v2410 = vld [vmem:[%s2400 + $0x24] sm:$0xf]
    %v2411 = vld [vmem:[%s2400 + $0x28] sm:$0xf]
    %v2412 = vld [vmem:[%s2400 + $0x2c] sm:$0xf]
    %v2413 = vld [vmem:[%s2400 + $0x30] sm:$0xf]
    %v2414 = vld [vmem:[%s2400 + $0x34] sm:$0xf]
    %v2415 = vld [vmem:[%s2400 + $0x38] sm:$0xf]
    %v2416 = vld [vmem:[%s2400 + $0x3c] sm:$0xf]
    %v2417 = vunpack.c.l.b16 %v1996
    %v2418 = vunpack.c.l.b16 %v2009
    %v2419 = vunpack.c.l.b16 %v2022
    %v2420 = vunpack.c.l.b16 %v2035
    %v2421 = vunpack.c.l.b16 %v2048
    %v2422 = vunpack.c.l.b16 %v2061
    %v2423 = vunpack.c.l.b16 %v2074
    %v2424 = vunpack.c.l.b16 %v2087
    %v2425 = vunpack.c.l.b16 %v2100
    %v2426 = vunpack.c.l.b16 %v2113
    %v2427 = vunpack.c.l.b16 %v2126
    %v2428 = vunpack.c.l.b16 %v2139
    %v2429 = vunpack.c.l.b16 %v2152
    %v2430 = vunpack.c.l.b16 %v2165
    %v2431 = vunpack.c.l.b16 %v2178
    %v2432 = vunpack.c.l.b16 %v2191
    %v2433 = vunpack.c.l.b16 %v2204
    %v2434 = vunpack.c.l.b16 %v2217
    %v2435 = vunpack.c.l.b16 %v2230
    %v2436 = vunpack.c.l.b16 %v2243
    %v2437 = vunpack.c.l.b16 %v2256
    %v2438 = vunpack.c.l.b16 %v2269
    %v2439 = vunpack.c.l.b16 %v2282
    %v2440 = vunpack.c.l.b16 %v2295
    %v2441 = vunpack.c.l.b16 %v2308
    %v2442 = vunpack.c.l.b16 %v2321
    %v2443 = vunpack.c.l.b16 %v2334
    %v2444 = vunpack.c.l.b16 %v2347
    %v2445 = vunpack.c.l.b16 %v2360
    %v2446 = vunpack.c.l.b16 %v2373
    %v2447 = vunpack.c.l.b16 %v2386
    %v2448 = vunpack.c.l.b16 %v2399
    %v2449 = vpack.c.b16 %v2418, %v2417
    %v2450 = vpack.c.b16 %v2420, %v2419
    %v2451 = vpack.c.b16 %v2422, %v2421
    %v2452 = vpack.c.b16 %v2424, %v2423
    %v2453 = vpack.c.b16 %v2426, %v2425
    %v2454 = vpack.c.b16 %v2428, %v2427
    %v2455 = vpack.c.b16 %v2430, %v2429
    %v2456 = vpack.c.b16 %v2432, %v2431
    %v2457 = vpack.c.b16 %v2434, %v2433
    %v2458 = vpack.c.b16 %v2436, %v2435
    %v2459 = vpack.c.b16 %v2438, %v2437
    %v2460 = vpack.c.b16 %v2440, %v2439
    %v2461 = vpack.c.b16 %v2442, %v2441
    %v2462 = vpack.c.b16 %v2444, %v2443
    %v2463 = vpack.c.b16 %v2446, %v2445
    %v2464 = vpack.c.b16 %v2448, %v2447
    %v2497 = vunpack.c.l.b16 %v2401
    %v2498 = vunpack.c.l.b16 %v2402
    %v2499 = vunpack.c.l.b16 %v2403
    %v2500 = vunpack.c.l.b16 %v2404
    %v2501 = vunpack.c.l.b16 %v2405
    %v2502 = vunpack.c.l.b16 %v2406
    %v2503 = vunpack.c.l.b16 %v2407
    %v2504 = vunpack.c.l.b16 %v2408
    %v2505 = vunpack.c.l.b16 %v2409
    %v2506 = vunpack.c.l.b16 %v2410
    %v2507 = vunpack.c.l.b16 %v2411
    %v2508 = vunpack.c.l.b16 %v2412
    %v2509 = vunpack.c.l.b16 %v2413
    %v2510 = vunpack.c.l.b16 %v2414
    %v2511 = vunpack.c.l.b16 %v2415
    %v2512 = vunpack.c.l.b16 %v2416
    %v2513 = vpack.c.b16 %v2498, %v2497
    %v2514 = vpack.c.b16 %v2500, %v2499
    %v2515 = vpack.c.b16 %v2502, %v2501
    %v2516 = vpack.c.b16 %v2504, %v2503
    %v2517 = vpack.c.b16 %v2506, %v2505
    %v2518 = vpack.c.b16 %v2508, %v2507
    %v2519 = vpack.c.b16 %v2510, %v2509
    %v2520 = vpack.c.b16 %v2512, %v2511
    %2529 = vmatpush.bf16.msra.mxu0 %v2520
    %2530 = vmatpush.bf16.msra.mxu0 %v2519
    %2531 = vmatpush.bf16.msra.mxu0 %v2518
    %2532 = vmatpush.bf16.msra.mxu0 %v2517
    %2533 = vmatpush.bf16.msra.mxu0 %v2516
    %2534 = vmatpush.bf16.msra.mxu0 %v2515
    %2535 = vmatpush.bf16.msra.mxu0 %v2514
    %2536 = vmatpush.bf16.msra.mxu0 %v2513
    %2537 = vmatmul.bf16.gmra.mxu0 %v2449
    %v2538 = vpop.f32.mrf.mxu0
    %v2539 = vadd.f32 0.0, %v2538
    %v2540 = vpop.f32.mrf.mxu0
    %v2541 = vadd.f32 0.0, %v2540
    %2542 = vmatmul.bf16.gmra.mxu0 %v2450
    %v2543 = vpop.f32.mrf.mxu0
    %v2544 = vadd.f32 0.0, %v2543
    %v2545 = vpop.f32.mrf.mxu0
    %v2546 = vadd.f32 0.0, %v2545
    %2547 = vmatmul.bf16.gmra.mxu0 %v2451
    %v2548 = vpop.f32.mrf.mxu0
    %v2549 = vadd.f32 0.0, %v2548
    %v2550 = vpop.f32.mrf.mxu0
    %v2551 = vadd.f32 0.0, %v2550
    %2552 = vmatmul.bf16.gmra.mxu0 %v2452
    %v2553 = vpop.f32.mrf.mxu0
    %v2554 = vadd.f32 0.0, %v2553
    %v2555 = vpop.f32.mrf.mxu0
    %v2556 = vadd.f32 0.0, %v2555
    %2557 = vmatmul.bf16.gmra.mxu0 %v2453
    %v2558 = vpop.f32.mrf.mxu0
    %v2559 = vadd.f32 0.0, %v2558
    %v2560 = vpop.f32.mrf.mxu0
    %v2561 = vadd.f32 0.0, %v2560
    %2562 = vmatmul.bf16.gmra.mxu0 %v2454
    %v2563 = vpop.f32.mrf.mxu0
    %v2564 = vadd.f32 0.0, %v2563
    %v2565 = vpop.f32.mrf.mxu0
    %v2566 = vadd.f32 0.0, %v2565
    %2567 = vmatmul.bf16.gmra.mxu0 %v2455
    %v2568 = vpop.f32.mrf.mxu0
    %v2569 = vadd.f32 0.0, %v2568
    %v2570 = vpop.f32.mrf.mxu0
    %v2571 = vadd.f32 0.0, %v2570
    %2572 = vmatmul.bf16.gmra.mxu0 %v2456
    %v2573 = vpop.f32.mrf.mxu0
    %v2574 = vadd.f32 0.0, %v2573
    %v2575 = vpop.f32.mrf.mxu0
    %v2576 = vadd.f32 0.0, %v2575
    %2577 = vmatmul.bf16.gmra.mxu0 %v2457
    %v2578 = vpop.f32.mrf.mxu0
    %v2579 = vadd.f32 0.0, %v2578
    %v2580 = vpop.f32.mrf.mxu0
    %v2581 = vadd.f32 0.0, %v2580
    %2582 = vmatmul.bf16.gmra.mxu0 %v2458
    %v2583 = vpop.f32.mrf.mxu0
    %v2584 = vadd.f32 0.0, %v2583
    %v2585 = vpop.f32.mrf.mxu0
    %v2586 = vadd.f32 0.0, %v2585
    %2587 = vmatmul.bf16.gmra.mxu0 %v2459
    %v2588 = vpop.f32.mrf.mxu0
    %v2589 = vadd.f32 0.0, %v2588
    %v2590 = vpop.f32.mrf.mxu0
    %v2591 = vadd.f32 0.0, %v2590
    %2592 = vmatmul.bf16.gmra.mxu0 %v2460
    %v2593 = vpop.f32.mrf.mxu0
    %v2594 = vadd.f32 0.0, %v2593
    %v2595 = vpop.f32.mrf.mxu0
    %v2596 = vadd.f32 0.0, %v2595
    %2597 = vmatmul.bf16.gmra.mxu0 %v2461
    %v2598 = vpop.f32.mrf.mxu0
    %v2599 = vadd.f32 0.0, %v2598
    %v2600 = vpop.f32.mrf.mxu0
    %v2601 = vadd.f32 0.0, %v2600
    %2602 = vmatmul.bf16.gmra.mxu0 %v2462
    %v2603 = vpop.f32.mrf.mxu0
    %v2604 = vadd.f32 0.0, %v2603
    %v2605 = vpop.f32.mrf.mxu0
    %v2606 = vadd.f32 0.0, %v2605
    %2607 = vmatmul.bf16.gmra.mxu0 %v2463
    %v2608 = vpop.f32.mrf.mxu0
    %v2609 = vadd.f32 0.0, %v2608
    %v2610 = vpop.f32.mrf.mxu0
    %v2611 = vadd.f32 0.0, %v2610
    %2612 = vmatmul.bf16.gmra.mxu0 %v2464
    %v2613 = vpop.f32.mrf.mxu0
    %v2614 = vadd.f32 0.0, %v2613
    %v2615 = vpop.f32.mrf.mxu0
    %v2616 = vadd.f32 0.0, %v2615
    %2617 = vdwg.mxu0
    %v2618 = vadd.f32 %v1888, %v2539
    %v2619 = vadd.f32 %v1889, %v2541
    %v2620 = vadd.f32 %v1890, %v2544
    %v2621 = vadd.f32 %v1891, %v2546
    %v2622 = vadd.f32 %v1892, %v2549
    %v2623 = vadd.f32 %v1893, %v2551
    %v2624 = vadd.f32 %v1894, %v2554
    %v2625 = vadd.f32 %v1895, %v2556
    %v2626 = vadd.f32 %v1896, %v2559
    %v2627 = vadd.f32 %v1897, %v2561
    %v2628 = vadd.f32 %v1898, %v2564
    %v2629 = vadd.f32 %v1899, %v2566
    %v2630 = vadd.f32 %v1900, %v2569
    %v2631 = vadd.f32 %v1901, %v2571
    %v2632 = vadd.f32 %v1902, %v2574
    %v2633 = vadd.f32 %v1903, %v2576
    %v2634 = vadd.f32 %v1904, %v2579
    %v2635 = vadd.f32 %v1905, %v2581
    %v2636 = vadd.f32 %v1906, %v2584
    %v2637 = vadd.f32 %v1907, %v2586
    %v2638 = vadd.f32 %v1908, %v2589
    %v2639 = vadd.f32 %v1909, %v2591
    %v2640 = vadd.f32 %v1910, %v2594
    %v2641 = vadd.f32 %v1911, %v2596
    %v2642 = vadd.f32 %v1912, %v2599
    %v2643 = vadd.f32 %v1913, %v2601
    %v2644 = vadd.f32 %v1914, %v2604
    %v2645 = vadd.f32 %v1915, %v2606
    %v2646 = vadd.f32 %v1916, %v2609
    %v2647 = vadd.f32 %v1917, %v2611
    %v2648 = vadd.f32 %v1918, %v2614
    %v2649 = vadd.f32 %v1919, %v2616
    %s2650 = scalar_lea.vmem [#allocation6], 256
    %v2651 = vld [vmem:[%s2650] sm:$0xf]
    %v2652 = vld [vmem:[%s2650 + $0x4] sm:$0xf]
    %v2653 = vld [vmem:[%s2650 + $0x8] sm:$0xf]
    %v2654 = vld [vmem:[%s2650 + $0xc] sm:$0xf]
    %v2655 = vld [vmem:[%s2650 + $0x10] sm:$0xf]
    %v2656 = vld [vmem:[%s2650 + $0x14] sm:$0xf]
    %v2657 = vld [vmem:[%s2650 + $0x18] sm:$0xf]
    %v2658 = vld [vmem:[%s2650 + $0x1c] sm:$0xf]
    %v2659 = vld [vmem:[%s2650 + $0x20] sm:$0xf]
    %v2660 = vld [vmem:[%s2650 + $0x24] sm:$0xf]
    %v2661 = vld [vmem:[%s2650 + $0x28] sm:$0xf]
    %v2662 = vld [vmem:[%s2650 + $0x2c] sm:$0xf]
    %v2663 = vld [vmem:[%s2650 + $0x30] sm:$0xf]
    %v2664 = vld [vmem:[%s2650 + $0x34] sm:$0xf]
    %v2665 = vld [vmem:[%s2650 + $0x38] sm:$0xf]
    %v2666 = vld [vmem:[%s2650 + $0x3c] sm:$0xf]
    %v2699 = vunpack.c.l.b16 %v1921
    %v2700 = vunpack.c.l.b16 %v1923
    %v2701 = vunpack.c.l.b16 %v1925
    %v2702 = vunpack.c.l.b16 %v1927
    %v2703 = vunpack.c.l.b16 %v1929
    %v2704 = vunpack.c.l.b16 %v1931
    %v2705 = vunpack.c.l.b16 %v1933
    %v2706 = vunpack.c.l.b16 %v1935
    %v2707 = vunpack.c.l.b16 %v1937
    %v2708 = vunpack.c.l.b16 %v1939
    %v2709 = vunpack.c.l.b16 %v1941
    %v2710 = vunpack.c.l.b16 %v1943
    %v2711 = vunpack.c.l.b16 %v1945
    %v2712 = vunpack.c.l.b16 %v1947
    %v2713 = vunpack.c.l.b16 %v1949
    %v2714 = vunpack.c.l.b16 %v1951
    %v2715 = vunpack.c.l.b16 %v1953
    %v2716 = vunpack.c.l.b16 %v1955
    %v2717 = vunpack.c.l.b16 %v1957
    %v2718 = vunpack.c.l.b16 %v1959
    %v2719 = vunpack.c.l.b16 %v1961
    %v2720 = vunpack.c.l.b16 %v1963
    %v2721 = vunpack.c.l.b16 %v1965
    %v2722 = vunpack.c.l.b16 %v1967
    %v2723 = vunpack.c.l.b16 %v1969
    %v2724 = vunpack.c.l.b16 %v1971
    %v2725 = vunpack.c.l.b16 %v1973
    %v2726 = vunpack.c.l.b16 %v1975
    %v2727 = vunpack.c.l.b16 %v1977
    %v2728 = vunpack.c.l.b16 %v1979
    %v2729 = vunpack.c.l.b16 %v1981
    %v2730 = vunpack.c.l.b16 %v1983
    %v2731 = vpack.c.b16 %v2700, %v2699
    %v2732 = vpack.c.b16 %v2702, %v2701
    %v2733 = vpack.c.b16 %v2704, %v2703
    %v2734 = vpack.c.b16 %v2706, %v2705
    %v2735 = vpack.c.b16 %v2708, %v2707
    %v2736 = vpack.c.b16 %v2710, %v2709
    %v2737 = vpack.c.b16 %v2712, %v2711
    %v2738 = vpack.c.b16 %v2714, %v2713
    %v2739 = vpack.c.b16 %v2716, %v2715
    %v2740 = vpack.c.b16 %v2718, %v2717
    %v2741 = vpack.c.b16 %v2720, %v2719
    %v2742 = vpack.c.b16 %v2722, %v2721
    %v2743 = vpack.c.b16 %v2724, %v2723
    %v2744 = vpack.c.b16 %v2726, %v2725
    %v2745 = vpack.c.b16 %v2728, %v2727
    %v2746 = vpack.c.b16 %v2730, %v2729
    %v2779 = vunpack.c.l.b16 %v2651
    %v2780 = vunpack.c.l.b16 %v2652
    %v2781 = vunpack.c.l.b16 %v2653
    %v2782 = vunpack.c.l.b16 %v2654
    %v2783 = vunpack.c.l.b16 %v2655
    %v2784 = vunpack.c.l.b16 %v2656
    %v2785 = vunpack.c.l.b16 %v2657
    %v2786 = vunpack.c.l.b16 %v2658
    %v2787 = vunpack.c.l.b16 %v2659
    %v2788 = vunpack.c.l.b16 %v2660
    %v2789 = vunpack.c.l.b16 %v2661
    %v2790 = vunpack.c.l.b16 %v2662
    %v2791 = vunpack.c.l.b16 %v2663
    %v2792 = vunpack.c.l.b16 %v2664
    %v2793 = vunpack.c.l.b16 %v2665
    %v2794 = vunpack.c.l.b16 %v2666
    %v2795 = vpack.c.b16 %v2780, %v2779
    %v2796 = vpack.c.b16 %v2782, %v2781
    %v2797 = vpack.c.b16 %v2784, %v2783
    %v2798 = vpack.c.b16 %v2786, %v2785
    %v2799 = vpack.c.b16 %v2788, %v2787
    %v2800 = vpack.c.b16 %v2790, %v2789
    %v2801 = vpack.c.b16 %v2792, %v2791
    %v2802 = vpack.c.b16 %v2794, %v2793
    %2811 = vmatpush.bf16.msra.mxu0 %v2802
    %2812 = vmatpush.bf16.msra.mxu0 %v2801
    %2813 = vmatpush.bf16.msra.mxu0 %v2800
    %2814 = vmatpush.bf16.msra.mxu0 %v2799
    %2815 = vmatpush.bf16.msra.mxu0 %v2798
    %2816 = vmatpush.bf16.msra.mxu0 %v2797
    %2817 = vmatpush.bf16.msra.mxu0 %v2796
    %2818 = vmatpush.bf16.msra.mxu0 %v2795
    %2819 = vmatmul.bf16.gmra.mxu0 %v2731
    %v2820 = vpop.f32.mrf.mxu0
    %v2821 = vadd.f32 0.0, %v2820
    %v2822 = vpop.f32.mrf.mxu0
    %v2823 = vadd.f32 0.0, %v2822
    %2824 = vmatmul.bf16.gmra.mxu0 %v2732
    %v2825 = vpop.f32.mrf.mxu0
    %v2826 = vadd.f32 0.0, %v2825
    %v2827 = vpop.f32.mrf.mxu0
    %v2828 = vadd.f32 0.0, %v2827
    %2829 = vmatmul.bf16.gmra.mxu0 %v2733
    %v2830 = vpop.f32.mrf.mxu0
    %v2831 = vadd.f32 0.0, %v2830
    %v2832 = vpop.f32.mrf.mxu0
    %v2833 = vadd.f32 0.0, %v2832
    %2834 = vmatmul.bf16.gmra.mxu0 %v2734
    %v2835 = vpop.f32.mrf.mxu0
    %v2836 = vadd.f32 0.0, %v2835
    %v2837 = vpop.f32.mrf.mxu0
    %v2838 = vadd.f32 0.0, %v2837
    %2839 = vmatmul.bf16.gmra.mxu0 %v2735
    %v2840 = vpop.f32.mrf.mxu0
    %v2841 = vadd.f32 0.0, %v2840
    %v2842 = vpop.f32.mrf.mxu0
    %v2843 = vadd.f32 0.0, %v2842
    %2844 = vmatmul.bf16.gmra.mxu0 %v2736
    %v2845 = vpop.f32.mrf.mxu0
    %v2846 = vadd.f32 0.0, %v2845
    %v2847 = vpop.f32.mrf.mxu0
    %v2848 = vadd.f32 0.0, %v2847
    %2849 = vmatmul.bf16.gmra.mxu0 %v2737
    %v2850 = vpop.f32.mrf.mxu0
    %v2851 = vadd.f32 0.0, %v2850
    %v2852 = vpop.f32.mrf.mxu0
    %v2853 = vadd.f32 0.0, %v2852
    %2854 = vmatmul.bf16.gmra.mxu0 %v2738
    %v2855 = vpop.f32.mrf.mxu0
    %v2856 = vadd.f32 0.0, %v2855
    %v2857 = vpop.f32.mrf.mxu0
    %v2858 = vadd.f32 0.0, %v2857
    %2859 = vmatmul.bf16.gmra.mxu0 %v2739
    %v2860 = vpop.f32.mrf.mxu0
    %v2861 = vadd.f32 0.0, %v2860
    %v2862 = vpop.f32.mrf.mxu0
    %v2863 = vadd.f32 0.0, %v2862
    %2864 = vmatmul.bf16.gmra.mxu0 %v2740
    %v2865 = vpop.f32.mrf.mxu0
    %v2866 = vadd.f32 0.0, %v2865
    %v2867 = vpop.f32.mrf.mxu0
    %v2868 = vadd.f32 0.0, %v2867
    %2869 = vmatmul.bf16.gmra.mxu0 %v2741
    %v2870 = vpop.f32.mrf.mxu0
    %v2871 = vadd.f32 0.0, %v2870
    %v2872 = vpop.f32.mrf.mxu0
    %v2873 = vadd.f32 0.0, %v2872
    %2874 = vmatmul.bf16.gmra.mxu0 %v2742
    %v2875 = vpop.f32.mrf.mxu0
    %v2876 = vadd.f32 0.0, %v2875
    %v2877 = vpop.f32.mrf.mxu0
    %v2878 = vadd.f32 0.0, %v2877
    %2879 = vmatmul.bf16.gmra.mxu0 %v2743
    %v2880 = vpop.f32.mrf.mxu0
    %v2881 = vadd.f32 0.0, %v2880
    %v2882 = vpop.f32.mrf.mxu0
    %v2883 = vadd.f32 0.0, %v2882
    %2884 = vmatmul.bf16.gmra.mxu0 %v2744
    %v2885 = vpop.f32.mrf.mxu0
    %v2886 = vadd.f32 0.0, %v2885
    %v2887 = vpop.f32.mrf.mxu0
    %v2888 = vadd.f32 0.0, %v2887
    %2889 = vmatmul.bf16.gmra.mxu0 %v2745
    %v2890 = vpop.f32.mrf.mxu0
    %v2891 = vadd.f32 0.0, %v2890
    %v2892 = vpop.f32.mrf.mxu0
    %v2893 = vadd.f32 0.0, %v2892
    %2894 = vmatmul.bf16.gmra.mxu0 %v2746
    %v2895 = vpop.f32.mrf.mxu0
    %v2896 = vadd.f32 0.0, %v2895
    %v2897 = vpop.f32.mrf.mxu0
    %v2898 = vadd.f32 0.0, %v2897
    %2899 = vdwg.mxu0
    %v2900 = vadd.f32 %v2618, %v2821
    %v2901 = vadd.f32 %v2619, %v2823
    %v2902 = vadd.f32 %v2620, %v2826
    %v2903 = vadd.f32 %v2621, %v2828
    %v2904 = vadd.f32 %v2622, %v2831
    %v2905 = vadd.f32 %v2623, %v2833
    %v2906 = vadd.f32 %v2624, %v2836
    %v2907 = vadd.f32 %v2625, %v2838
    %v2908 = vadd.f32 %v2626, %v2841
    %v2909 = vadd.f32 %v2627, %v2843
    %v2910 = vadd.f32 %v2628, %v2846
    %v2911 = vadd.f32 %v2629, %v2848
    %v2912 = vadd.f32 %v2630, %v2851
    %v2913 = vadd.f32 %v2631, %v2853
    %v2914 = vadd.f32 %v2632, %v2856
    %v2915 = vadd.f32 %v2633, %v2858
    %v2916 = vadd.f32 %v2634, %v2861
    %v2917 = vadd.f32 %v2635, %v2863
    %v2918 = vadd.f32 %v2636, %v2866
    %v2919 = vadd.f32 %v2637, %v2868
    %v2920 = vadd.f32 %v2638, %v2871
    %v2921 = vadd.f32 %v2639, %v2873
    %v2922 = vadd.f32 %v2640, %v2876
    %v2923 = vadd.f32 %v2641, %v2878
    %v2924 = vadd.f32 %v2642, %v2881
    %v2925 = vadd.f32 %v2643, %v2883
    %v2926 = vadd.f32 %v2644, %v2886
    %v2927 = vadd.f32 %v2645, %v2888
    %v2928 = vadd.f32 %v2646, %v2891
    %v2929 = vadd.f32 %v2647, %v2893
    %v2930 = vadd.f32 %v2648, %v2896
    %v2931 = vadd.f32 %v2649, %v2898
    %v2932 = vld [vmem:[%s76 + $0x4] sm:$0xf]
    %v2933 = vld [vmem:[%s76 + $0x8] sm:$0x1]
    %v2934 = vld [vmem:[%s76 + $0x10] sm:$0xf]
    %v2935 = vld [vmem:[%s76 + $0x14] sm:$0x1]
    %v2936 = vld [vmem:[%s76 + $0x1c] sm:$0xf]
    %v2937 = vld [vmem:[%s76 + $0x20] sm:$0x1]
    %v2938 = vld [vmem:[%s76 + $0x28] sm:$0xf]
    %v2939 = vld [vmem:[%s76 + $0x2c] sm:$0x1]
    %v2940 = vld [vmem:[%s76 + $0x34] sm:$0xf]
    %v2941 = vld [vmem:[%s76 + $0x38] sm:$0x1]
    %v2942 = vld [vmem:[%s76 + $0x40] sm:$0xf]
    %v2943 = vld [vmem:[%s76 + $0x44] sm:$0x1]
    %v2944 = vld [vmem:[%s76 + $0x4c] sm:$0xf]
    %v2945 = vld [vmem:[%s76 + $0x50] sm:$0x1]
    %v2946 = vld [vmem:[%s76 + $0x58] sm:$0xf]
    %v2947 = vld [vmem:[%s76 + $0x5c] sm:$0x1]
    %v2948 = vld [vmem:[%s76 + $0x7c] sm:$0xf]
    %v2949 = vld [vmem:[%s76 + $0x80] sm:$0x1]
    %v2950 = vld [vmem:[%s76 + $0x88] sm:$0xf]
    %v2951 = vld [vmem:[%s76 + $0x8c] sm:$0x1]
    %v2952 = vld [vmem:[%s76 + $0x94] sm:$0xf]
    %v2953 = vld [vmem:[%s76 + $0x98] sm:$0x1]
    %v2954 = vld [vmem:[%s76 + $0xa0] sm:$0xf]
    %v2955 = vld [vmem:[%s76 + $0xa4] sm:$0x1]
    %v2956 = vld [vmem:[%s76 + $0xac] sm:$0xf]
    %v2957 = vld [vmem:[%s76 + $0xb0] sm:$0x1]
    %v2958 = vld [vmem:[%s76 + $0xb8] sm:$0xf]
    %v2959 = vld [vmem:[%s76 + $0xbc] sm:$0x1]
    %v2960 = vld [vmem:[%s76 + $0xc4] sm:$0xf]
    %v2961 = vld [vmem:[%s76 + $0xc8] sm:$0x1]
    %v2962 = vld [vmem:[%s76 + $0xd0] sm:$0xf]
    %v2963 = vld [vmem:[%s76 + $0xd4] sm:$0x1]
    %v2964 = vld [vmem:[%s76 + $0xf4] sm:$0xf]
    %v2965 = vld [vmem:[%s76 + $0xf8] sm:$0x1]
    %v2966 = vld [vmem:[%s76 + $0x100] sm:$0xf]
    %v2967 = vld [vmem:[%s76 + $0x104] sm:$0x1]
    %v2968 = vld [vmem:[%s76 + $0x10c] sm:$0xf]
    %v2969 = vld [vmem:[%s76 + $0x110] sm:$0x1]
    %v2970 = vld [vmem:[%s76 + $0x118] sm:$0xf]
    %v2971 = vld [vmem:[%s76 + $0x11c] sm:$0x1]
    %v2972 = vld [vmem:[%s76 + $0x124] sm:$0xf]
    %v2973 = vld [vmem:[%s76 + $0x128] sm:$0x1]
    %v2974 = vld [vmem:[%s76 + $0x130] sm:$0xf]
    %v2975 = vld [vmem:[%s76 + $0x134] sm:$0x1]
    %v2976 = vld [vmem:[%s76 + $0x13c] sm:$0xf]
    %v2977 = vld [vmem:[%s76 + $0x140] sm:$0x1]
    %v2978 = vld [vmem:[%s76 + $0x148] sm:$0xf]
    %v2979 = vld [vmem:[%s76 + $0x14c] sm:$0x1]
    %v2980 = vld [vmem:[%s76 + $0x16c] sm:$0xf]
    %v2981 = vld [vmem:[%s76 + $0x170] sm:$0x1]
    %v2982 = vld [vmem:[%s76 + $0x178] sm:$0xf]
    %v2983 = vld [vmem:[%s76 + $0x17c] sm:$0x1]
    %v2984 = vld [vmem:[%s76 + $0x184] sm:$0xf]
    %v2985 = vld [vmem:[%s76 + $0x188] sm:$0x1]
    %v2986 = vld [vmem:[%s76 + $0x190] sm:$0xf]
    %v2987 = vld [vmem:[%s76 + $0x194] sm:$0x1]
    %v2988 = vld [vmem:[%s76 + $0x19c] sm:$0xf]
    %v2989 = vld [vmem:[%s76 + $0x1a0] sm:$0x1]
    %v2990 = vld [vmem:[%s76 + $0x1a8] sm:$0xf]
    %v2991 = vld [vmem:[%s76 + $0x1ac] sm:$0x1]
    %v2992 = vld [vmem:[%s76 + $0x1b4] sm:$0xf]
    %v2993 = vld [vmem:[%s76 + $0x1b8] sm:$0x1]
    %v2994 = vld [vmem:[%s76 + $0x1c0] sm:$0xf]
    %v2995 = vld [vmem:[%s76 + $0x1c4] sm:$0x1]
    %v2997 = vshrl.u32 %v2932, 16
    %v2999 = vrot.slane %v2997, 4
    %v3000 = vshll.u32 %v2932, 16
    %v3002 = vrot.slane %v3000, 5
    %v3003 = vor.u32 %v2999, %v3002
    %v3004 = vrot.slane %v3003, 4
    %v3006 = vshll.u32 %v2933, 16
    %v3008 = vrot.slane %v3006, 5
    %v3009 = vsel %vm1221, %v3004, %v3008
    %v3011 = vshrl.u32 %v2934, 16
    %v3013 = vrot.slane %v3011, 4
    %v3014 = vshll.u32 %v2934, 16
    %v3016 = vrot.slane %v3014, 5
    %v3017 = vor.u32 %v3013, %v3016
    %v3018 = vrot.slane %v3017, 4
    %v3020 = vshll.u32 %v2935, 16
    %v3022 = vrot.slane %v3020, 5
    %v3023 = vsel %vm1221, %v3018, %v3022
    %v3025 = vshrl.u32 %v2936, 16
    %v3027 = vrot.slane %v3025, 4
    %v3028 = vshll.u32 %v2936, 16
    %v3030 = vrot.slane %v3028, 5
    %v3031 = vor.u32 %v3027, %v3030
    %v3032 = vrot.slane %v3031, 4
    %v3034 = vshll.u32 %v2937, 16
    %v3036 = vrot.slane %v3034, 5
    %v3037 = vsel %vm1221, %v3032, %v3036
    %v3039 = vshrl.u32 %v2938, 16
    %v3041 = vrot.slane %v3039, 4
    %v3042 = vshll.u32 %v2938, 16
    %v3044 = vrot.slane %v3042, 5
    %v3045 = vor.u32 %v3041, %v3044
    %v3046 = vrot.slane %v3045, 4
    %v3048 = vshll.u32 %v2939, 16
    %v3050 = vrot.slane %v3048, 5
    %v3051 = vsel %vm1221, %v3046, %v3050
    %v3053 = vshrl.u32 %v2940, 16
    %v3055 = vrot.slane %v3053, 4
    %v3056 = vshll.u32 %v2940, 16
    %v3058 = vrot.slane %v3056, 5
    %v3059 = vor.u32 %v3055, %v3058
    %v3060 = vrot.slane %v3059, 4
    %v3062 = vshll.u32 %v2941, 16
    %v3064 = vrot.slane %v3062, 5
    %v3065 = vsel %vm1221, %v3060, %v3064
    %v3067 = vshrl.u32 %v2942, 16
    %v3069 = vrot.slane %v3067, 4
    %v3070 = vshll.u32 %v2942, 16
    %v3072 = vrot.slane %v3070, 5
    %v3073 = vor.u32 %v3069, %v3072
    %v3074 = vrot.slane %v3073, 4
    %v3076 = vshll.u32 %v2943, 16
    %v3078 = vrot.slane %v3076, 5
    %v3079 = vsel %vm1221, %v3074, %v3078
    %v3081 = vshrl.u32 %v2944, 16
    %v3083 = vrot.slane %v3081, 4
    %v3084 = vshll.u32 %v2944, 16
    %v3086 = vrot.slane %v3084, 5
    %v3087 = vor.u32 %v3083, %v3086
    %v3088 = vrot.slane %v3087, 4
    %v3090 = vshll.u32 %v2945, 16
    %v3092 = vrot.slane %v3090, 5
    %v3093 = vsel %vm1221, %v3088, %v3092
    %v3095 = vshrl.u32 %v2946, 16
    %v3097 = vrot.slane %v3095, 4
    %v3098 = vshll.u32 %v2946, 16
    %v3100 = vrot.slane %v3098, 5
    %v3101 = vor.u32 %v3097, %v3100
    %v3102 = vrot.slane %v3101, 4
    %v3104 = vshll.u32 %v2947, 16
    %v3106 = vrot.slane %v3104, 5
    %v3107 = vsel %vm1221, %v3102, %v3106
    %v3109 = vshrl.u32 %v2948, 16
    %v3111 = vrot.slane %v3109, 4
    %v3112 = vshll.u32 %v2948, 16
    %v3114 = vrot.slane %v3112, 5
    %v3115 = vor.u32 %v3111, %v3114
    %v3116 = vrot.slane %v3115, 4
    %v3118 = vshll.u32 %v2949, 16
    %v3120 = vrot.slane %v3118, 5
    %v3121 = vsel %vm1221, %v3116, %v3120
    %v3123 = vshrl.u32 %v2950, 16
    %v3125 = vrot.slane %v3123, 4
    %v3126 = vshll.u32 %v2950, 16
    %v3128 = vrot.slane %v3126, 5
    %v3129 = vor.u32 %v3125, %v3128
    %v3130 = vrot.slane %v3129, 4
    %v3132 = vshll.u32 %v2951, 16
    %v3134 = vrot.slane %v3132, 5
    %v3135 = vsel %vm1221, %v3130, %v3134
    %v3137 = vshrl.u32 %v2952, 16
    %v3139 = vrot.slane %v3137, 4
    %v3140 = vshll.u32 %v2952, 16
    %v3142 = vrot.slane %v3140, 5
    %v3143 = vor.u32 %v3139, %v3142
    %v3144 = vrot.slane %v3143, 4
    %v3146 = vshll.u32 %v2953, 16
    %v3148 = vrot.slane %v3146, 5
    %v3149 = vsel %vm1221, %v3144, %v3148
    %v3151 = vshrl.u32 %v2954, 16
    %v3153 = vrot.slane %v3151, 4
    %v3154 = vshll.u32 %v2954, 16
    %v3156 = vrot.slane %v3154, 5
    %v3157 = vor.u32 %v3153, %v3156
    %v3158 = vrot.slane %v3157, 4
    %v3160 = vshll.u32 %v2955, 16
    %v3162 = vrot.slane %v3160, 5
    %v3163 = vsel %vm1221, %v3158, %v3162
    %v3165 = vshrl.u32 %v2956, 16
    %v3167 = vrot.slane %v3165, 4
    %v3168 = vshll.u32 %v2956, 16
    %v3170 = vrot.slane %v3168, 5
    %v3171 = vor.u32 %v3167, %v3170
    %v3172 = vrot.slane %v3171, 4
    %v3174 = vshll.u32 %v2957, 16
    %v3176 = vrot.slane %v3174, 5
    %v3177 = vsel %vm1221, %v3172, %v3176
    %v3179 = vshrl.u32 %v2958, 16
    %v3181 = vrot.slane %v3179, 4
    %v3182 = vshll.u32 %v2958, 16
    %v3184 = vrot.slane %v3182, 5
    %v3185 = vor.u32 %v3181, %v3184
    %v3186 = vrot.slane %v3185, 4
    %v3188 = vshll.u32 %v2959, 16
    %v3190 = vrot.slane %v3188, 5
    %v3191 = vsel %vm1221, %v3186, %v3190
    %v3193 = vshrl.u32 %v2960, 16
    %v3195 = vrot.slane %v3193, 4
    %v3196 = vshll.u32 %v2960, 16
    %v3198 = vrot.slane %v3196, 5
    %v3199 = vor.u32 %v3195, %v3198
    %v3200 = vrot.slane %v3199, 4
    %v3202 = vshll.u32 %v2961, 16
    %v3204 = vrot.slane %v3202, 5
    %v3205 = vsel %vm1221, %v3200, %v3204
    %v3207 = vshrl.u32 %v2962, 16
    %v3209 = vrot.slane %v3207, 4
    %v3210 = vshll.u32 %v2962, 16
    %v3212 = vrot.slane %v3210, 5
    %v3213 = vor.u32 %v3209, %v3212
    %v3214 = vrot.slane %v3213, 4
    %v3216 = vshll.u32 %v2963, 16
    %v3218 = vrot.slane %v3216, 5
    %v3219 = vsel %vm1221, %v3214, %v3218
    %v3221 = vshrl.u32 %v2964, 16
    %v3223 = vrot.slane %v3221, 4
    %v3224 = vshll.u32 %v2964, 16
    %v3226 = vrot.slane %v3224, 5
    %v3227 = vor.u32 %v3223, %v3226
    %v3228 = vrot.slane %v3227, 4
    %v3230 = vshll.u32 %v2965, 16
    %v3232 = vrot.slane %v3230, 5
    %v3233 = vsel %vm1221, %v3228, %v3232
    %v3235 = vshrl.u32 %v2966, 16
    %v3237 = vrot.slane %v3235, 4
    %v3238 = vshll.u32 %v2966, 16
    %v3240 = vrot.slane %v3238, 5
    %v3241 = vor.u32 %v3237, %v3240
    %v3242 = vrot.slane %v3241, 4
    %v3244 = vshll.u32 %v2967, 16
    %v3246 = vrot.slane %v3244, 5
    %v3247 = vsel %vm1221, %v3242, %v3246
    %v3249 = vshrl.u32 %v2968, 16
    %v3251 = vrot.slane %v3249, 4
    %v3252 = vshll.u32 %v2968, 16
    %v3254 = vrot.slane %v3252, 5
    %v3255 = vor.u32 %v3251, %v3254
    %v3256 = vrot.slane %v3255, 4
    %v3258 = vshll.u32 %v2969, 16
    %v3260 = vrot.slane %v3258, 5
    %v3261 = vsel %vm1221, %v3256, %v3260
    %v3263 = vshrl.u32 %v2970, 16
    %v3265 = vrot.slane %v3263, 4
    %v3266 = vshll.u32 %v2970, 16
    %v3268 = vrot.slane %v3266, 5
    %v3269 = vor.u32 %v3265, %v3268
    %v3270 = vrot.slane %v3269, 4
    %v3272 = vshll.u32 %v2971, 16
    %v3274 = vrot.slane %v3272, 5
    %v3275 = vsel %vm1221, %v3270, %v3274
    %v3277 = vshrl.u32 %v2972, 16
    %v3279 = vrot.slane %v3277, 4
    %v3280 = vshll.u32 %v2972, 16
    %v3282 = vrot.slane %v3280, 5
    %v3283 = vor.u32 %v3279, %v3282
    %v3284 = vrot.slane %v3283, 4
    %v3286 = vshll.u32 %v2973, 16
    %v3288 = vrot.slane %v3286, 5
    %v3289 = vsel %vm1221, %v3284, %v3288
    %v3291 = vshrl.u32 %v2974, 16
    %v3293 = vrot.slane %v3291, 4
    %v3294 = vshll.u32 %v2974, 16
    %v3296 = vrot.slane %v3294, 5
    %v3297 = vor.u32 %v3293, %v3296
    %v3298 = vrot.slane %v3297, 4
    %v3300 = vshll.u32 %v2975, 16
    %v3302 = vrot.slane %v3300, 5
    %v3303 = vsel %vm1221, %v3298, %v3302
    %v3305 = vshrl.u32 %v2976, 16
    %v3307 = vrot.slane %v3305, 4
    %v3308 = vshll.u32 %v2976, 16
    %v3310 = vrot.slane %v3308, 5
    %v3311 = vor.u32 %v3307, %v3310
    %v3312 = vrot.slane %v3311, 4
    %v3314 = vshll.u32 %v2977, 16
    %v3316 = vrot.slane %v3314, 5
    %v3317 = vsel %vm1221, %v3312, %v3316
    %v3319 = vshrl.u32 %v2978, 16
    %v3321 = vrot.slane %v3319, 4
    %v3322 = vshll.u32 %v2978, 16
    %v3324 = vrot.slane %v3322, 5
    %v3325 = vor.u32 %v3321, %v3324
    %v3326 = vrot.slane %v3325, 4
    %v3328 = vshll.u32 %v2979, 16
    %v3330 = vrot.slane %v3328, 5
    %v3331 = vsel %vm1221, %v3326, %v3330
    %v3333 = vshrl.u32 %v2980, 16
    %v3335 = vrot.slane %v3333, 4
    %v3336 = vshll.u32 %v2980, 16
    %v3338 = vrot.slane %v3336, 5
    %v3339 = vor.u32 %v3335, %v3338
    %v3340 = vrot.slane %v3339, 4
    %v3342 = vshll.u32 %v2981, 16
    %v3344 = vrot.slane %v3342, 5
    %v3345 = vsel %vm1221, %v3340, %v3344
    %v3347 = vshrl.u32 %v2982, 16
    %v3349 = vrot.slane %v3347, 4
    %v3350 = vshll.u32 %v2982, 16
    %v3352 = vrot.slane %v3350, 5
    %v3353 = vor.u32 %v3349, %v3352
    %v3354 = vrot.slane %v3353, 4
    %v3356 = vshll.u32 %v2983, 16
    %v3358 = vrot.slane %v3356, 5
    %v3359 = vsel %vm1221, %v3354, %v3358
    %v3361 = vshrl.u32 %v2984, 16
    %v3363 = vrot.slane %v3361, 4
    %v3364 = vshll.u32 %v2984, 16
    %v3366 = vrot.slane %v3364, 5
    %v3367 = vor.u32 %v3363, %v3366
    %v3368 = vrot.slane %v3367, 4
    %v3370 = vshll.u32 %v2985, 16
    %v3372 = vrot.slane %v3370, 5
    %v3373 = vsel %vm1221, %v3368, %v3372
    %v3375 = vshrl.u32 %v2986, 16
    %v3377 = vrot.slane %v3375, 4
    %v3378 = vshll.u32 %v2986, 16
    %v3380 = vrot.slane %v3378, 5
    %v3381 = vor.u32 %v3377, %v3380
    %v3382 = vrot.slane %v3381, 4
    %v3384 = vshll.u32 %v2987, 16
    %v3386 = vrot.slane %v3384, 5
    %v3387 = vsel %vm1221, %v3382, %v3386
    %v3389 = vshrl.u32 %v2988, 16
    %v3391 = vrot.slane %v3389, 4
    %v3392 = vshll.u32 %v2988, 16
    %v3394 = vrot.slane %v3392, 5
    %v3395 = vor.u32 %v3391, %v3394
    %v3396 = vrot.slane %v3395, 4
    %v3398 = vshll.u32 %v2989, 16
    %v3400 = vrot.slane %v3398, 5
    %v3401 = vsel %vm1221, %v3396, %v3400
    %v3403 = vshrl.u32 %v2990, 16
    %v3405 = vrot.slane %v3403, 4
    %v3406 = vshll.u32 %v2990, 16
    %v3408 = vrot.slane %v3406, 5
    %v3409 = vor.u32 %v3405, %v3408
    %v3410 = vrot.slane %v3409, 4
    %v3412 = vshll.u32 %v2991, 16
    %v3414 = vrot.slane %v3412, 5
    %v3415 = vsel %vm1221, %v3410, %v3414
    %v3417 = vshrl.u32 %v2992, 16
    %v3419 = vrot.slane %v3417, 4
    %v3420 = vshll.u32 %v2992, 16
    %v3422 = vrot.slane %v3420, 5
    %v3423 = vor.u32 %v3419, %v3422
    %v3424 = vrot.slane %v3423, 4
    %v3426 = vshll.u32 %v2993, 16
    %v3428 = vrot.slane %v3426, 5
    %v3429 = vsel %vm1221, %v3424, %v3428
    %v3431 = vshrl.u32 %v2994, 16
    %v3433 = vrot.slane %v3431, 4
    %v3434 = vshll.u32 %v2994, 16
    %v3436 = vrot.slane %v3434, 5
    %v3437 = vor.u32 %v3433, %v3436
    %v3438 = vrot.slane %v3437, 4
    %v3440 = vshll.u32 %v2995, 16
    %v3442 = vrot.slane %v3440, 5
    %v3443 = vsel %vm1221, %v3438, %v3442
    %s3444 = scalar_lea.vmem [#allocation6], 320
    %v3445 = vld [vmem:[%s3444] sm:$0xf]
    %v3446 = vld [vmem:[%s3444 + $0x4] sm:$0xf]
    %v3447 = vld [vmem:[%s3444 + $0x8] sm:$0xf]
    %v3448 = vld [vmem:[%s3444 + $0xc] sm:$0xf]
    %v3449 = vld [vmem:[%s3444 + $0x10] sm:$0xf]
    %v3450 = vld [vmem:[%s3444 + $0x14] sm:$0xf]
    %v3451 = vld [vmem:[%s3444 + $0x18] sm:$0xf]
    %v3452 = vld [vmem:[%s3444 + $0x1c] sm:$0xf]
    %v3453 = vld [vmem:[%s3444 + $0x20] sm:$0xf]
    %v3454 = vld [vmem:[%s3444 + $0x24] sm:$0xf]
    %v3455 = vld [vmem:[%s3444 + $0x28] sm:$0xf]
    %v3456 = vld [vmem:[%s3444 + $0x2c] sm:$0xf]
    %v3457 = vld [vmem:[%s3444 + $0x30] sm:$0xf]
    %v3458 = vld [vmem:[%s3444 + $0x34] sm:$0xf]
    %v3459 = vld [vmem:[%s3444 + $0x38] sm:$0xf]
    %v3460 = vld [vmem:[%s3444 + $0x3c] sm:$0xf]
    %v3461 = vunpack.c.l.b16 %v3009
    %v3462 = vunpack.c.l.b16 %v3023
    %v3463 = vunpack.c.l.b16 %v3037
    %v3464 = vunpack.c.l.b16 %v3051
    %v3465 = vunpack.c.l.b16 %v3065
    %v3466 = vunpack.c.l.b16 %v3079
    %v3467 = vunpack.c.l.b16 %v3093
    %v3468 = vunpack.c.l.b16 %v3107
    %v3469 = vunpack.c.l.b16 %v3121
    %v3470 = vunpack.c.l.b16 %v3135
    %v3471 = vunpack.c.l.b16 %v3149
    %v3472 = vunpack.c.l.b16 %v3163
    %v3473 = vunpack.c.l.b16 %v3177
    %v3474 = vunpack.c.l.b16 %v3191
    %v3475 = vunpack.c.l.b16 %v3205
    %v3476 = vunpack.c.l.b16 %v3219
    %v3477 = vunpack.c.l.b16 %v3233
    %v3478 = vunpack.c.l.b16 %v3247
    %v3479 = vunpack.c.l.b16 %v3261
    %v3480 = vunpack.c.l.b16 %v3275
    %v3481 = vunpack.c.l.b16 %v3289
    %v3482 = vunpack.c.l.b16 %v3303
    %v3483 = vunpack.c.l.b16 %v3317
    %v3484 = vunpack.c.l.b16 %v3331
    %v3485 = vunpack.c.l.b16 %v3345
    %v3486 = vunpack.c.l.b16 %v3359
    %v3487 = vunpack.c.l.b16 %v3373
    %v3488 = vunpack.c.l.b16 %v3387
    %v3489 = vunpack.c.l.b16 %v3401
    %v3490 = vunpack.c.l.b16 %v3415
    %v3491 = vunpack.c.l.b16 %v3429
    %v3492 = vunpack.c.l.b16 %v3443
    %v3493 = vpack.c.b16 %v3462, %v3461
    %v3494 = vpack.c.b16 %v3464, %v3463
    %v3495 = vpack.c.b16 %v3466, %v3465
    %v3496 = vpack.c.b16 %v3468, %v3467
    %v3497 = vpack.c.b16 %v3470, %v3469
    %v3498 = vpack.c.b16 %v3472, %v3471
    %v3499 = vpack.c.b16 %v3474, %v3473
    %v3500 = vpack.c.b16 %v3476, %v3475
    %v3501 = vpack.c.b16 %v3478, %v3477
    %v3502 = vpack.c.b16 %v3480, %v3479
    %v3503 = vpack.c.b16 %v3482, %v3481
    %v3504 = vpack.c.b16 %v3484, %v3483
    %v3505 = vpack.c.b16 %v3486, %v3485
    %v3506 = vpack.c.b16 %v3488, %v3487
    %v3507 = vpack.c.b16 %v3490, %v3489
    %v3508 = vpack.c.b16 %v3492, %v3491
    %v3541 = vunpack.c.l.b16 %v3445
    %v3542 = vunpack.c.l.b16 %v3446
    %v3543 = vunpack.c.l.b16 %v3447
    %v3544 = vunpack.c.l.b16 %v3448
    %v3545 = vunpack.c.l.b16 %v3449
    %v3546 = vunpack.c.l.b16 %v3450
    %v3547 = vunpack.c.l.b16 %v3451
    %v3548 = vunpack.c.l.b16 %v3452
    %v3549 = vunpack.c.l.b16 %v3453
    %v3550 = vunpack.c.l.b16 %v3454
    %v3551 = vunpack.c.l.b16 %v3455
    %v3552 = vunpack.c.l.b16 %v3456
    %v3553 = vunpack.c.l.b16 %v3457
    %v3554 = vunpack.c.l.b16 %v3458
    %v3555 = vunpack.c.l.b16 %v3459
    %v3556 = vunpack.c.l.b16 %v3460
    %v3557 = vpack.c.b16 %v3542, %v3541
    %v3558 = vpack.c.b16 %v3544, %v3543
    %v3559 = vpack.c.b16 %v3546, %v3545
    %v3560 = vpack.c.b16 %v3548, %v3547
    %v3561 = vpack.c.b16 %v3550, %v3549
    %v3562 = vpack.c.b16 %v3552, %v3551
    %v3563 = vpack.c.b16 %v3554, %v3553
    %v3564 = vpack.c.b16 %v3556, %v3555
    %3573 = vmatpush.bf16.msra.mxu0 %v3564
    %3574 = vmatpush.bf16.msra.mxu0 %v3563
    %3575 = vmatpush.bf16.msra.mxu0 %v3562
    %3576 = vmatpush.bf16.msra.mxu0 %v3561
    %3577 = vmatpush.bf16.msra.mxu0 %v3560
    %3578 = vmatpush.bf16.msra.mxu0 %v3559
    %3579 = vmatpush.bf16.msra.mxu0 %v3558
    %3580 = vmatpush.bf16.msra.mxu0 %v3557
    %3581 = vmatmul.bf16.gmra.mxu0 %v3493
    %v3582 = vpop.f32.mrf.mxu0
    %v3583 = vadd.f32 0.0, %v3582
    %v3584 = vpop.f32.mrf.mxu0
    %v3585 = vadd.f32 0.0, %v3584
    %3586 = vmatmul.bf16.gmra.mxu0 %v3494
    %v3587 = vpop.f32.mrf.mxu0
    %v3588 = vadd.f32 0.0, %v3587
    %v3589 = vpop.f32.mrf.mxu0
    %v3590 = vadd.f32 0.0, %v3589
    %3591 = vmatmul.bf16.gmra.mxu0 %v3495
    %v3592 = vpop.f32.mrf.mxu0
    %v3593 = vadd.f32 0.0, %v3592
    %v3594 = vpop.f32.mrf.mxu0
    %v3595 = vadd.f32 0.0, %v3594
    %3596 = vmatmul.bf16.gmra.mxu0 %v3496
    %v3597 = vpop.f32.mrf.mxu0
    %v3598 = vadd.f32 0.0, %v3597
    %v3599 = vpop.f32.mrf.mxu0
    %v3600 = vadd.f32 0.0, %v3599
    %3601 = vmatmul.bf16.gmra.mxu0 %v3497
    %v3602 = vpop.f32.mrf.mxu0
    %v3603 = vadd.f32 0.0, %v3602
    %v3604 = vpop.f32.mrf.mxu0
    %v3605 = vadd.f32 0.0, %v3604
    %3606 = vmatmul.bf16.gmra.mxu0 %v3498
    %v3607 = vpop.f32.mrf.mxu0
    %v3608 = vadd.f32 0.0, %v3607
    %v3609 = vpop.f32.mrf.mxu0
    %v3610 = vadd.f32 0.0, %v3609
    %3611 = vmatmul.bf16.gmra.mxu0 %v3499
    %v3612 = vpop.f32.mrf.mxu0
    %v3613 = vadd.f32 0.0, %v3612
    %v3614 = vpop.f32.mrf.mxu0
    %v3615 = vadd.f32 0.0, %v3614
    %3616 = vmatmul.bf16.gmra.mxu0 %v3500
    %v3617 = vpop.f32.mrf.mxu0
    %v3618 = vadd.f32 0.0, %v3617
    %v3619 = vpop.f32.mrf.mxu0
    %v3620 = vadd.f32 0.0, %v3619
    %3621 = vmatmul.bf16.gmra.mxu0 %v3501
    %v3622 = vpop.f32.mrf.mxu0
    %v3623 = vadd.f32 0.0, %v3622
    %v3624 = vpop.f32.mrf.mxu0
    %v3625 = vadd.f32 0.0, %v3624
    %3626 = vmatmul.bf16.gmra.mxu0 %v3502
    %v3627 = vpop.f32.mrf.mxu0
    %v3628 = vadd.f32 0.0, %v3627
    %v3629 = vpop.f32.mrf.mxu0
    %v3630 = vadd.f32 0.0, %v3629
    %3631 = vmatmul.bf16.gmra.mxu0 %v3503
    %v3632 = vpop.f32.mrf.mxu0
    %v3633 = vadd.f32 0.0, %v3632
    %v3634 = vpop.f32.mrf.mxu0
    %v3635 = vadd.f32 0.0, %v3634
    %3636 = vmatmul.bf16.gmra.mxu0 %v3504
    %v3637 = vpop.f32.mrf.mxu0
    %v3638 = vadd.f32 0.0, %v3637
    %v3639 = vpop.f32.mrf.mxu0
    %v3640 = vadd.f32 0.0, %v3639
    %3641 = vmatmul.bf16.gmra.mxu0 %v3505
    %v3642 = vpop.f32.mrf.mxu0
    %v3643 = vadd.f32 0.0, %v3642
    %v3644 = vpop.f32.mrf.mxu0
    %v3645 = vadd.f32 0.0, %v3644
    %3646 = vmatmul.bf16.gmra.mxu0 %v3506
    %v3647 = vpop.f32.mrf.mxu0
    %v3648 = vadd.f32 0.0, %v3647
    %v3649 = vpop.f32.mrf.mxu0
    %v3650 = vadd.f32 0.0, %v3649
    %3651 = vmatmul.bf16.gmra.mxu0 %v3507
    %v3652 = vpop.f32.mrf.mxu0
    %v3653 = vadd.f32 0.0, %v3652
    %v3654 = vpop.f32.mrf.mxu0
    %v3655 = vadd.f32 0.0, %v3654
    %3656 = vmatmul.bf16.gmra.mxu0 %v3508
    %v3657 = vpop.f32.mrf.mxu0
    %v3658 = vadd.f32 0.0, %v3657
    %v3659 = vpop.f32.mrf.mxu0
    %v3660 = vadd.f32 0.0, %v3659
    %3661 = vdwg.mxu0
    %v3662 = vadd.f32 %v2900, %v3583
    %v3663 = vadd.f32 %v2901, %v3585
    %v3664 = vadd.f32 %v2902, %v3588
    %v3665 = vadd.f32 %v2903, %v3590
    %v3666 = vadd.f32 %v2904, %v3593
    %v3667 = vadd.f32 %v2905, %v3595
    %v3668 = vadd.f32 %v2906, %v3598
    %v3669 = vadd.f32 %v2907, %v3600
    %v3670 = vadd.f32 %v2908, %v3603
    %v3671 = vadd.f32 %v2909, %v3605
    %v3672 = vadd.f32 %v2910, %v3608
    %v3673 = vadd.f32 %v2911, %v3610
    %v3674 = vadd.f32 %v2912, %v3613
    %v3675 = vadd.f32 %v2913, %v3615
    %v3676 = vadd.f32 %v2914, %v3618
    %v3677 = vadd.f32 %v2915, %v3620
    %v3678 = vadd.f32 %v2916, %v3623
    %v3679 = vadd.f32 %v2917, %v3625
    %v3680 = vadd.f32 %v2918, %v3628
    %v3681 = vadd.f32 %v2919, %v3630
    %v3682 = vadd.f32 %v2920, %v3633
    %v3683 = vadd.f32 %v2921, %v3635
    %v3684 = vadd.f32 %v2922, %v3638
    %v3685 = vadd.f32 %v2923, %v3640
    %v3686 = vadd.f32 %v2924, %v3643
    %v3687 = vadd.f32 %v2925, %v3645
    %v3688 = vadd.f32 %v2926, %v3648
    %v3689 = vadd.f32 %v2927, %v3650
    %v3690 = vadd.f32 %v2928, %v3653
    %v3691 = vadd.f32 %v2929, %v3655
    %v3692 = vadd.f32 %v2930, %v3658
    %v3693 = vadd.f32 %v2931, %v3660
    %s3694 = scalar_lea.vmem [#allocation2], 24
    %v3695 = vld [vmem:[%s3694] sm:$0x8]
    %v3696 = vld [vmem:[%s3694 + $0x4] sm:$0xf]
    %v3697 = vld [vmem:[%s3694 + $0xc] sm:$0x8]
    %v3698 = vld [vmem:[%s3694 + $0x10] sm:$0xf]
    %v3699 = vld [vmem:[%s3694 + $0x18] sm:$0x8]
    %v3700 = vld [vmem:[%s3694 + $0x1c] sm:$0xf]
    %v3701 = vld [vmem:[%s3694 + $0x24] sm:$0x8]
    %v3702 = vld [vmem:[%s3694 + $0x28] sm:$0xf]
    %v3703 = vld [vmem:[%s3694 + $0x30] sm:$0x8]
    %v3704 = vld [vmem:[%s3694 + $0x34] sm:$0xf]
    %v3705 = vld [vmem:[%s3694 + $0x3c] sm:$0x8]
    %v3706 = vld [vmem:[%s3694 + $0x40] sm:$0xf]
    %v3707 = vld [vmem:[%s3694 + $0x48] sm:$0x8]
    %v3708 = vld [vmem:[%s3694 + $0x4c] sm:$0xf]
    %v3709 = vld [vmem:[%s3694 + $0x54] sm:$0x8]
    %v3710 = vld [vmem:[%s3694 + $0x58] sm:$0xf]
    %v3711 = vld [vmem:[%s3694 + $0x78] sm:$0x8]
    %v3712 = vld [vmem:[%s3694 + $0x7c] sm:$0xf]
    %v3713 = vld [vmem:[%s3694 + $0x84] sm:$0x8]
    %v3714 = vld [vmem:[%s3694 + $0x88] sm:$0xf]
    %v3715 = vld [vmem:[%s3694 + $0x90] sm:$0x8]
    %v3716 = vld [vmem:[%s3694 + $0x94] sm:$0xf]
    %v3717 = vld [vmem:[%s3694 + $0x9c] sm:$0x8]
    %v3718 = vld [vmem:[%s3694 + $0xa0] sm:$0xf]
    %v3719 = vld [vmem:[%s3694 + $0xa8] sm:$0x8]
    %v3720 = vld [vmem:[%s3694 + $0xac] sm:$0xf]
    %v3721 = vld [vmem:[%s3694 + $0xb4] sm:$0x8]
    %v3722 = vld [vmem:[%s3694 + $0xb8] sm:$0xf]
    %v3723 = vld [vmem:[%s3694 + $0xc0] sm:$0x8]
    %v3724 = vld [vmem:[%s3694 + $0xc4] sm:$0xf]
    %v3725 = vld [vmem:[%s3694 + $0xcc] sm:$0x8]
    %v3726 = vld [vmem:[%s3694 + $0xd0] sm:$0xf]
    %v3727 = vld [vmem:[%s3694 + $0xf0] sm:$0x8]
    %v3728 = vld [vmem:[%s3694 + $0xf4] sm:$0xf]
    %v3729 = vld [vmem:[%s3694 + $0xfc] sm:$0x8]
    %v3730 = vld [vmem:[%s3694 + $0x100] sm:$0xf]
    %v3731 = vld [vmem:[%s3694 + $0x108] sm:$0x8]
    %v3732 = vld [vmem:[%s3694 + $0x10c] sm:$0xf]
    %v3733 = vld [vmem:[%s3694 + $0x114] sm:$0x8]
    %v3734 = vld [vmem:[%s3694 + $0x118] sm:$0xf]
    %v3735 = vld [vmem:[%s3694 + $0x120] sm:$0x8]
    %v3736 = vld [vmem:[%s3694 + $0x124] sm:$0xf]
    %v3737 = vld [vmem:[%s3694 + $0x12c] sm:$0x8]
    %v3738 = vld [vmem:[%s3694 + $0x130] sm:$0xf]
    %v3739 = vld [vmem:[%s3694 + $0x138] sm:$0x8]
    %v3740 = vld [vmem:[%s3694 + $0x13c] sm:$0xf]
    %v3741 = vld [vmem:[%s3694 + $0x144] sm:$0x8]
    %v3742 = vld [vmem:[%s3694 + $0x148] sm:$0xf]
    %v3743 = vld [vmem:[%s3694 + $0x168] sm:$0x8]
    %v3744 = vld [vmem:[%s3694 + $0x16c] sm:$0xf]
    %v3745 = vld [vmem:[%s3694 + $0x174] sm:$0x8]
    %v3746 = vld [vmem:[%s3694 + $0x178] sm:$0xf]
    %v3747 = vld [vmem:[%s3694 + $0x180] sm:$0x8]
    %v3748 = vld [vmem:[%s3694 + $0x184] sm:$0xf]
    %v3749 = vld [vmem:[%s3694 + $0x18c] sm:$0x8]
    %v3750 = vld [vmem:[%s3694 + $0x190] sm:$0xf]
    %v3751 = vld [vmem:[%s3694 + $0x198] sm:$0x8]
    %v3752 = vld [vmem:[%s3694 + $0x19c] sm:$0xf]
    %v3753 = vld [vmem:[%s3694 + $0x1a4] sm:$0x8]
    %v3754 = vld [vmem:[%s3694 + $0x1a8] sm:$0xf]
    %v3755 = vld [vmem:[%s3694 + $0x1b0] sm:$0x8]
    %v3756 = vld [vmem:[%s3694 + $0x1b4] sm:$0xf]
    %v3757 = vld [vmem:[%s3694 + $0x1bc] sm:$0x8]
    %v3758 = vld [vmem:[%s3694 + $0x1c0] sm:$0xf]
    %v3760 = vshrl.u32 %v3695, 16
    %v3762 = vrot.slane %v3760, 7
    %v3763 = vrot.slane %v3762, 4
    %v3765 = vshrl.u32 %v3696, 16
    %v3767 = vrot.slane %v3765, 7
    %v3768 = vshll.u32 %v3696, 16
    %v3770 = vor.u32 %v3767, %v3768
    %v3771 = vsel %vm271, %v3763, %v3770
    %v3773 = vshrl.u32 %v3697, 16
    %v3775 = vrot.slane %v3773, 7
    %v3776 = vrot.slane %v3775, 4
    %v3778 = vshrl.u32 %v3698, 16
    %v3780 = vrot.slane %v3778, 7
    %v3781 = vshll.u32 %v3698, 16
    %v3783 = vor.u32 %v3780, %v3781
    %v3784 = vsel %vm271, %v3776, %v3783
    %v3786 = vshrl.u32 %v3699, 16
    %v3788 = vrot.slane %v3786, 7
    %v3789 = vrot.slane %v3788, 4
    %v3791 = vshrl.u32 %v3700, 16
    %v3793 = vrot.slane %v3791, 7
    %v3794 = vshll.u32 %v3700, 16
    %v3796 = vor.u32 %v3793, %v3794
    %v3797 = vsel %vm271, %v3789, %v3796
    %v3799 = vshrl.u32 %v3701, 16
    %v3801 = vrot.slane %v3799, 7
    %v3802 = vrot.slane %v3801, 4
    %v3804 = vshrl.u32 %v3702, 16
    %v3806 = vrot.slane %v3804, 7
    %v3807 = vshll.u32 %v3702, 16
    %v3809 = vor.u32 %v3806, %v3807
    %v3810 = vsel %vm271, %v3802, %v3809
    %v3812 = vshrl.u32 %v3703, 16
    %v3814 = vrot.slane %v3812, 7
    %v3815 = vrot.slane %v3814, 4
    %v3817 = vshrl.u32 %v3704, 16
    %v3819 = vrot.slane %v3817, 7
    %v3820 = vshll.u32 %v3704, 16
    %v3822 = vor.u32 %v3819, %v3820
    %v3823 = vsel %vm271, %v3815, %v3822
    %v3825 = vshrl.u32 %v3705, 16
    %v3827 = vrot.slane %v3825, 7
    %v3828 = vrot.slane %v3827, 4
    %v3830 = vshrl.u32 %v3706, 16
    %v3832 = vrot.slane %v3830, 7
    %v3833 = vshll.u32 %v3706, 16
    %v3835 = vor.u32 %v3832, %v3833
    %v3836 = vsel %vm271, %v3828, %v3835
    %v3838 = vshrl.u32 %v3707, 16
    %v3840 = vrot.slane %v3838, 7
    %v3841 = vrot.slane %v3840, 4
    %v3843 = vshrl.u32 %v3708, 16
    %v3845 = vrot.slane %v3843, 7
    %v3846 = vshll.u32 %v3708, 16
    %v3848 = vor.u32 %v3845, %v3846
    %v3849 = vsel %vm271, %v3841, %v3848
    %v3851 = vshrl.u32 %v3709, 16
    %v3853 = vrot.slane %v3851, 7
    %v3854 = vrot.slane %v3853, 4
    %v3856 = vshrl.u32 %v3710, 16
    %v3858 = vrot.slane %v3856, 7
    %v3859 = vshll.u32 %v3710, 16
    %v3861 = vor.u32 %v3858, %v3859
    %v3862 = vsel %vm271, %v3854, %v3861
    %v3864 = vshrl.u32 %v3711, 16
    %v3866 = vrot.slane %v3864, 7
    %v3867 = vrot.slane %v3866, 4
    %v3869 = vshrl.u32 %v3712, 16
    %v3871 = vrot.slane %v3869, 7
    %v3872 = vshll.u32 %v3712, 16
    %v3874 = vor.u32 %v3871, %v3872
    %v3875 = vsel %vm271, %v3867, %v3874
    %v3877 = vshrl.u32 %v3713, 16
    %v3879 = vrot.slane %v3877, 7
    %v3880 = vrot.slane %v3879, 4
    %v3882 = vshrl.u32 %v3714, 16
    %v3884 = vrot.slane %v3882, 7
    %v3885 = vshll.u32 %v3714, 16
    %v3887 = vor.u32 %v3884, %v3885
    %v3888 = vsel %vm271, %v3880, %v3887
    %v3890 = vshrl.u32 %v3715, 16
    %v3892 = vrot.slane %v3890, 7
    %v3893 = vrot.slane %v3892, 4
    %v3895 = vshrl.u32 %v3716, 16
    %v3897 = vrot.slane %v3895, 7
    %v3898 = vshll.u32 %v3716, 16
    %v3900 = vor.u32 %v3897, %v3898
    %v3901 = vsel %vm271, %v3893, %v3900
    %v3903 = vshrl.u32 %v3717, 16
    %v3905 = vrot.slane %v3903, 7
    %v3906 = vrot.slane %v3905, 4
    %v3908 = vshrl.u32 %v3718, 16
    %v3910 = vrot.slane %v3908, 7
    %v3911 = vshll.u32 %v3718, 16
    %v3913 = vor.u32 %v3910, %v3911
    %v3914 = vsel %vm271, %v3906, %v3913
    %v3916 = vshrl.u32 %v3719, 16
    %v3918 = vrot.slane %v3916, 7
    %v3919 = vrot.slane %v3918, 4
    %v3921 = vshrl.u32 %v3720, 16
    %v3923 = vrot.slane %v3921, 7
    %v3924 = vshll.u32 %v3720, 16
    %v3926 = vor.u32 %v3923, %v3924
    %v3927 = vsel %vm271, %v3919, %v3926
    %v3929 = vshrl.u32 %v3721, 16
    %v3931 = vrot.slane %v3929, 7
    %v3932 = vrot.slane %v3931, 4
    %v3934 = vshrl.u32 %v3722, 16
    %v3936 = vrot.slane %v3934, 7
    %v3937 = vshll.u32 %v3722, 16
    %v3939 = vor.u32 %v3936, %v3937
    %v3940 = vsel %vm271, %v3932, %v3939
    %v3942 = vshrl.u32 %v3723, 16
    %v3944 = vrot.slane %v3942, 7
    %v3945 = vrot.slane %v3944, 4
    %v3947 = vshrl.u32 %v3724, 16
    %v3949 = vrot.slane %v3947, 7
    %v3950 = vshll.u32 %v3724, 16
    %v3952 = vor.u32 %v3949, %v3950
    %v3953 = vsel %vm271, %v3945, %v3952
    %v3955 = vshrl.u32 %v3725, 16
    %v3957 = vrot.slane %v3955, 7
    %v3958 = vrot.slane %v3957, 4
    %v3960 = vshrl.u32 %v3726, 16
    %v3962 = vrot.slane %v3960, 7
    %v3963 = vshll.u32 %v3726, 16
    %v3965 = vor.u32 %v3962, %v3963
    %v3966 = vsel %vm271, %v3958, %v3965
    %v3968 = vshrl.u32 %v3727, 16
    %v3970 = vrot.slane %v3968, 7
    %v3971 = vrot.slane %v3970, 4
    %v3973 = vshrl.u32 %v3728, 16
    %v3975 = vrot.slane %v3973, 7
    %v3976 = vshll.u32 %v3728, 16
    %v3978 = vor.u32 %v3975, %v3976
    %v3979 = vsel %vm271, %v3971, %v3978
    %v3981 = vshrl.u32 %v3729, 16
    %v3983 = vrot.slane %v3981, 7
    %v3984 = vrot.slane %v3983, 4
    %v3986 = vshrl.u32 %v3730, 16
    %v3988 = vrot.slane %v3986, 7
    %v3989 = vshll.u32 %v3730, 16
    %v3991 = vor.u32 %v3988, %v3989
    %v3992 = vsel %vm271, %v3984, %v3991
    %v3994 = vshrl.u32 %v3731, 16
    %v3996 = vrot.slane %v3994, 7
    %v3997 = vrot.slane %v3996, 4
    %v3999 = vshrl.u32 %v3732, 16
    %v4001 = vrot.slane %v3999, 7
    %v4002 = vshll.u32 %v3732, 16
    %v4004 = vor.u32 %v4001, %v4002
    %v4005 = vsel %vm271, %v3997, %v4004
    %v4007 = vshrl.u32 %v3733, 16
    %v4009 = vrot.slane %v4007, 7
    %v4010 = vrot.slane %v4009, 4
    %v4012 = vshrl.u32 %v3734, 16
    %v4014 = vrot.slane %v4012, 7
    %v4015 = vshll.u32 %v3734, 16
    %v4017 = vor.u32 %v4014, %v4015
    %v4018 = vsel %vm271, %v4010, %v4017
    %v4020 = vshrl.u32 %v3735, 16
    %v4022 = vrot.slane %v4020, 7
    %v4023 = vrot.slane %v4022, 4
    %v4025 = vshrl.u32 %v3736, 16
    %v4027 = vrot.slane %v4025, 7
    %v4028 = vshll.u32 %v3736, 16
    %v4030 = vor.u32 %v4027, %v4028
    %v4031 = vsel %vm271, %v4023, %v4030
    %v4033 = vshrl.u32 %v3737, 16
    %v4035 = vrot.slane %v4033, 7
    %v4036 = vrot.slane %v4035, 4
    %v4038 = vshrl.u32 %v3738, 16
    %v4040 = vrot.slane %v4038, 7
    %v4041 = vshll.u32 %v3738, 16
    %v4043 = vor.u32 %v4040, %v4041
    %v4044 = vsel %vm271, %v4036, %v4043
    %v4046 = vshrl.u32 %v3739, 16
    %v4048 = vrot.slane %v4046, 7
    %v4049 = vrot.slane %v4048, 4
    %v4051 = vshrl.u32 %v3740, 16
    %v4053 = vrot.slane %v4051, 7
    %v4054 = vshll.u32 %v3740, 16
    %v4056 = vor.u32 %v4053, %v4054
    %v4057 = vsel %vm271, %v4049, %v4056
    %v4059 = vshrl.u32 %v3741, 16
    %v4061 = vrot.slane %v4059, 7
    %v4062 = vrot.slane %v4061, 4
    %v4064 = vshrl.u32 %v3742, 16
    %v4066 = vrot.slane %v4064, 7
    %v4067 = vshll.u32 %v3742, 16
    %v4069 = vor.u32 %v4066, %v4067
    %v4070 = vsel %vm271, %v4062, %v4069
    %v4072 = vshrl.u32 %v3743, 16
    %v4074 = vrot.slane %v4072, 7
    %v4075 = vrot.slane %v4074, 4
    %v4077 = vshrl.u32 %v3744, 16
    %v4079 = vrot.slane %v4077, 7
    %v4080 = vshll.u32 %v3744, 16
    %v4082 = vor.u32 %v4079, %v4080
    %v4083 = vsel %vm271, %v4075, %v4082
    %v4085 = vshrl.u32 %v3745, 16
    %v4087 = vrot.slane %v4085, 7
    %v4088 = vrot.slane %v4087, 4
    %v4090 = vshrl.u32 %v3746, 16
    %v4092 = vrot.slane %v4090, 7
    %v4093 = vshll.u32 %v3746, 16
    %v4095 = vor.u32 %v4092, %v4093
    %v4096 = vsel %vm271, %v4088, %v4095
    %v4098 = vshrl.u32 %v3747, 16
    %v4100 = vrot.slane %v4098, 7
    %v4101 = vrot.slane %v4100, 4
    %v4103 = vshrl.u32 %v3748, 16
    %v4105 = vrot.slane %v4103, 7
    %v4106 = vshll.u32 %v3748, 16
    %v4108 = vor.u32 %v4105, %v4106
    %v4109 = vsel %vm271, %v4101, %v4108
    %v4111 = vshrl.u32 %v3749, 16
    %v4113 = vrot.slane %v4111, 7
    %v4114 = vrot.slane %v4113, 4
    %v4116 = vshrl.u32 %v3750, 16
    %v4118 = vrot.slane %v4116, 7
    %v4119 = vshll.u32 %v3750, 16
    %v4121 = vor.u32 %v4118, %v4119
    %v4122 = vsel %vm271, %v4114, %v4121
    %v4124 = vshrl.u32 %v3751, 16
    %v4126 = vrot.slane %v4124, 7
    %v4127 = vrot.slane %v4126, 4
    %v4129 = vshrl.u32 %v3752, 16
    %v4131 = vrot.slane %v4129, 7
    %v4132 = vshll.u32 %v3752, 16
    %v4134 = vor.u32 %v4131, %v4132
    %v4135 = vsel %vm271, %v4127, %v4134
    %v4137 = vshrl.u32 %v3753, 16
    %v4139 = vrot.slane %v4137, 7
    %v4140 = vrot.slane %v4139, 4
    %v4142 = vshrl.u32 %v3754, 16
    %v4144 = vrot.slane %v4142, 7
    %v4145 = vshll.u32 %v3754, 16
    %v4147 = vor.u32 %v4144, %v4145
    %v4148 = vsel %vm271, %v4140, %v4147
    %v4150 = vshrl.u32 %v3755, 16
    %v4152 = vrot.slane %v4150, 7
    %v4153 = vrot.slane %v4152, 4
    %v4155 = vshrl.u32 %v3756, 16
    %v4157 = vrot.slane %v4155, 7
    %v4158 = vshll.u32 %v3756, 16
    %v4160 = vor.u32 %v4157, %v4158
    %v4161 = vsel %vm271, %v4153, %v4160
    %v4163 = vshrl.u32 %v3757, 16
    %v4165 = vrot.slane %v4163, 7
    %v4166 = vrot.slane %v4165, 4
    %v4168 = vshrl.u32 %v3758, 16
    %v4170 = vrot.slane %v4168, 7
    %v4171 = vshll.u32 %v3758, 16
    %v4173 = vor.u32 %v4170, %v4171
    %v4174 = vsel %vm271, %v4166, %v4173
    %s4175 = scalar_lea.vmem [#allocation6], 384
    %v4176 = vld [vmem:[%s4175] sm:$0xf]
    %v4177 = vld [vmem:[%s4175 + $0x4] sm:$0xf]
    %v4178 = vld [vmem:[%s4175 + $0x8] sm:$0xf]
    %v4179 = vld [vmem:[%s4175 + $0xc] sm:$0xf]
    %v4180 = vld [vmem:[%s4175 + $0x10] sm:$0xf]
    %v4181 = vld [vmem:[%s4175 + $0x14] sm:$0xf]
    %v4182 = vld [vmem:[%s4175 + $0x18] sm:$0xf]
    %v4183 = vld [vmem:[%s4175 + $0x1c] sm:$0xf]
    %v4184 = vld [vmem:[%s4175 + $0x20] sm:$0xf]
    %v4185 = vld [vmem:[%s4175 + $0x24] sm:$0xf]
    %v4186 = vld [vmem:[%s4175 + $0x28] sm:$0xf]
    %v4187 = vld [vmem:[%s4175 + $0x2c] sm:$0xf]
    %v4188 = vld [vmem:[%s4175 + $0x30] sm:$0xf]
    %v4189 = vld [vmem:[%s4175 + $0x34] sm:$0xf]
    %v4190 = vld [vmem:[%s4175 + $0x38] sm:$0xf]
    %v4191 = vld [vmem:[%s4175 + $0x3c] sm:$0xf]
    %v4192 = vunpack.c.l.b16 %v3771
    %v4193 = vunpack.c.l.b16 %v3784
    %v4194 = vunpack.c.l.b16 %v3797
    %v4195 = vunpack.c.l.b16 %v3810
    %v4196 = vunpack.c.l.b16 %v3823
    %v4197 = vunpack.c.l.b16 %v3836
    %v4198 = vunpack.c.l.b16 %v3849
    %v4199 = vunpack.c.l.b16 %v3862
    %v4200 = vunpack.c.l.b16 %v3875
    %v4201 = vunpack.c.l.b16 %v3888
    %v4202 = vunpack.c.l.b16 %v3901
    %v4203 = vunpack.c.l.b16 %v3914
    %v4204 = vunpack.c.l.b16 %v3927
    %v4205 = vunpack.c.l.b16 %v3940
    %v4206 = vunpack.c.l.b16 %v3953
    %v4207 = vunpack.c.l.b16 %v3966
    %v4208 = vunpack.c.l.b16 %v3979
    %v4209 = vunpack.c.l.b16 %v3992
    %v4210 = vunpack.c.l.b16 %v4005
    %v4211 = vunpack.c.l.b16 %v4018
    %v4212 = vunpack.c.l.b16 %v4031
    %v4213 = vunpack.c.l.b16 %v4044
    %v4214 = vunpack.c.l.b16 %v4057
    %v4215 = vunpack.c.l.b16 %v4070
    %v4216 = vunpack.c.l.b16 %v4083
    %v4217 = vunpack.c.l.b16 %v4096
    %v4218 = vunpack.c.l.b16 %v4109
    %v4219 = vunpack.c.l.b16 %v4122
    %v4220 = vunpack.c.l.b16 %v4135
    %v4221 = vunpack.c.l.b16 %v4148
    %v4222 = vunpack.c.l.b16 %v4161
    %v4223 = vunpack.c.l.b16 %v4174
    %v4224 = vpack.c.b16 %v4193, %v4192
    %v4225 = vpack.c.b16 %v4195, %v4194
    %v4226 = vpack.c.b16 %v4197, %v4196
    %v4227 = vpack.c.b16 %v4199, %v4198
    %v4228 = vpack.c.b16 %v4201, %v4200
    %v4229 = vpack.c.b16 %v4203, %v4202
    %v4230 = vpack.c.b16 %v4205, %v4204
    %v4231 = vpack.c.b16 %v4207, %v4206
    %v4232 = vpack.c.b16 %v4209, %v4208
    %v4233 = vpack.c.b16 %v4211, %v4210
    %v4234 = vpack.c.b16 %v4213, %v4212
    %v4235 = vpack.c.b16 %v4215, %v4214
    %v4236 = vpack.c.b16 %v4217, %v4216
    %v4237 = vpack.c.b16 %v4219, %v4218
    %v4238 = vpack.c.b16 %v4221, %v4220
    %v4239 = vpack.c.b16 %v4223, %v4222
    %v4272 = vunpack.c.l.b16 %v4176
    %v4273 = vunpack.c.l.b16 %v4177
    %v4274 = vunpack.c.l.b16 %v4178
    %v4275 = vunpack.c.l.b16 %v4179
    %v4276 = vunpack.c.l.b16 %v4180
    %v4277 = vunpack.c.l.b16 %v4181
    %v4278 = vunpack.c.l.b16 %v4182
    %v4279 = vunpack.c.l.b16 %v4183
    %v4280 = vunpack.c.l.b16 %v4184
    %v4281 = vunpack.c.l.b16 %v4185
    %v4282 = vunpack.c.l.b16 %v4186
    %v4283 = vunpack.c.l.b16 %v4187
    %v4284 = vunpack.c.l.b16 %v4188
    %v4285 = vunpack.c.l.b16 %v4189
    %v4286 = vunpack.c.l.b16 %v4190
    %v4287 = vunpack.c.l.b16 %v4191
    %v4288 = vpack.c.b16 %v4273, %v4272
    %v4289 = vpack.c.b16 %v4275, %v4274
    %v4290 = vpack.c.b16 %v4277, %v4276
    %v4291 = vpack.c.b16 %v4279, %v4278
    %v4292 = vpack.c.b16 %v4281, %v4280
    %v4293 = vpack.c.b16 %v4283, %v4282
    %v4294 = vpack.c.b16 %v4285, %v4284
    %v4295 = vpack.c.b16 %v4287, %v4286
    %4304 = vmatpush.bf16.msra.mxu0 %v4295
    %4305 = vmatpush.bf16.msra.mxu0 %v4294
    %4306 = vmatpush.bf16.msra.mxu0 %v4293
    %4307 = vmatpush.bf16.msra.mxu0 %v4292
    %4308 = vmatpush.bf16.msra.mxu0 %v4291
    %4309 = vmatpush.bf16.msra.mxu0 %v4290
    %4310 = vmatpush.bf16.msra.mxu0 %v4289
    %4311 = vmatpush.bf16.msra.mxu0 %v4288
    %4312 = vmatmul.bf16.gmra.mxu0 %v4224
    %v4313 = vpop.f32.mrf.mxu0
    %v4314 = vadd.f32 0.0, %v4313
    %v4315 = vpop.f32.mrf.mxu0
    %v4316 = vadd.f32 0.0, %v4315
    %4317 = vmatmul.bf16.gmra.mxu0 %v4225
    %v4318 = vpop.f32.mrf.mxu0
    %v4319 = vadd.f32 0.0, %v4318
    %v4320 = vpop.f32.mrf.mxu0
    %v4321 = vadd.f32 0.0, %v4320
    %4322 = vmatmul.bf16.gmra.mxu0 %v4226
    %v4323 = vpop.f32.mrf.mxu0
    %v4324 = vadd.f32 0.0, %v4323
    %v4325 = vpop.f32.mrf.mxu0
    %v4326 = vadd.f32 0.0, %v4325
    %4327 = vmatmul.bf16.gmra.mxu0 %v4227
    %v4328 = vpop.f32.mrf.mxu0
    %v4329 = vadd.f32 0.0, %v4328
    %v4330 = vpop.f32.mrf.mxu0
    %v4331 = vadd.f32 0.0, %v4330
    %4332 = vmatmul.bf16.gmra.mxu0 %v4228
    %v4333 = vpop.f32.mrf.mxu0
    %v4334 = vadd.f32 0.0, %v4333
    %v4335 = vpop.f32.mrf.mxu0
    %v4336 = vadd.f32 0.0, %v4335
    %4337 = vmatmul.bf16.gmra.mxu0 %v4229
    %v4338 = vpop.f32.mrf.mxu0
    %v4339 = vadd.f32 0.0, %v4338
    %v4340 = vpop.f32.mrf.mxu0
    %v4341 = vadd.f32 0.0, %v4340
    %4342 = vmatmul.bf16.gmra.mxu0 %v4230
    %v4343 = vpop.f32.mrf.mxu0
    %v4344 = vadd.f32 0.0, %v4343
    %v4345 = vpop.f32.mrf.mxu0
    %v4346 = vadd.f32 0.0, %v4345
    %4347 = vmatmul.bf16.gmra.mxu0 %v4231
    %v4348 = vpop.f32.mrf.mxu0
    %v4349 = vadd.f32 0.0, %v4348
    %v4350 = vpop.f32.mrf.mxu0
    %v4351 = vadd.f32 0.0, %v4350
    %4352 = vmatmul.bf16.gmra.mxu0 %v4232
    %v4353 = vpop.f32.mrf.mxu0
    %v4354 = vadd.f32 0.0, %v4353
    %v4355 = vpop.f32.mrf.mxu0
    %v4356 = vadd.f32 0.0, %v4355
    %4357 = vmatmul.bf16.gmra.mxu0 %v4233
    %v4358 = vpop.f32.mrf.mxu0
    %v4359 = vadd.f32 0.0, %v4358
    %v4360 = vpop.f32.mrf.mxu0
    %v4361 = vadd.f32 0.0, %v4360
    %4362 = vmatmul.bf16.gmra.mxu0 %v4234
    %v4363 = vpop.f32.mrf.mxu0
    %v4364 = vadd.f32 0.0, %v4363
    %v4365 = vpop.f32.mrf.mxu0
    %v4366 = vadd.f32 0.0, %v4365
    %4367 = vmatmul.bf16.gmra.mxu0 %v4235
    %v4368 = vpop.f32.mrf.mxu0
    %v4369 = vadd.f32 0.0, %v4368
    %v4370 = vpop.f32.mrf.mxu0
    %v4371 = vadd.f32 0.0, %v4370
    %4372 = vmatmul.bf16.gmra.mxu0 %v4236
    %v4373 = vpop.f32.mrf.mxu0
    %v4374 = vadd.f32 0.0, %v4373
    %v4375 = vpop.f32.mrf.mxu0
    %v4376 = vadd.f32 0.0, %v4375
    %4377 = vmatmul.bf16.gmra.mxu0 %v4237
    %v4378 = vpop.f32.mrf.mxu0
    %v4379 = vadd.f32 0.0, %v4378
    %v4380 = vpop.f32.mrf.mxu0
    %v4381 = vadd.f32 0.0, %v4380
    %4382 = vmatmul.bf16.gmra.mxu0 %v4238
    %v4383 = vpop.f32.mrf.mxu0
    %v4384 = vadd.f32 0.0, %v4383
    %v4385 = vpop.f32.mrf.mxu0
    %v4386 = vadd.f32 0.0, %v4385
    %4387 = vmatmul.bf16.gmra.mxu0 %v4239
    %v4388 = vpop.f32.mrf.mxu0
    %v4389 = vadd.f32 0.0, %v4388
    %v4390 = vpop.f32.mrf.mxu0
    %v4391 = vadd.f32 0.0, %v4390
    %4392 = vdwg.mxu0
    %v4393 = vadd.f32 %v3662, %v4314
    %v4394 = vadd.f32 %v3663, %v4316
    %v4395 = vadd.f32 %v3664, %v4319
    %v4396 = vadd.f32 %v3665, %v4321
    %v4397 = vadd.f32 %v3666, %v4324
    %v4398 = vadd.f32 %v3667, %v4326
    %v4399 = vadd.f32 %v3668, %v4329
    %v4400 = vadd.f32 %v3669, %v4331
    %v4401 = vadd.f32 %v3670, %v4334
    %v4402 = vadd.f32 %v3671, %v4336
    %v4403 = vadd.f32 %v3672, %v4339
    %v4404 = vadd.f32 %v3673, %v4341
    %v4405 = vadd.f32 %v3674, %v4344
    %v4406 = vadd.f32 %v3675, %v4346
    %v4407 = vadd.f32 %v3676, %v4349
    %v4408 = vadd.f32 %v3677, %v4351
    %v4409 = vadd.f32 %v3678, %v4354
    %v4410 = vadd.f32 %v3679, %v4356
    %v4411 = vadd.f32 %v3680, %v4359
    %v4412 = vadd.f32 %v3681, %v4361
    %v4413 = vadd.f32 %v3682, %v4364
    %v4414 = vadd.f32 %v3683, %v4366
    %v4415 = vadd.f32 %v3684, %v4369
    %v4416 = vadd.f32 %v3685, %v4371
    %v4417 = vadd.f32 %v3686, %v4374
    %v4418 = vadd.f32 %v3687, %v4376
    %v4419 = vadd.f32 %v3688, %v4379
    %v4420 = vadd.f32 %v3689, %v4381
    %v4421 = vadd.f32 %v3690, %v4384
    %v4422 = vadd.f32 %v3691, %v4386
    %v4423 = vadd.f32 %v3692, %v4389
    %v4424 = vadd.f32 %v3693, %v4391
    %s4425 = scalar_lea.vmem [#allocation6], 448
    %v4426 = vld [vmem:[%s4425] sm:$0xf]
    %v4427 = vld [vmem:[%s4425 + $0x4] sm:$0xf]
    %v4428 = vld [vmem:[%s4425 + $0x8] sm:$0xf]
    %v4429 = vld [vmem:[%s4425 + $0xc] sm:$0xf]
    %v4430 = vld [vmem:[%s4425 + $0x10] sm:$0xf]
    %v4431 = vld [vmem:[%s4425 + $0x14] sm:$0xf]
    %v4432 = vld [vmem:[%s4425 + $0x18] sm:$0xf]
    %v4433 = vld [vmem:[%s4425 + $0x1c] sm:$0xf]
    %v4434 = vld [vmem:[%s4425 + $0x20] sm:$0xf]
    %v4435 = vld [vmem:[%s4425 + $0x24] sm:$0xf]
    %v4436 = vld [vmem:[%s4425 + $0x28] sm:$0xf]
    %v4437 = vld [vmem:[%s4425 + $0x2c] sm:$0xf]
    %v4438 = vld [vmem:[%s4425 + $0x30] sm:$0xf]
    %v4439 = vld [vmem:[%s4425 + $0x34] sm:$0xf]
    %v4440 = vld [vmem:[%s4425 + $0x38] sm:$0xf]
    %v4441 = vld [vmem:[%s4425 + $0x3c] sm:$0xf]
    %v4474 = vunpack.c.l.b16 %v3696
    %v4475 = vunpack.c.l.b16 %v3698
    %v4476 = vunpack.c.l.b16 %v3700
    %v4477 = vunpack.c.l.b16 %v3702
    %v4478 = vunpack.c.l.b16 %v3704
    %v4479 = vunpack.c.l.b16 %v3706
    %v4480 = vunpack.c.l.b16 %v3708
    %v4481 = vunpack.c.l.b16 %v3710
    %v4482 = vunpack.c.l.b16 %v3712
    %v4483 = vunpack.c.l.b16 %v3714
    %v4484 = vunpack.c.l.b16 %v3716
    %v4485 = vunpack.c.l.b16 %v3718
    %v4486 = vunpack.c.l.b16 %v3720
    %v4487 = vunpack.c.l.b16 %v3722
    %v4488 = vunpack.c.l.b16 %v3724
    %v4489 = vunpack.c.l.b16 %v3726
    %v4490 = vunpack.c.l.b16 %v3728
    %v4491 = vunpack.c.l.b16 %v3730
    %v4492 = vunpack.c.l.b16 %v3732
    %v4493 = vunpack.c.l.b16 %v3734
    %v4494 = vunpack.c.l.b16 %v3736
    %v4495 = vunpack.c.l.b16 %v3738
    %v4496 = vunpack.c.l.b16 %v3740
    %v4497 = vunpack.c.l.b16 %v3742
    %v4498 = vunpack.c.l.b16 %v3744
    %v4499 = vunpack.c.l.b16 %v3746
    %v4500 = vunpack.c.l.b16 %v3748
    %v4501 = vunpack.c.l.b16 %v3750
    %v4502 = vunpack.c.l.b16 %v3752
    %v4503 = vunpack.c.l.b16 %v3754
    %v4504 = vunpack.c.l.b16 %v3756
    %v4505 = vunpack.c.l.b16 %v3758
    %v4506 = vpack.c.b16 %v4475, %v4474
    %v4507 = vpack.c.b16 %v4477, %v4476
    %v4508 = vpack.c.b16 %v4479, %v4478
    %v4509 = vpack.c.b16 %v4481, %v4480
    %v4510 = vpack.c.b16 %v4483, %v4482
    %v4511 = vpack.c.b16 %v4485, %v4484
    %v4512 = vpack.c.b16 %v4487, %v4486
    %v4513 = vpack.c.b16 %v4489, %v4488
    %v4514 = vpack.c.b16 %v4491, %v4490
    %v4515 = vpack.c.b16 %v4493, %v4492
    %v4516 = vpack.c.b16 %v4495, %v4494
    %v4517 = vpack.c.b16 %v4497, %v4496
    %v4518 = vpack.c.b16 %v4499, %v4498
    %v4519 = vpack.c.b16 %v4501, %v4500
    %v4520 = vpack.c.b16 %v4503, %v4502
    %v4521 = vpack.c.b16 %v4505, %v4504
    %v4554 = vunpack.c.l.b16 %v4426
    %v4555 = vunpack.c.l.b16 %v4427
    %v4556 = vunpack.c.l.b16 %v4428
    %v4557 = vunpack.c.l.b16 %v4429
    %v4558 = vunpack.c.l.b16 %v4430
    %v4559 = vunpack.c.l.b16 %v4431
    %v4560 = vunpack.c.l.b16 %v4432
    %v4561 = vunpack.c.l.b16 %v4433
    %v4562 = vunpack.c.l.b16 %v4434
    %v4563 = vunpack.c.l.b16 %v4435
    %v4564 = vunpack.c.l.b16 %v4436
    %v4565 = vunpack.c.l.b16 %v4437
    %v4566 = vunpack.c.l.b16 %v4438
    %v4567 = vunpack.c.l.b16 %v4439
    %v4568 = vunpack.c.l.b16 %v4440
    %v4569 = vunpack.c.l.b16 %v4441
    %v4570 = vpack.c.b16 %v4555, %v4554
    %v4571 = vpack.c.b16 %v4557, %v4556
    %v4572 = vpack.c.b16 %v4559, %v4558
    %v4573 = vpack.c.b16 %v4561, %v4560
    %v4574 = vpack.c.b16 %v4563, %v4562
    %v4575 = vpack.c.b16 %v4565, %v4564
    %v4576 = vpack.c.b16 %v4567, %v4566
    %v4577 = vpack.c.b16 %v4569, %v4568
    %4586 = vmatpush.bf16.msra.mxu0 %v4577
    %4587 = vmatpush.bf16.msra.mxu0 %v4576
    %4588 = vmatpush.bf16.msra.mxu0 %v4575
    %4589 = vmatpush.bf16.msra.mxu0 %v4574
    %4590 = vmatpush.bf16.msra.mxu0 %v4573
    %4591 = vmatpush.bf16.msra.mxu0 %v4572
    %4592 = vmatpush.bf16.msra.mxu0 %v4571
    %4593 = vmatpush.bf16.msra.mxu0 %v4570
    %4594 = vmatmul.bf16.gmra.mxu0 %v4506
    %v4595 = vpop.f32.mrf.mxu0
    %v4596 = vadd.f32 0.0, %v4595
    %v4597 = vpop.f32.mrf.mxu0
    %v4598 = vadd.f32 0.0, %v4597
    %4599 = vmatmul.bf16.gmra.mxu0 %v4507
    %v4600 = vpop.f32.mrf.mxu0
    %v4601 = vadd.f32 0.0, %v4600
    %v4602 = vpop.f32.mrf.mxu0
    %v4603 = vadd.f32 0.0, %v4602
    %4604 = vmatmul.bf16.gmra.mxu0 %v4508
    %v4605 = vpop.f32.mrf.mxu0
    %v4606 = vadd.f32 0.0, %v4605
    %v4607 = vpop.f32.mrf.mxu0
    %v4608 = vadd.f32 0.0, %v4607
    %4609 = vmatmul.bf16.gmra.mxu0 %v4509
    %v4610 = vpop.f32.mrf.mxu0
    %v4611 = vadd.f32 0.0, %v4610
    %v4612 = vpop.f32.mrf.mxu0
    %v4613 = vadd.f32 0.0, %v4612
    %4614 = vmatmul.bf16.gmra.mxu0 %v4510
    %v4615 = vpop.f32.mrf.mxu0
    %v4616 = vadd.f32 0.0, %v4615
    %v4617 = vpop.f32.mrf.mxu0
    %v4618 = vadd.f32 0.0, %v4617
    %4619 = vmatmul.bf16.gmra.mxu0 %v4511
    %v4620 = vpop.f32.mrf.mxu0
    %v4621 = vadd.f32 0.0, %v4620
    %v4622 = vpop.f32.mrf.mxu0
    %v4623 = vadd.f32 0.0, %v4622
    %4624 = vmatmul.bf16.gmra.mxu0 %v4512
    %v4625 = vpop.f32.mrf.mxu0
    %v4626 = vadd.f32 0.0, %v4625
    %v4627 = vpop.f32.mrf.mxu0
    %v4628 = vadd.f32 0.0, %v4627
    %4629 = vmatmul.bf16.gmra.mxu0 %v4513
    %v4630 = vpop.f32.mrf.mxu0
    %v4631 = vadd.f32 0.0, %v4630
    %v4632 = vpop.f32.mrf.mxu0
    %v4633 = vadd.f32 0.0, %v4632
    %4634 = vmatmul.bf16.gmra.mxu0 %v4514
    %v4635 = vpop.f32.mrf.mxu0
    %v4636 = vadd.f32 0.0, %v4635
    %v4637 = vpop.f32.mrf.mxu0
    %v4638 = vadd.f32 0.0, %v4637
    %4639 = vmatmul.bf16.gmra.mxu0 %v4515
    %v4640 = vpop.f32.mrf.mxu0
    %v4641 = vadd.f32 0.0, %v4640
    %v4642 = vpop.f32.mrf.mxu0
    %v4643 = vadd.f32 0.0, %v4642
    %4644 = vmatmul.bf16.gmra.mxu0 %v4516
    %v4645 = vpop.f32.mrf.mxu0
    %v4646 = vadd.f32 0.0, %v4645
    %v4647 = vpop.f32.mrf.mxu0
    %v4648 = vadd.f32 0.0, %v4647
    %4649 = vmatmul.bf16.gmra.mxu0 %v4517
    %v4650 = vpop.f32.mrf.mxu0
    %v4651 = vadd.f32 0.0, %v4650
    %v4652 = vpop.f32.mrf.mxu0
    %v4653 = vadd.f32 0.0, %v4652
    %4654 = vmatmul.bf16.gmra.mxu0 %v4518
    %v4655 = vpop.f32.mrf.mxu0
    %v4656 = vadd.f32 0.0, %v4655
    %v4657 = vpop.f32.mrf.mxu0
    %v4658 = vadd.f32 0.0, %v4657
    %4659 = vmatmul.bf16.gmra.mxu0 %v4519
    %v4660 = vpop.f32.mrf.mxu0
    %v4661 = vadd.f32 0.0, %v4660
    %v4662 = vpop.f32.mrf.mxu0
    %v4663 = vadd.f32 0.0, %v4662
    %4664 = vmatmul.bf16.gmra.mxu0 %v4520
    %v4665 = vpop.f32.mrf.mxu0
    %v4666 = vadd.f32 0.0, %v4665
    %v4667 = vpop.f32.mrf.mxu0
    %v4668 = vadd.f32 0.0, %v4667
    %4669 = vmatmul.bf16.gmra.mxu0 %v4521
    %v4670 = vpop.f32.mrf.mxu0
    %v4671 = vadd.f32 0.0, %v4670
    %v4672 = vpop.f32.mrf.mxu0
    %v4673 = vadd.f32 0.0, %v4672
    %4674 = vdwg.mxu0
    %v4675 = vadd.f32 %v4393, %v4596
    %v4676 = vadd.f32 %v4394, %v4598
    %v4677 = vadd.f32 %v4395, %v4601
    %v4678 = vadd.f32 %v4396, %v4603
    %v4679 = vadd.f32 %v4397, %v4606
    %v4680 = vadd.f32 %v4398, %v4608
    %v4681 = vadd.f32 %v4399, %v4611
    %v4682 = vadd.f32 %v4400, %v4613
    %v4683 = vadd.f32 %v4401, %v4616
    %v4684 = vadd.f32 %v4402, %v4618
    %v4685 = vadd.f32 %v4403, %v4621
    %v4686 = vadd.f32 %v4404, %v4623
    %v4687 = vadd.f32 %v4405, %v4626
    %v4688 = vadd.f32 %v4406, %v4628
    %v4689 = vadd.f32 %v4407, %v4631
    %v4690 = vadd.f32 %v4408, %v4633
    %v4691 = vadd.f32 %v4409, %v4636
    %v4692 = vadd.f32 %v4410, %v4638
    %v4693 = vadd.f32 %v4411, %v4641
    %v4694 = vadd.f32 %v4412, %v4643
    %v4695 = vadd.f32 %v4413, %v4646
    %v4696 = vadd.f32 %v4414, %v4648
    %v4697 = vadd.f32 %v4415, %v4651
    %v4698 = vadd.f32 %v4416, %v4653
    %v4699 = vadd.f32 %v4417, %v4656
    %v4700 = vadd.f32 %v4418, %v4658
    %v4701 = vadd.f32 %v4419, %v4661
    %v4702 = vadd.f32 %v4420, %v4663
    %v4703 = vadd.f32 %v4421, %v4666
    %v4704 = vadd.f32 %v4422, %v4668
    %v4705 = vadd.f32 %v4423, %v4671
    %v4706 = vadd.f32 %v4424, %v4673
    %v4707 = vld [vmem:[%s3694 + $0x4] sm:$0xf]
    %v4708 = vld [vmem:[%s3694 + $0x8] sm:$0x1]
    %v4709 = vld [vmem:[%s3694 + $0x10] sm:$0xf]
    %v4710 = vld [vmem:[%s3694 + $0x14] sm:$0x1]
    %v4711 = vld [vmem:[%s3694 + $0x1c] sm:$0xf]
    %v4712 = vld [vmem:[%s3694 + $0x20] sm:$0x1]
    %v4713 = vld [vmem:[%s3694 + $0x28] sm:$0xf]
    %v4714 = vld [vmem:[%s3694 + $0x2c] sm:$0x1]
    %v4715 = vld [vmem:[%s3694 + $0x34] sm:$0xf]
    %v4716 = vld [vmem:[%s3694 + $0x38] sm:$0x1]
    %v4717 = vld [vmem:[%s3694 + $0x40] sm:$0xf]
    %v4718 = vld [vmem:[%s3694 + $0x44] sm:$0x1]
    %v4719 = vld [vmem:[%s3694 + $0x4c] sm:$0xf]
    %v4720 = vld [vmem:[%s3694 + $0x50] sm:$0x1]
    %v4721 = vld [vmem:[%s3694 + $0x58] sm:$0xf]
    %v4722 = vld [vmem:[%s3694 + $0x5c] sm:$0x1]
    %v4723 = vld [vmem:[%s3694 + $0x7c] sm:$0xf]
    %v4724 = vld [vmem:[%s3694 + $0x80] sm:$0x1]
    %v4725 = vld [vmem:[%s3694 + $0x88] sm:$0xf]
    %v4726 = vld [vmem:[%s3694 + $0x8c] sm:$0x1]
    %v4727 = vld [vmem:[%s3694 + $0x94] sm:$0xf]
    %v4728 = vld [vmem:[%s3694 + $0x98] sm:$0x1]
    %v4729 = vld [vmem:[%s3694 + $0xa0] sm:$0xf]
    %v4730 = vld [vmem:[%s3694 + $0xa4] sm:$0x1]
    %v4731 = vld [vmem:[%s3694 + $0xac] sm:$0xf]
    %v4732 = vld [vmem:[%s3694 + $0xb0] sm:$0x1]
    %v4733 = vld [vmem:[%s3694 + $0xb8] sm:$0xf]
    %v4734 = vld [vmem:[%s3694 + $0xbc] sm:$0x1]
    %v4735 = vld [vmem:[%s3694 + $0xc4] sm:$0xf]
    %v4736 = vld [vmem:[%s3694 + $0xc8] sm:$0x1]
    %v4737 = vld [vmem:[%s3694 + $0xd0] sm:$0xf]
    %v4738 = vld [vmem:[%s3694 + $0xd4] sm:$0x1]
    %v4739 = vld [vmem:[%s3694 + $0xf4] sm:$0xf]
    %v4740 = vld [vmem:[%s3694 + $0xf8] sm:$0x1]
    %v4741 = vld [vmem:[%s3694 + $0x100] sm:$0xf]
    %v4742 = vld [vmem:[%s3694 + $0x104] sm:$0x1]
    %v4743 = vld [vmem:[%s3694 + $0x10c] sm:$0xf]
    %v4744 = vld [vmem:[%s3694 + $0x110] sm:$0x1]
    %v4745 = vld [vmem:[%s3694 + $0x118] sm:$0xf]
    %v4746 = vld [vmem:[%s3694 + $0x11c] sm:$0x1]
    %v4747 = vld [vmem:[%s3694 + $0x124] sm:$0xf]
    %v4748 = vld [vmem:[%s3694 + $0x128] sm:$0x1]
    %v4749 = vld [vmem:[%s3694 + $0x130] sm:$0xf]
    %v4750 = vld [vmem:[%s3694 + $0x134] sm:$0x1]
    %v4751 = vld [vmem:[%s3694 + $0x13c] sm:$0xf]
    %v4752 = vld [vmem:[%s3694 + $0x140] sm:$0x1]
    %v4753 = vld [vmem:[%s3694 + $0x148] sm:$0xf]
    %v4754 = vld [vmem:[%s3694 + $0x14c] sm:$0x1]
    %v4755 = vld [vmem:[%s3694 + $0x16c] sm:$0xf]
    %v4756 = vld [vmem:[%s3694 + $0x170] sm:$0x1]
    %v4757 = vld [vmem:[%s3694 + $0x178] sm:$0xf]
    %v4758 = vld [vmem:[%s3694 + $0x17c] sm:$0x1]
    %v4759 = vld [vmem:[%s3694 + $0x184] sm:$0xf]
    %v4760 = vld [vmem:[%s3694 + $0x188] sm:$0x1]
    %v4761 = vld [vmem:[%s3694 + $0x190] sm:$0xf]
    %v4762 = vld [vmem:[%s3694 + $0x194] sm:$0x1]
    %v4763 = vld [vmem:[%s3694 + $0x19c] sm:$0xf]
    %v4764 = vld [vmem:[%s3694 + $0x1a0] sm:$0x1]
    %v4765 = vld [vmem:[%s3694 + $0x1a8] sm:$0xf]
    %v4766 = vld [vmem:[%s3694 + $0x1ac] sm:$0x1]
    %v4767 = vld [vmem:[%s3694 + $0x1b4] sm:$0xf]
    %v4768 = vld [vmem:[%s3694 + $0x1b8] sm:$0x1]
    %v4769 = vld [vmem:[%s3694 + $0x1c0] sm:$0xf]
    %v4770 = vld [vmem:[%s3694 + $0x1c4] sm:$0x1]
    %v4772 = vshrl.u32 %v4707, 16
    %v4774 = vrot.slane %v4772, 4
    %v4775 = vshll.u32 %v4707, 16
    %v4777 = vrot.slane %v4775, 5
    %v4778 = vor.u32 %v4774, %v4777
    %v4779 = vrot.slane %v4778, 4
    %v4781 = vshll.u32 %v4708, 16
    %v4783 = vrot.slane %v4781, 5
    %v4784 = vsel %vm1221, %v4779, %v4783
    %v4786 = vshrl.u32 %v4709, 16
    %v4788 = vrot.slane %v4786, 4
    %v4789 = vshll.u32 %v4709, 16
    %v4791 = vrot.slane %v4789, 5
    %v4792 = vor.u32 %v4788, %v4791
    %v4793 = vrot.slane %v4792, 4
    %v4795 = vshll.u32 %v4710, 16
    %v4797 = vrot.slane %v4795, 5
    %v4798 = vsel %vm1221, %v4793, %v4797
    %v4800 = vshrl.u32 %v4711, 16
    %v4802 = vrot.slane %v4800, 4
    %v4803 = vshll.u32 %v4711, 16
    %v4805 = vrot.slane %v4803, 5
    %v4806 = vor.u32 %v4802, %v4805
    %v4807 = vrot.slane %v4806, 4
    %v4809 = vshll.u32 %v4712, 16
    %v4811 = vrot.slane %v4809, 5
    %v4812 = vsel %vm1221, %v4807, %v4811
    %v4814 = vshrl.u32 %v4713, 16
    %v4816 = vrot.slane %v4814, 4
    %v4817 = vshll.u32 %v4713, 16
    %v4819 = vrot.slane %v4817, 5
    %v4820 = vor.u32 %v4816, %v4819
    %v4821 = vrot.slane %v4820, 4
    %v4823 = vshll.u32 %v4714, 16
    %v4825 = vrot.slane %v4823, 5
    %v4826 = vsel %vm1221, %v4821, %v4825
    %v4828 = vshrl.u32 %v4715, 16
    %v4830 = vrot.slane %v4828, 4
    %v4831 = vshll.u32 %v4715, 16
    %v4833 = vrot.slane %v4831, 5
    %v4834 = vor.u32 %v4830, %v4833
    %v4835 = vrot.slane %v4834, 4
    %v4837 = vshll.u32 %v4716, 16
    %v4839 = vrot.slane %v4837, 5
    %v4840 = vsel %vm1221, %v4835, %v4839
    %v4842 = vshrl.u32 %v4717, 16
    %v4844 = vrot.slane %v4842, 4
    %v4845 = vshll.u32 %v4717, 16
    %v4847 = vrot.slane %v4845, 5
    %v4848 = vor.u32 %v4844, %v4847
    %v4849 = vrot.slane %v4848, 4
    %v4851 = vshll.u32 %v4718, 16
    %v4853 = vrot.slane %v4851, 5
    %v4854 = vsel %vm1221, %v4849, %v4853
    %v4856 = vshrl.u32 %v4719, 16
    %v4858 = vrot.slane %v4856, 4
    %v4859 = vshll.u32 %v4719, 16
    %v4861 = vrot.slane %v4859, 5
    %v4862 = vor.u32 %v4858, %v4861
    %v4863 = vrot.slane %v4862, 4
    %v4865 = vshll.u32 %v4720, 16
    %v4867 = vrot.slane %v4865, 5
    %v4868 = vsel %vm1221, %v4863, %v4867
    %v4870 = vshrl.u32 %v4721, 16
    %v4872 = vrot.slane %v4870, 4
    %v4873 = vshll.u32 %v4721, 16
    %v4875 = vrot.slane %v4873, 5
    %v4876 = vor.u32 %v4872, %v4875
    %v4877 = vrot.slane %v4876, 4
    %v4879 = vshll.u32 %v4722, 16
    %v4881 = vrot.slane %v4879, 5
    %v4882 = vsel %vm1221, %v4877, %v4881
    %v4884 = vshrl.u32 %v4723, 16
    %v4886 = vrot.slane %v4884, 4
    %v4887 = vshll.u32 %v4723, 16
    %v4889 = vrot.slane %v4887, 5
    %v4890 = vor.u32 %v4886, %v4889
    %v4891 = vrot.slane %v4890, 4
    %v4893 = vshll.u32 %v4724, 16
    %v4895 = vrot.slane %v4893, 5
    %v4896 = vsel %vm1221, %v4891, %v4895
    %v4898 = vshrl.u32 %v4725, 16
    %v4900 = vrot.slane %v4898, 4
    %v4901 = vshll.u32 %v4725, 16
    %v4903 = vrot.slane %v4901, 5
    %v4904 = vor.u32 %v4900, %v4903
    %v4905 = vrot.slane %v4904, 4
    %v4907 = vshll.u32 %v4726, 16
    %v4909 = vrot.slane %v4907, 5
    %v4910 = vsel %vm1221, %v4905, %v4909
    %v4912 = vshrl.u32 %v4727, 16
    %v4914 = vrot.slane %v4912, 4
    %v4915 = vshll.u32 %v4727, 16
    %v4917 = vrot.slane %v4915, 5
    %v4918 = vor.u32 %v4914, %v4917
    %v4919 = vrot.slane %v4918, 4
    %v4921 = vshll.u32 %v4728, 16
    %v4923 = vrot.slane %v4921, 5
    %v4924 = vsel %vm1221, %v4919, %v4923
    %v4926 = vshrl.u32 %v4729, 16
    %v4928 = vrot.slane %v4926, 4
    %v4929 = vshll.u32 %v4729, 16
    %v4931 = vrot.slane %v4929, 5
    %v4932 = vor.u32 %v4928, %v4931
    %v4933 = vrot.slane %v4932, 4
    %v4935 = vshll.u32 %v4730, 16
    %v4937 = vrot.slane %v4935, 5
    %v4938 = vsel %vm1221, %v4933, %v4937
    %v4940 = vshrl.u32 %v4731, 16
    %v4942 = vrot.slane %v4940, 4
    %v4943 = vshll.u32 %v4731, 16
    %v4945 = vrot.slane %v4943, 5
    %v4946 = vor.u32 %v4942, %v4945
    %v4947 = vrot.slane %v4946, 4
    %v4949 = vshll.u32 %v4732, 16
    %v4951 = vrot.slane %v4949, 5
    %v4952 = vsel %vm1221, %v4947, %v4951
    %v4954 = vshrl.u32 %v4733, 16
    %v4956 = vrot.slane %v4954, 4
    %v4957 = vshll.u32 %v4733, 16
    %v4959 = vrot.slane %v4957, 5
    %v4960 = vor.u32 %v4956, %v4959
    %v4961 = vrot.slane %v4960, 4
    %v4963 = vshll.u32 %v4734, 16
    %v4965 = vrot.slane %v4963, 5
    %v4966 = vsel %vm1221, %v4961, %v4965
    %v4968 = vshrl.u32 %v4735, 16
    %v4970 = vrot.slane %v4968, 4
    %v4971 = vshll.u32 %v4735, 16
    %v4973 = vrot.slane %v4971, 5
    %v4974 = vor.u32 %v4970, %v4973
    %v4975 = vrot.slane %v4974, 4
    %v4977 = vshll.u32 %v4736, 16
    %v4979 = vrot.slane %v4977, 5
    %v4980 = vsel %vm1221, %v4975, %v4979
    %v4982 = vshrl.u32 %v4737, 16
    %v4984 = vrot.slane %v4982, 4
    %v4985 = vshll.u32 %v4737, 16
    %v4987 = vrot.slane %v4985, 5
    %v4988 = vor.u32 %v4984, %v4987
    %v4989 = vrot.slane %v4988, 4
    %v4991 = vshll.u32 %v4738, 16
    %v4993 = vrot.slane %v4991, 5
    %v4994 = vsel %vm1221, %v4989, %v4993
    %v4996 = vshrl.u32 %v4739, 16
    %v4998 = vrot.slane %v4996, 4
    %v4999 = vshll.u32 %v4739, 16
    %v5001 = vrot.slane %v4999, 5
    %v5002 = vor.u32 %v4998, %v5001
    %v5003 = vrot.slane %v5002, 4
    %v5005 = vshll.u32 %v4740, 16
    %v5007 = vrot.slane %v5005, 5
    %v5008 = vsel %vm1221, %v5003, %v5007
    %v5010 = vshrl.u32 %v4741, 16
    %v5012 = vrot.slane %v5010, 4
    %v5013 = vshll.u32 %v4741, 16
    %v5015 = vrot.slane %v5013, 5
    %v5016 = vor.u32 %v5012, %v5015
    %v5017 = vrot.slane %v5016, 4
    %v5019 = vshll.u32 %v4742, 16
    %v5021 = vrot.slane %v5019, 5
    %v5022 = vsel %vm1221, %v5017, %v5021
    %v5024 = vshrl.u32 %v4743, 16
    %v5026 = vrot.slane %v5024, 4
    %v5027 = vshll.u32 %v4743, 16
    %v5029 = vrot.slane %v5027, 5
    %v5030 = vor.u32 %v5026, %v5029
    %v5031 = vrot.slane %v5030, 4
    %v5033 = vshll.u32 %v4744, 16
    %v5035 = vrot.slane %v5033, 5
    %v5036 = vsel %vm1221, %v5031, %v5035
    %v5038 = vshrl.u32 %v4745, 16
    %v5040 = vrot.slane %v5038, 4
    %v5041 = vshll.u32 %v4745, 16
    %v5043 = vrot.slane %v5041, 5
    %v5044 = vor.u32 %v5040, %v5043
    %v5045 = vrot.slane %v5044, 4
    %v5047 = vshll.u32 %v4746, 16
    %v5049 = vrot.slane %v5047, 5
    %v5050 = vsel %vm1221, %v5045, %v5049
    %v5052 = vshrl.u32 %v4747, 16
    %v5054 = vrot.slane %v5052, 4
    %v5055 = vshll.u32 %v4747, 16
    %v5057 = vrot.slane %v5055, 5
    %v5058 = vor.u32 %v5054, %v5057
    %v5059 = vrot.slane %v5058, 4
    %v5061 = vshll.u32 %v4748, 16
    %v5063 = vrot.slane %v5061, 5
    %v5064 = vsel %vm1221, %v5059, %v5063
    %v5066 = vshrl.u32 %v4749, 16
    %v5068 = vrot.slane %v5066, 4
    %v5069 = vshll.u32 %v4749, 16
    %v5071 = vrot.slane %v5069, 5
    %v5072 = vor.u32 %v5068, %v5071
    %v5073 = vrot.slane %v5072, 4
    %v5075 = vshll.u32 %v4750, 16
    %v5077 = vrot.slane %v5075, 5
    %v5078 = vsel %vm1221, %v5073, %v5077
    %v5080 = vshrl.u32 %v4751, 16
    %v5082 = vrot.slane %v5080, 4
    %v5083 = vshll.u32 %v4751, 16
    %v5085 = vrot.slane %v5083, 5
    %v5086 = vor.u32 %v5082, %v5085
    %v5087 = vrot.slane %v5086, 4
    %v5089 = vshll.u32 %v4752, 16
    %v5091 = vrot.slane %v5089, 5
    %v5092 = vsel %vm1221, %v5087, %v5091
    %v5094 = vshrl.u32 %v4753, 16
    %v5096 = vrot.slane %v5094, 4
    %v5097 = vshll.u32 %v4753, 16
    %v5099 = vrot.slane %v5097, 5
    %v5100 = vor.u32 %v5096, %v5099
    %v5101 = vrot.slane %v5100, 4
    %v5103 = vshll.u32 %v4754, 16
    %v5105 = vrot.slane %v5103, 5
    %v5106 = vsel %vm1221, %v5101, %v5105
    %v5108 = vshrl.u32 %v4755, 16
    %v5110 = vrot.slane %v5108, 4
    %v5111 = vshll.u32 %v4755, 16
    %v5113 = vrot.slane %v5111, 5
    %v5114 = vor.u32 %v5110, %v5113
    %v5115 = vrot.slane %v5114, 4
    %v5117 = vshll.u32 %v4756, 16
    %v5119 = vrot.slane %v5117, 5
    %v5120 = vsel %vm1221, %v5115, %v5119
    %v5122 = vshrl.u32 %v4757, 16
    %v5124 = vrot.slane %v5122, 4
    %v5125 = vshll.u32 %v4757, 16
    %v5127 = vrot.slane %v5125, 5
    %v5128 = vor.u32 %v5124, %v5127
    %v5129 = vrot.slane %v5128, 4
    %v5131 = vshll.u32 %v4758, 16
    %v5133 = vrot.slane %v5131, 5
    %v5134 = vsel %vm1221, %v5129, %v5133
    %v5136 = vshrl.u32 %v4759, 16
    %v5138 = vrot.slane %v5136, 4
    %v5139 = vshll.u32 %v4759, 16
    %v5141 = vrot.slane %v5139, 5
    %v5142 = vor.u32 %v5138, %v5141
    %v5143 = vrot.slane %v5142, 4
    %v5145 = vshll.u32 %v4760, 16
    %v5147 = vrot.slane %v5145, 5
    %v5148 = vsel %vm1221, %v5143, %v5147
    %v5150 = vshrl.u32 %v4761, 16
    %v5152 = vrot.slane %v5150, 4
    %v5153 = vshll.u32 %v4761, 16
    %v5155 = vrot.slane %v5153, 5
    %v5156 = vor.u32 %v5152, %v5155
    %v5157 = vrot.slane %v5156, 4
    %v5159 = vshll.u32 %v4762, 16
    %v5161 = vrot.slane %v5159, 5
    %v5162 = vsel %vm1221, %v5157, %v5161
    %v5164 = vshrl.u32 %v4763, 16
    %v5166 = vrot.slane %v5164, 4
    %v5167 = vshll.u32 %v4763, 16
    %v5169 = vrot.slane %v5167, 5
    %v5170 = vor.u32 %v5166, %v5169
    %v5171 = vrot.slane %v5170, 4
    %v5173 = vshll.u32 %v4764, 16
    %v5175 = vrot.slane %v5173, 5
    %v5176 = vsel %vm1221, %v5171, %v5175
    %v5178 = vshrl.u32 %v4765, 16
    %v5180 = vrot.slane %v5178, 4
    %v5181 = vshll.u32 %v4765, 16
    %v5183 = vrot.slane %v5181, 5
    %v5184 = vor.u32 %v5180, %v5183
    %v5185 = vrot.slane %v5184, 4
    %v5187 = vshll.u32 %v4766, 16
    %v5189 = vrot.slane %v5187, 5
    %v5190 = vsel %vm1221, %v5185, %v5189
    %v5192 = vshrl.u32 %v4767, 16
    %v5194 = vrot.slane %v5192, 4
    %v5195 = vshll.u32 %v4767, 16
    %v5197 = vrot.slane %v5195, 5
    %v5198 = vor.u32 %v5194, %v5197
    %v5199 = vrot.slane %v5198, 4
    %v5201 = vshll.u32 %v4768, 16
    %v5203 = vrot.slane %v5201, 5
    %v5204 = vsel %vm1221, %v5199, %v5203
    %v5206 = vshrl.u32 %v4769, 16
    %v5208 = vrot.slane %v5206, 4
    %v5209 = vshll.u32 %v4769, 16
    %v5211 = vrot.slane %v5209, 5
    %v5212 = vor.u32 %v5208, %v5211
    %v5213 = vrot.slane %v5212, 4
    %v5215 = vshll.u32 %v4770, 16
    %v5217 = vrot.slane %v5215, 5
    %v5218 = vsel %vm1221, %v5213, %v5217
    %s5219 = scalar_lea.vmem [#allocation6], 512
    %v5220 = vld [vmem:[%s5219] sm:$0xf]
    %v5221 = vld [vmem:[%s5219 + $0x4] sm:$0xf]
    %v5222 = vld [vmem:[%s5219 + $0x8] sm:$0xf]
    %v5223 = vld [vmem:[%s5219 + $0xc] sm:$0xf]
    %v5224 = vld [vmem:[%s5219 + $0x10] sm:$0xf]
    %v5225 = vld [vmem:[%s5219 + $0x14] sm:$0xf]
    %v5226 = vld [vmem:[%s5219 + $0x18] sm:$0xf]
    %v5227 = vld [vmem:[%s5219 + $0x1c] sm:$0xf]
    %v5228 = vld [vmem:[%s5219 + $0x20] sm:$0xf]
    %v5229 = vld [vmem:[%s5219 + $0x24] sm:$0xf]
    %v5230 = vld [vmem:[%s5219 + $0x28] sm:$0xf]
    %v5231 = vld [vmem:[%s5219 + $0x2c] sm:$0xf]
    %v5232 = vld [vmem:[%s5219 + $0x30] sm:$0xf]
    %v5233 = vld [vmem:[%s5219 + $0x34] sm:$0xf]
    %v5234 = vld [vmem:[%s5219 + $0x38] sm:$0xf]
    %v5235 = vld [vmem:[%s5219 + $0x3c] sm:$0xf]
    %v5236 = vunpack.c.l.b16 %v4784
    %v5237 = vunpack.c.l.b16 %v4798
    %v5238 = vunpack.c.l.b16 %v4812
    %v5239 = vunpack.c.l.b16 %v4826
    %v5240 = vunpack.c.l.b16 %v4840
    %v5241 = vunpack.c.l.b16 %v4854
    %v5242 = vunpack.c.l.b16 %v4868
    %v5243 = vunpack.c.l.b16 %v4882
    %v5244 = vunpack.c.l.b16 %v4896
    %v5245 = vunpack.c.l.b16 %v4910
    %v5246 = vunpack.c.l.b16 %v4924
    %v5247 = vunpack.c.l.b16 %v4938
    %v5248 = vunpack.c.l.b16 %v4952
    %v5249 = vunpack.c.l.b16 %v4966
    %v5250 = vunpack.c.l.b16 %v4980
    %v5251 = vunpack.c.l.b16 %v4994
    %v5252 = vunpack.c.l.b16 %v5008
    %v5253 = vunpack.c.l.b16 %v5022
    %v5254 = vunpack.c.l.b16 %v5036
    %v5255 = vunpack.c.l.b16 %v5050
    %v5256 = vunpack.c.l.b16 %v5064
    %v5257 = vunpack.c.l.b16 %v5078
    %v5258 = vunpack.c.l.b16 %v5092
    %v5259 = vunpack.c.l.b16 %v5106
    %v5260 = vunpack.c.l.b16 %v5120
    %v5261 = vunpack.c.l.b16 %v5134
    %v5262 = vunpack.c.l.b16 %v5148
    %v5263 = vunpack.c.l.b16 %v5162
    %v5264 = vunpack.c.l.b16 %v5176
    %v5265 = vunpack.c.l.b16 %v5190
    %v5266 = vunpack.c.l.b16 %v5204
    %v5267 = vunpack.c.l.b16 %v5218
    %v5268 = vpack.c.b16 %v5237, %v5236
    %v5269 = vpack.c.b16 %v5239, %v5238
    %v5270 = vpack.c.b16 %v5241, %v5240
    %v5271 = vpack.c.b16 %v5243, %v5242
    %v5272 = vpack.c.b16 %v5245, %v5244
    %v5273 = vpack.c.b16 %v5247, %v5246
    %v5274 = vpack.c.b16 %v5249, %v5248
    %v5275 = vpack.c.b16 %v5251, %v5250
    %v5276 = vpack.c.b16 %v5253, %v5252
    %v5277 = vpack.c.b16 %v5255, %v5254
    %v5278 = vpack.c.b16 %v5257, %v5256
    %v5279 = vpack.c.b16 %v5259, %v5258
    %v5280 = vpack.c.b16 %v5261, %v5260
    %v5281 = vpack.c.b16 %v5263, %v5262
    %v5282 = vpack.c.b16 %v5265, %v5264
    %v5283 = vpack.c.b16 %v5267, %v5266
    %v5316 = vunpack.c.l.b16 %v5220
    %v5317 = vunpack.c.l.b16 %v5221
    %v5318 = vunpack.c.l.b16 %v5222
    %v5319 = vunpack.c.l.b16 %v5223
    %v5320 = vunpack.c.l.b16 %v5224
    %v5321 = vunpack.c.l.b16 %v5225
    %v5322 = vunpack.c.l.b16 %v5226
    %v5323 = vunpack.c.l.b16 %v5227
    %v5324 = vunpack.c.l.b16 %v5228
    %v5325 = vunpack.c.l.b16 %v5229
    %v5326 = vunpack.c.l.b16 %v5230
    %v5327 = vunpack.c.l.b16 %v5231
    %v5328 = vunpack.c.l.b16 %v5232
    %v5329 = vunpack.c.l.b16 %v5233
    %v5330 = vunpack.c.l.b16 %v5234
    %v5331 = vunpack.c.l.b16 %v5235
    %v5332 = vpack.c.b16 %v5317, %v5316
    %v5333 = vpack.c.b16 %v5319, %v5318
    %v5334 = vpack.c.b16 %v5321, %v5320
    %v5335 = vpack.c.b16 %v5323, %v5322
    %v5336 = vpack.c.b16 %v5325, %v5324
    %v5337 = vpack.c.b16 %v5327, %v5326
    %v5338 = vpack.c.b16 %v5329, %v5328
    %v5339 = vpack.c.b16 %v5331, %v5330
    %5348 = vmatpush.bf16.msra.mxu0 %v5339
    %5349 = vmatpush.bf16.msra.mxu0 %v5338
    %5350 = vmatpush.bf16.msra.mxu0 %v5337
    %5351 = vmatpush.bf16.msra.mxu0 %v5336
    %5352 = vmatpush.bf16.msra.mxu0 %v5335
    %5353 = vmatpush.bf16.msra.mxu0 %v5334
    %5354 = vmatpush.bf16.msra.mxu0 %v5333
    %5355 = vmatpush.bf16.msra.mxu0 %v5332
    %5356 = vmatmul.bf16.gmra.mxu0 %v5268
    %v5357 = vpop.f32.mrf.mxu0
    %v5358 = vadd.f32 0.0, %v5357
    %v5359 = vpop.f32.mrf.mxu0
    %v5360 = vadd.f32 0.0, %v5359
    %5361 = vmatmul.bf16.gmra.mxu0 %v5269
    %v5362 = vpop.f32.mrf.mxu0
    %v5363 = vadd.f32 0.0, %v5362
    %v5364 = vpop.f32.mrf.mxu0
    %v5365 = vadd.f32 0.0, %v5364
    %5366 = vmatmul.bf16.gmra.mxu0 %v5270
    %v5367 = vpop.f32.mrf.mxu0
    %v5368 = vadd.f32 0.0, %v5367
    %v5369 = vpop.f32.mrf.mxu0
    %v5370 = vadd.f32 0.0, %v5369
    %5371 = vmatmul.bf16.gmra.mxu0 %v5271
    %v5372 = vpop.f32.mrf.mxu0
    %v5373 = vadd.f32 0.0, %v5372
    %v5374 = vpop.f32.mrf.mxu0
    %v5375 = vadd.f32 0.0, %v5374
    %5376 = vmatmul.bf16.gmra.mxu0 %v5272
    %v5377 = vpop.f32.mrf.mxu0
    %v5378 = vadd.f32 0.0, %v5377
    %v5379 = vpop.f32.mrf.mxu0
    %v5380 = vadd.f32 0.0, %v5379
    %5381 = vmatmul.bf16.gmra.mxu0 %v5273
    %v5382 = vpop.f32.mrf.mxu0
    %v5383 = vadd.f32 0.0, %v5382
    %v5384 = vpop.f32.mrf.mxu0
    %v5385 = vadd.f32 0.0, %v5384
    %5386 = vmatmul.bf16.gmra.mxu0 %v5274
    %v5387 = vpop.f32.mrf.mxu0
    %v5388 = vadd.f32 0.0, %v5387
    %v5389 = vpop.f32.mrf.mxu0
    %v5390 = vadd.f32 0.0, %v5389
    %5391 = vmatmul.bf16.gmra.mxu0 %v5275
    %v5392 = vpop.f32.mrf.mxu0
    %v5393 = vadd.f32 0.0, %v5392
    %v5394 = vpop.f32.mrf.mxu0
    %v5395 = vadd.f32 0.0, %v5394
    %5396 = vmatmul.bf16.gmra.mxu0 %v5276
    %v5397 = vpop.f32.mrf.mxu0
    %v5398 = vadd.f32 0.0, %v5397
    %v5399 = vpop.f32.mrf.mxu0
    %v5400 = vadd.f32 0.0, %v5399
    %5401 = vmatmul.bf16.gmra.mxu0 %v5277
    %v5402 = vpop.f32.mrf.mxu0
    %v5403 = vadd.f32 0.0, %v5402
    %v5404 = vpop.f32.mrf.mxu0
    %v5405 = vadd.f32 0.0, %v5404
    %5406 = vmatmul.bf16.gmra.mxu0 %v5278
    %v5407 = vpop.f32.mrf.mxu0
    %v5408 = vadd.f32 0.0, %v5407
    %v5409 = vpop.f32.mrf.mxu0
    %v5410 = vadd.f32 0.0, %v5409
    %5411 = vmatmul.bf16.gmra.mxu0 %v5279
    %v5412 = vpop.f32.mrf.mxu0
    %v5413 = vadd.f32 0.0, %v5412
    %v5414 = vpop.f32.mrf.mxu0
    %v5415 = vadd.f32 0.0, %v5414
    %5416 = vmatmul.bf16.gmra.mxu0 %v5280
    %v5417 = vpop.f32.mrf.mxu0
    %v5418 = vadd.f32 0.0, %v5417
    %v5419 = vpop.f32.mrf.mxu0
    %v5420 = vadd.f32 0.0, %v5419
    %5421 = vmatmul.bf16.gmra.mxu0 %v5281
    %v5422 = vpop.f32.mrf.mxu0
    %v5423 = vadd.f32 0.0, %v5422
    %v5424 = vpop.f32.mrf.mxu0
    %v5425 = vadd.f32 0.0, %v5424
    %5426 = vmatmul.bf16.gmra.mxu0 %v5282
    %v5427 = vpop.f32.mrf.mxu0
    %v5428 = vadd.f32 0.0, %v5427
    %v5429 = vpop.f32.mrf.mxu0
    %v5430 = vadd.f32 0.0, %v5429
    %5431 = vmatmul.bf16.gmra.mxu0 %v5283
    %v5432 = vpop.f32.mrf.mxu0
    %v5433 = vadd.f32 0.0, %v5432
    %v5434 = vpop.f32.mrf.mxu0
    %v5435 = vadd.f32 0.0, %v5434
    %5436 = vdwg.mxu0
    %v5437 = vadd.f32 %v4675, %v5358
    %v5438 = vadd.f32 %v4676, %v5360
    %v5439 = vadd.f32 %v4677, %v5363
    %v5440 = vadd.f32 %v4678, %v5365
    %v5441 = vadd.f32 %v4679, %v5368
    %v5442 = vadd.f32 %v4680, %v5370
    %v5443 = vadd.f32 %v4681, %v5373
    %v5444 = vadd.f32 %v4682, %v5375
    %v5445 = vadd.f32 %v4683, %v5378
    %v5446 = vadd.f32 %v4684, %v5380
    %v5447 = vadd.f32 %v4685, %v5383
    %v5448 = vadd.f32 %v4686, %v5385
    %v5449 = vadd.f32 %v4687, %v5388
    %v5450 = vadd.f32 %v4688, %v5390
    %v5451 = vadd.f32 %v4689, %v5393
    %v5452 = vadd.f32 %v4690, %v5395
    %v5453 = vadd.f32 %v4691, %v5398
    %v5454 = vadd.f32 %v4692, %v5400
    %v5455 = vadd.f32 %v4693, %v5403
    %v5456 = vadd.f32 %v4694, %v5405
    %v5457 = vadd.f32 %v4695, %v5408
    %v5458 = vadd.f32 %v4696, %v5410
    %v5459 = vadd.f32 %v4697, %v5413
    %v5460 = vadd.f32 %v4698, %v5415
    %v5461 = vadd.f32 %v4699, %v5418
    %v5462 = vadd.f32 %v4700, %v5420
    %v5463 = vadd.f32 %v4701, %v5423
    %v5464 = vadd.f32 %v4702, %v5425
    %v5465 = vadd.f32 %v4703, %v5428
    %v5466 = vadd.f32 %v4704, %v5430
    %v5467 = vadd.f32 %v4705, %v5433
    %v5468 = vadd.f32 %v4706, %v5435
    %v5469 = vld [vmem:[%s2] sm:$0x1]
    %v5471 = vperm.slane %v5469, 0
    %v5473 = vmul.f32 %v5437, %v5471
    %v5474 = vmul.f32 %v5438, %v5471
    %v5475 = vmul.f32 %v5439, %v5471
    %v5476 = vmul.f32 %v5440, %v5471
    %v5477 = vmul.f32 %v5441, %v5471
    %v5478 = vmul.f32 %v5442, %v5471
    %v5479 = vmul.f32 %v5443, %v5471
    %v5480 = vmul.f32 %v5444, %v5471
    %v5481 = vmul.f32 %v5445, %v5471
    %v5482 = vmul.f32 %v5446, %v5471
    %v5483 = vmul.f32 %v5447, %v5471
    %v5484 = vmul.f32 %v5448, %v5471
    %v5485 = vmul.f32 %v5449, %v5471
    %v5486 = vmul.f32 %v5450, %v5471
    %v5487 = vmul.f32 %v5451, %v5471
    %v5488 = vmul.f32 %v5452, %v5471
    %v5489 = vmul.f32 %v5453, %v5471
    %v5490 = vmul.f32 %v5454, %v5471
    %v5491 = vmul.f32 %v5455, %v5471
    %v5492 = vmul.f32 %v5456, %v5471
    %v5493 = vmul.f32 %v5457, %v5471
    %v5494 = vmul.f32 %v5458, %v5471
    %v5495 = vmul.f32 %v5459, %v5471
    %v5496 = vmul.f32 %v5460, %v5471
    %v5497 = vmul.f32 %v5461, %v5471
    %v5498 = vmul.f32 %v5462, %v5471
    %v5499 = vmul.f32 %v5463, %v5471
    %v5500 = vmul.f32 %v5464, %v5471
    %v5501 = vmul.f32 %v5465, %v5471
    %v5502 = vmul.f32 %v5466, %v5471
    %v5503 = vmul.f32 %v5467, %v5471
    %v5504 = vmul.f32 %v5468, %v5471
    %v5505 = vld [vmem:[%s3] sm:$0x1]
    %v5507 = vperm.slane %v5505, 0
    %v5509 = vadd.f32 %v5473, %v5507
    %v5510 = vadd.f32 %v5474, %v5507
    %v5511 = vadd.f32 %v5475, %v5507
    %v5512 = vadd.f32 %v5476, %v5507
    %v5513 = vadd.f32 %v5477, %v5507
    %v5514 = vadd.f32 %v5478, %v5507
    %v5515 = vadd.f32 %v5479, %v5507
    %v5516 = vadd.f32 %v5480, %v5507
    %v5517 = vadd.f32 %v5481, %v5507
    %v5518 = vadd.f32 %v5482, %v5507
    %v5519 = vadd.f32 %v5483, %v5507
    %v5520 = vadd.f32 %v5484, %v5507
    %v5521 = vadd.f32 %v5485, %v5507
    %v5522 = vadd.f32 %v5486, %v5507
    %v5523 = vadd.f32 %v5487, %v5507
    %v5524 = vadd.f32 %v5488, %v5507
    %v5525 = vadd.f32 %v5489, %v5507
    %v5526 = vadd.f32 %v5490, %v5507
    %v5527 = vadd.f32 %v5491, %v5507
    %v5528 = vadd.f32 %v5492, %v5507
    %v5529 = vadd.f32 %v5493, %v5507
    %v5530 = vadd.f32 %v5494, %v5507
    %v5531 = vadd.f32 %v5495, %v5507
    %v5532 = vadd.f32 %v5496, %v5507
    %v5533 = vadd.f32 %v5497, %v5507
    %v5534 = vadd.f32 %v5498, %v5507
    %v5535 = vadd.f32 %v5499, %v5507
    %v5536 = vadd.f32 %v5500, %v5507
    %v5537 = vadd.f32 %v5501, %v5507
    %v5538 = vadd.f32 %v5502, %v5507
    %v5539 = vadd.f32 %v5503, %v5507
    %v5540 = vadd.f32 %v5504, %v5507
    %vm5541 = vcmp.ge.f32.partialorder %v5509, 0.0
    %vm5542 = vcmp.ge.f32.partialorder %v5510, 0.0
    %vm5543 = vcmp.ge.f32.partialorder %v5511, 0.0
    %vm5544 = vcmp.ge.f32.partialorder %v5512, 0.0
    %vm5545 = vcmp.ge.f32.partialorder %v5513, 0.0
    %vm5546 = vcmp.ge.f32.partialorder %v5514, 0.0
    %vm5547 = vcmp.ge.f32.partialorder %v5515, 0.0
    %vm5548 = vcmp.ge.f32.partialorder %v5516, 0.0
    %vm5549 = vcmp.ge.f32.partialorder %v5517, 0.0
    %vm5550 = vcmp.ge.f32.partialorder %v5518, 0.0
    %vm5551 = vcmp.ge.f32.partialorder %v5519, 0.0
    %vm5552 = vcmp.ge.f32.partialorder %v5520, 0.0
    %vm5553 = vcmp.ge.f32.partialorder %v5521, 0.0
    %vm5554 = vcmp.ge.f32.partialorder %v5522, 0.0
    %vm5555 = vcmp.ge.f32.partialorder %v5523, 0.0
    %vm5556 = vcmp.ge.f32.partialorder %v5524, 0.0
    %vm5557 = vcmp.ge.f32.partialorder %v5525, 0.0
    %vm5558 = vcmp.ge.f32.partialorder %v5526, 0.0
    %vm5559 = vcmp.ge.f32.partialorder %v5527, 0.0
    %vm5560 = vcmp.ge.f32.partialorder %v5528, 0.0
    %vm5561 = vcmp.ge.f32.partialorder %v5529, 0.0
    %vm5562 = vcmp.ge.f32.partialorder %v5530, 0.0
    %vm5563 = vcmp.ge.f32.partialorder %v5531, 0.0
    %vm5564 = vcmp.ge.f32.partialorder %v5532, 0.0
    %vm5565 = vcmp.ge.f32.partialorder %v5533, 0.0
    %vm5566 = vcmp.ge.f32.partialorder %v5534, 0.0
    %vm5567 = vcmp.ge.f32.partialorder %v5535, 0.0
    %vm5568 = vcmp.ge.f32.partialorder %v5536, 0.0
    %vm5569 = vcmp.ge.f32.partialorder %v5537, 0.0
    %vm5570 = vcmp.ge.f32.partialorder %v5538, 0.0
    %vm5571 = vcmp.ge.f32.partialorder %v5539, 0.0
    %vm5572 = vcmp.ge.f32.partialorder %v5540, 0.0
    %v5573 = vmul.f32 %v5509, 0.1
    %v5574 = vmul.f32 %v5510, 0.1
    %v5575 = vmul.f32 %v5511, 0.1
    %v5576 = vmul.f32 %v5512, 0.1
    %v5577 = vmul.f32 %v5513, 0.1
    %v5578 = vmul.f32 %v5514, 0.1
    %v5579 = vmul.f32 %v5515, 0.1
    %v5580 = vmul.f32 %v5516, 0.1
    %v5581 = vmul.f32 %v5517, 0.1
    %v5582 = vmul.f32 %v5518, 0.1
    %v5583 = vmul.f32 %v5519, 0.1
    %v5584 = vmul.f32 %v5520, 0.1
    %v5585 = vmul.f32 %v5521, 0.1
    %v5586 = vmul.f32 %v5522, 0.1
    %v5587 = vmul.f32 %v5523, 0.1
    %v5588 = vmul.f32 %v5524, 0.1
    %v5589 = vmul.f32 %v5525, 0.1
    %v5590 = vmul.f32 %v5526, 0.1
    %v5591 = vmul.f32 %v5527, 0.1
    %v5592 = vmul.f32 %v5528, 0.1
    %v5593 = vmul.f32 %v5529, 0.1
    %v5594 = vmul.f32 %v5530, 0.1
    %v5595 = vmul.f32 %v5531, 0.1
    %v5596 = vmul.f32 %v5532, 0.1
    %v5597 = vmul.f32 %v5533, 0.1
    %v5598 = vmul.f32 %v5534, 0.1
    %v5599 = vmul.f32 %v5535, 0.1
    %v5600 = vmul.f32 %v5536, 0.1
    %v5601 = vmul.f32 %v5537, 0.1
    %v5602 = vmul.f32 %v5538, 0.1
    %v5603 = vmul.f32 %v5539, 0.1
    %v5604 = vmul.f32 %v5540, 0.1
    %v5605 = vsel %vm5541, %v5509, %v5573
    %v5606 = vsel %vm5542, %v5510, %v5574
    %v5607 = vsel %vm5543, %v5511, %v5575
    %v5608 = vsel %vm5544, %v5512, %v5576
    %v5609 = vsel %vm5545, %v5513, %v5577
    %v5610 = vsel %vm5546, %v5514, %v5578
    %v5611 = vsel %vm5547, %v5515, %v5579
    %v5612 = vsel %vm5548, %v5516, %v5580
    %v5613 = vsel %vm5549, %v5517, %v5581
    %v5614 = vsel %vm5550, %v5518, %v5582
    %v5615 = vsel %vm5551, %v5519, %v5583
    %v5616 = vsel %vm5552, %v5520, %v5584
    %v5617 = vsel %vm5553, %v5521, %v5585
    %v5618 = vsel %vm5554, %v5522, %v5586
    %v5619 = vsel %vm5555, %v5523, %v5587
    %v5620 = vsel %vm5556, %v5524, %v5588
    %v5621 = vsel %vm5557, %v5525, %v5589
    %v5622 = vsel %vm5558, %v5526, %v5590
    %v5623 = vsel %vm5559, %v5527, %v5591
    %v5624 = vsel %vm5560, %v5528, %v5592
    %v5625 = vsel %vm5561, %v5529, %v5593
    %v5626 = vsel %vm5562, %v5530, %v5594
    %v5627 = vsel %vm5563, %v5531, %v5595
    %v5628 = vsel %vm5564, %v5532, %v5596
    %v5629 = vsel %vm5565, %v5533, %v5597
    %v5630 = vsel %vm5566, %v5534, %v5598
    %v5631 = vsel %vm5567, %v5535, %v5599
    %v5632 = vsel %vm5568, %v5536, %v5600
    %v5633 = vsel %vm5569, %v5537, %v5601
    %v5634 = vsel %vm5570, %v5538, %v5602
    %v5635 = vsel %vm5571, %v5539, %v5603
    %v5636 = vsel %vm5572, %v5540, %v5604
    %5637 = vst [vmem:[#allocation8] sm:$0xff] %v5605
    %5638 = vst [vmem:[#allocation8 + $0x8] sm:$0xff] %v5606
    %5639 = vst [vmem:[#allocation8 + $0x10] sm:$0xff] %v5607
    %5640 = vst [vmem:[#allocation8 + $0x18] sm:$0xff] %v5608
    %5641 = vst [vmem:[#allocation8 + $0x20] sm:$0xff] %v5609
    %5642 = vst [vmem:[#allocation8 + $0x28] sm:$0xff] %v5610
    %5643 = vst [vmem:[#allocation8 + $0x30] sm:$0xff] %v5611
    %5644 = vst [vmem:[#allocation8 + $0x38] sm:$0xff] %v5612
    %5645 = vst [vmem:[#allocation8 + $0x40] sm:$0xff] %v5613
    %5646 = vst [vmem:[#allocation8 + $0x48] sm:$0xff] %v5614
    %5647 = vst [vmem:[#allocation8 + $0x50] sm:$0xff] %v5615
    %5648 = vst [vmem:[#allocation8 + $0x58] sm:$0xff] %v5616
    %5649 = vst [vmem:[#allocation8 + $0x60] sm:$0xff] %v5617
    %5650 = vst [vmem:[#allocation8 + $0x68] sm:$0xff] %v5618
    %5651 = vst [vmem:[#allocation8 + $0x70] sm:$0xff] %v5619
    %5652 = vst [vmem:[#allocation8 + $0x78] sm:$0xff] %v5620
    %5653 = vst [vmem:[#allocation8 + $0x80] sm:$0xff] %v5621
    %5654 = vst [vmem:[#allocation8 + $0x88] sm:$0xff] %v5622
    %5655 = vst [vmem:[#allocation8 + $0x90] sm:$0xff] %v5623
    %5656 = vst [vmem:[#allocation8 + $0x98] sm:$0xff] %v5624
    %5657 = vst [vmem:[#allocation8 + $0xa0] sm:$0xff] %v5625
    %5658 = vst [vmem:[#allocation8 + $0xa8] sm:$0xff] %v5626
    %5659 = vst [vmem:[#allocation8 + $0xb0] sm:$0xff] %v5627
    %5660 = vst [vmem:[#allocation8 + $0xb8] sm:$0xff] %v5628
    %5661 = vst [vmem:[#allocation8 + $0xc0] sm:$0xff] %v5629
    %5662 = vst [vmem:[#allocation8 + $0xc8] sm:$0xff] %v5630
    %5663 = vst [vmem:[#allocation8 + $0xd0] sm:$0xff] %v5631
    %5664 = vst [vmem:[#allocation8 + $0xd8] sm:$0xff] %v5632
    %5665 = vst [vmem:[#allocation8 + $0xe0] sm:$0xff] %v5633
    %5666 = vst [vmem:[#allocation8 + $0xe8] sm:$0xff] %v5634
    %5667 = vst [vmem:[#allocation8 + $0xf0] sm:$0xff] %v5635
    %5668 = vst [vmem:[#allocation8 + $0xf8] sm:$0xff] %v5636
    // Predicated region
    $region26: #{tpu_custom_call.1} parent=1 // pred_check
      _
    $region27: #{tpu_custom_call.1} parent=1 // pred_check_branch
      %5670 = sbr.rel (0) target = $region29
    $region28: #{tpu_custom_call.1} parent=1 // pred_region
      %5672 = vsyncadd [#allocation5], 0
      %s5673 = sshll.u32 [#allocation8], 4
      %s5674 = int_to_ptr.vmem [resolvable:$true] %s5673
      %s5675 = sshll.u32 %s4, 4
      %s5676 = int_to_ptr.hbm [resolvable:$true] %s5675
      %5681 = dma.vmem_to_hbm [thread:$0]  %s5674, 4096, %s5676, [#allocation5], 128, 128, 8
    $region29: #{tpu_custom_call.1} parent=1 // pred_fallthru
      _
    // Predicated region
    $region30: #{tpu_custom_call.1} parent=1 // pred_check
      _
    $region31: #{tpu_custom_call.1} parent=1 // pred_check_branch
      %5683 = sbr.rel (0) target = $region33
    $region32: #{tpu_custom_call.1} parent=1 // pred_region
      %5685 = dma.done [#allocation5], 4096
    $region33: #{tpu_custom_call.1} parent=1 // pred_fallthru
      _
    %5686 = vsyncpa [#allocation4], 1
    %5687 = vsyncpa [#allocation7], 1
    %5688 = vsyncpa [#allocation5], 1

</llo_original>
